<compile_context>
chip_gen: v7x
topology: tpu7x:2x2x1
jax: 0.10.0
libtpu: 0.0.40
codegen_flags: <defaults>
</compile_context>

<pallas_src>
import numpy as np
import jax
import jax.numpy as jnp
from jax.experimental import pallas as pl
from jax.experimental.pallas import tpu as pltpu


# ---------------- helpers ----------------

def _round_up(v, m):
    return (v + m - 1) // m * m


def _pool_matrix(t_in, t_out, kernel_size=7, stride=3):
    """(T_in, T_out) matrix M with  pooled = f(C, T_in) @ M  ==  AvgPool1d(7, 3)."""
    m = np.zeros((t_in, t_out), np.float32)
    for r in range(t_out):
        m[r * stride: r * stride + kernel_size, r] = 1.0 / kernel_size
    return jnp.asarray(m)


# ---------------- fused whole-network kernel ----------------

def _make_fused_kernel(stages, BB, P, C):
    """stages: list of static dicts {"L", "T_in", "T_out", "pool"}."""

    def kernel(*refs):
        # ref layout:  x | per-stage weights (8 or 9 each) | per-stage (f, logits) outputs | act scratch
        pos = 0
        x_ref = refs[pos]; pos += 1
        w_refs = []
        for s in stages:
            n = 9 if s["pool"] else 8
            w_refs.append(refs[pos:pos + n]); pos += n
        o_refs = []
        for _ in stages:
            o_refs.append((refs[pos], refs[pos + 1])); pos += 2
        act_ref = refs[pos]

        # Causal left zero-padding: the first P lane-columns of the scratch stay zero for
        # the whole kernel (no stage ever writes them); zero only them, once per grid step
        # (safe under megacore: each core zeroes its own scratch instance).
        act_ref[:, pl.ds(0, P)] = jnp.zeros((C, P), jnp.float32)

        for b in range(BB):                                    # batch rows packed per grid step
            cur = x_ref[b].astype(jnp.float32)                 # (C_in, T) channels-first
            for si, s in enumerate(stages):
                if s["pool"]:
                    w_in, b_in, wd, bd, w1, b1, w_out, b_out, pool_m = w_refs[si]
                else:
                    w_in, b_in, wd, bd, w1, b1, w_out, b_out = w_refs[si]
                T_in, L = s["T_in"], s["L"]

                # conv_1x1 input projection (Dropout2d == identity in eval mode)
                act_ref[:, pl.ds(P, T_in)] = (
                    jnp.dot(w_in[...], cur, preferred_element_type=jnp.float32) + b_in[...])

                # dilated residual causal layers (kernel size 3, causal left pad 2*d)
                for i in range(L):                             # static unrolled layer loop
                    d = 2 ** i
                    x_l = act_ref[:, pl.ds(P, T_in)]                       # tap x[t]
                    h = (jnp.dot(wd[3 * i + 0], act_ref[:, pl.ds(P - 2 * d, T_in)],
                                 preferred_element_type=jnp.float32)       # tap x[t - 2d]
                         + jnp.dot(wd[3 * i + 1], act_ref[:, pl.ds(P - d, T_in)],
                                   preferred_element_type=jnp.float32)     # tap x[t - d]
                         + jnp.dot(wd[3 * i + 2], x_l,
                                   preferred_element_type=jnp.float32)
                         + bd[i])
                    h = jnp.maximum(h, 0.0)                                # ReLU
                    out = jnp.dot(w1[i], h, preferred_element_type=jnp.float32) + b1[i]
                    act_ref[:, pl.ds(P, T_in)] = x_l + out     # residual; dropout == identity

                f = act_ref[:, pl.ds(P, T_in)]                 # (C, T_in)
                if s["pool"]:                                  # AvgPool1d(7, 3) as one matmul
                    f = jnp.dot(f, pool_m[...], preferred_element_type=jnp.float32)
                logits = (jnp.dot(w_out[...], f, preferred_element_type=jnp.float32)
                          + b_out[...])                        # (ncls, T_out) channels-first

                f_ref, l_ref = o_refs[si]
                f_ref[b] = f.astype(f_ref.dtype)
                l_ref[b] = logits.astype(l_ref.dtype)
                cur = logits                                   # next stage's input stays in VMEM

    return kernel


# ---------------- forward ----------------

def hierarch_tcn2_forward(params, x):
    """x: (B, T, dim), same input layout as the PyTorch module.  Returns
    (out_list, f_list, prototype) with every entry channels-first (B, C, T')."""
    B, T, dim = x.shape
    x_cf = jnp.transpose(x, (0, 2, 1))             # mirrors the module's x.permute(0, 2, 1)

    pg = params["PG"]
    rs = params["Rs"]
    C = pg["w_in"].shape[0]
    ncls = pg["w_out"].shape[0]

    # static per-stage metadata
    stages = []
    t_cur = T
    stages.append({"L": pg["wd"].shape[0] // 3, "T_in": t_cur, "T_out": t_cur, "pool": False})
    for rp in rs:
        t_out = (t_cur - 7) // 3 + 1
        assert t_out >= 1, "sequence too short for AvgPool1d(7, 3) in a refinement stage"
        stages.append({"L": rp["wd"].shape[0] // 3, "T_in": t_cur, "T_out": t_out, "pool": True})
        t_cur = t_out

    max_d = max(2 ** (s["L"] - 1) for s in stages)
    P = _round_up(2 * max_d, 8)                    # shared causal pad width, multiple of 8

    # grid: keep a >=2-wide "parallel" batch axis when possible (both v7x TCs busy),
    # and pack the remaining batch rows into each step (amortizes per-step overhead).
    NB = 2 if (B % 2 == 0 and B >= 2) else 1
    BB = B // NB

    def full_spec(a):
        nd = a.ndim
        return pl.BlockSpec(a.shape, lambda i, _n=nd: (0,) * _n)

    args = [x_cf]
    in_specs = [pl.BlockSpec((BB, dim, T), lambda i: (i, 0, 0))]
    stage_params = [pg] + list(rs)
    for sp, s in zip(stage_params, stages):
        stage_args = [sp["w_in"], sp["b_in"], sp["wd"], sp["bd"], sp["w1"], sp["b1"],
                      sp["w_out"], sp["b_out"]]
        if s["pool"]:
            stage_args.append(_pool_matrix(s["T_in"], s["T_out"]))
        args.extend(stage_args)
        in_specs.extend(full_spec(a) for a in stage_args)

    out_shapes, out_specs = [], []
    for s in stages:
        for cdim in (C, ncls):                     # (features, logits) per stage
            out_shapes.append(jax.ShapeDtypeStruct((B, cdim, s["T_out"]), x.dtype))
            out_specs.append(pl.BlockSpec((BB, cdim, s["T_out"]), lambda i: (i, 0, 0)))

    kernel = _make_fused_kernel(stages, BB, P, C)
    outs = pl.pallas_call(
        kernel,
        out_shape=tuple(out_shapes),
        grid=(NB,),
        in_specs=in_specs,
        out_specs=tuple(out_specs),
        scratch_shapes=[pltpu.VMEM((C, P + T), jnp.float32)],
        compiler_params=pltpu.CompilerParams(dimension_semantics=("parallel",)),
    )(*args)

    # Reassemble PyTorch-style lists (args.fpn=False, args.output=True): each refinement's
    # logits tensor is appended twice, exactly as in the reference forward loop.
    f_list, out_list = [], []
    f_list.append(outs[0])
    out_list.append(outs[1])                       # PG logits (not use_fpn)
    for si in range(1, len(stages)):
        f_r, out_r = outs[2 * si], outs[2 * si + 1]
        out_list.append(out_r)                     # use_output branch
        f_list.append(f_r)
        out_list.append(out_r)                     # not use_fpn
    # TODO(synk): FPN linear-upsample, prototype-feature refine and transformer-decoder
    # branches are disabled under the chosen args (fpn=feature=trans=False) and not built.
    return out_list, f_list, params["prototype"]


# ---------------- parameter init (deterministic, synthetic) ----------------

def _init_stage(key, L, cin, c, ncls, scale=0.1):
    ks = jax.random.split(key, 8)
    # PyTorch-compatible layouts: 1x1 conv weights are (Cout, Cin); the 3 taps of each
    # dilated conv are stacked on the leading axis as (L*3, Cout, Cin) with tap order
    # (t-2d, t-d, t) == conv_dilated.weight[:, :, 0..2]; biases are stored as (Cout, 1).
    return {
        "w_in":  scale * jax.random.normal(ks[0], (c, cin), jnp.float32),
        "b_in":  0.01 * jax.random.normal(ks[1], (c, 1), jnp.float32),
        "wd":    scale * jax.random.normal(ks[2], (L * 3, c, c), jnp.float32),
        "bd":    0.01 * jax.random.normal(ks[3], (L, c, 1), jnp.float32),
        "w1":    scale * jax.random.normal(ks[4], (L, c, c), jnp.float32),
        "b1":    0.01 * jax.random.normal(ks[5], (L, c, 1), jnp.float32),
        "w_out": scale * jax.random.normal(ks[6], (ncls, c), jnp.float32),
        "b_out": 0.01 * jax.random.normal(ks[7], (ncls, 1), jnp.float32),
    }


def init_hierarch_tcn2(key, num_layers_PG, num_layers_R, num_R, num_f_maps, dim, num_classes):
    keys = jax.random.split(key, 1 + num_R)
    return {
        "PG": _init_stage(keys[0], num_layers_PG, dim, num_f_maps, num_classes),
        "Rs": [_init_stage(keys[1 + r], num_layers_R, num_classes, num_f_maps, num_classes)
               for r in range(num_R)],
        "prototype": jnp.zeros((1, 64, num_classes), jnp.float32),
    }


if __name__ == "__main__":
    B, T, dim = 2, 32, 12
    num_f_maps, num_classes = 16, 8
    num_layers_PG, num_layers_R, num_R = 3, 2, 2

    key = jax.random.PRNGKey(0)
    k_params, k_x = jax.random.split(key)
    params = init_hierarch_tcn2(k_params, num_layers_PG, num_layers_R, num_R,
                                num_f_maps, dim, num_classes)
    x = jax.random.normal(k_x, (B, T, dim), jnp.float32)

    fwd = jax.jit(hierarch_tcn2_forward)
    out_list, f_list, proto = fwd(params, x)
    jax.block_until_ready(out_list + f_list + [proto])

    # temporal sizes: 32 -> 9 -> 1; with args.output=True / fpn=False each refinement's
    # logits tensor appears twice in out_list, exactly like the PyTorch forward.
    assert [o.shape for o in out_list] == [
        (B, num_classes, 32),
        (B, num_classes, 9), (B, num_classes, 9),
        (B, num_classes, 1), (B, num_classes, 1)]
    assert [f.shape for f in f_list] == [(B, num_f_maps, 32), (B, num_f_maps, 9),
                                         (B, num_f_maps, 1)]
    print("KERNEL_OK")
</pallas_src>

<mosaic_0001>
module attributes {stable_mosaic.version = 11 : i64} {
  func.func @kernel(%arg0: i32, %arg1: memref<1x12x32xf32, #tpu.memory_space<vmem>>, %arg2: memref<16x12xf32, #tpu.memory_space<vmem>>, %arg3: memref<16x1xf32, #tpu.memory_space<vmem>>, %arg4: memref<9x16x16xf32, #tpu.memory_space<vmem>>, %arg5: memref<3x16x1xf32, #tpu.memory_space<vmem>>, %arg6: memref<3x16x16xf32, #tpu.memory_space<vmem>>, %arg7: memref<3x16x1xf32, #tpu.memory_space<vmem>>, %arg8: memref<8x16xf32, #tpu.memory_space<vmem>>, %arg9: memref<8x1xf32, #tpu.memory_space<vmem>>, %arg10: memref<16x8xf32, #tpu.memory_space<vmem>>, %arg11: memref<16x1xf32, #tpu.memory_space<vmem>>, %arg12: memref<6x16x16xf32, #tpu.memory_space<vmem>>, %arg13: memref<2x16x1xf32, #tpu.memory_space<vmem>>, %arg14: memref<2x16x16xf32, #tpu.memory_space<vmem>>, %arg15: memref<2x16x1xf32, #tpu.memory_space<vmem>>, %arg16: memref<8x16xf32, #tpu.memory_space<vmem>>, %arg17: memref<8x1xf32, #tpu.memory_space<vmem>>, %arg18: memref<32x9xf32, #tpu.memory_space<vmem>>, %arg19: memref<16x8xf32, #tpu.memory_space<vmem>>, %arg20: memref<16x1xf32, #tpu.memory_space<vmem>>, %arg21: memref<6x16x16xf32, #tpu.memory_space<vmem>>, %arg22: memref<2x16x1xf32, #tpu.memory_space<vmem>>, %arg23: memref<2x16x16xf32, #tpu.memory_space<vmem>>, %arg24: memref<2x16x1xf32, #tpu.memory_space<vmem>>, %arg25: memref<8x16xf32, #tpu.memory_space<vmem>>, %arg26: memref<8x1xf32, #tpu.memory_space<vmem>>, %arg27: memref<9x1xf32, #tpu.memory_space<vmem>>, %arg28: memref<1x16x32xf32, #tpu.memory_space<vmem>>, %arg29: memref<1x8x32xf32, #tpu.memory_space<vmem>>, %arg30: memref<1x16x9xf32, #tpu.memory_space<vmem>>, %arg31: memref<1x8x9xf32, #tpu.memory_space<vmem>>, %arg32: memref<1x16x1xf32, #tpu.memory_space<vmem>>, %arg33: memref<1x8x1xf32, #tpu.memory_space<vmem>>, %arg34: memref<16x40xf32, #tpu.memory_space<vmem>>) attributes {dimension_semantics = [#tpu.dimension_semantics<parallel>], iteration_bounds = array<i64: 2>, scalar_prefetch = 0 : i64, scratch_operands = 1 : i64, tpu.core_type = #tpu.core_type<tc>, window_params = [{transform_indices = @transform_0, window_bounds = array<i64: 1, 12, 32>}, {pipeline_mode = #tpu.pipeline_mode<synchronous>, transform_indices = @transform_1, window_bounds = array<i64: 16, 12>}, {pipeline_mode = #tpu.pipeline_mode<synchronous>, transform_indices = @transform_2, window_bounds = array<i64: 16, 1>}, {pipeline_mode = #tpu.pipeline_mode<synchronous>, transform_indices = @transform_3, window_bounds = array<i64: 9, 16, 16>}, {pipeline_mode = #tpu.pipeline_mode<synchronous>, transform_indices = @transform_4, window_bounds = array<i64: 3, 16, 1>}, {pipeline_mode = #tpu.pipeline_mode<synchronous>, transform_indices = @transform_5, window_bounds = array<i64: 3, 16, 16>}, {pipeline_mode = #tpu.pipeline_mode<synchronous>, transform_indices = @transform_6, window_bounds = array<i64: 3, 16, 1>}, {pipeline_mode = #tpu.pipeline_mode<synchronous>, transform_indices = @transform_7, window_bounds = array<i64: 8, 16>}, {pipeline_mode = #tpu.pipeline_mode<synchronous>, transform_indices = @transform_8, window_bounds = array<i64: 8, 1>}, {pipeline_mode = #tpu.pipeline_mode<synchronous>, transform_indices = @transform_9, window_bounds = array<i64: 16, 8>}, {pipeline_mode = #tpu.pipeline_mode<synchronous>, transform_indices = @transform_10, window_bounds = array<i64: 16, 1>}, {pipeline_mode = #tpu.pipeline_mode<synchronous>, transform_indices = @transform_11, window_bounds = array<i64: 6, 16, 16>}, {pipeline_mode = #tpu.pipeline_mode<synchronous>, transform_indices = @transform_12, window_bounds = array<i64: 2, 16, 1>}, {pipeline_mode = #tpu.pipeline_mode<synchronous>, transform_indices = @transform_13, window_bounds = array<i64: 2, 16, 16>}, {pipeline_mode = #tpu.pipeline_mode<synchronous>, transform_indices = @transform_14, window_bounds = array<i64: 2, 16, 1>}, {pipeline_mode = #tpu.pipeline_mode<synchronous>, transform_indices = @transform_15, window_bounds = array<i64: 8, 16>}, {pipeline_mode = #tpu.pipeline_mode<synchronous>, transform_indices = @transform_16, window_bounds = array<i64: 8, 1>}, {pipeline_mode = #tpu.pipeline_mode<synchronous>, transform_indices = @transform_17, window_bounds = array<i64: 32, 9>}, {pipeline_mode = #tpu.pipeline_mode<synchronous>, transform_indices = @transform_18, window_bounds = array<i64: 16, 8>}, {pipeline_mode = #tpu.pipeline_mode<synchronous>, transform_indices = @transform_19, window_bounds = array<i64: 16, 1>}, {pipeline_mode = #tpu.pipeline_mode<synchronous>, transform_indices = @transform_20, window_bounds = array<i64: 6, 16, 16>}, {pipeline_mode = #tpu.pipeline_mode<synchronous>, transform_indices = @transform_21, window_bounds = array<i64: 2, 16, 1>}, {pipeline_mode = #tpu.pipeline_mode<synchronous>, transform_indices = @transform_22, window_bounds = array<i64: 2, 16, 16>}, {pipeline_mode = #tpu.pipeline_mode<synchronous>, transform_indices = @transform_23, window_bounds = array<i64: 2, 16, 1>}, {pipeline_mode = #tpu.pipeline_mode<synchronous>, transform_indices = @transform_24, window_bounds = array<i64: 8, 16>}, {pipeline_mode = #tpu.pipeline_mode<synchronous>, transform_indices = @transform_25, window_bounds = array<i64: 8, 1>}, {pipeline_mode = #tpu.pipeline_mode<synchronous>, transform_indices = @transform_26, window_bounds = array<i64: 9, 1>}, {transform_indices = @transform_27, window_bounds = array<i64: 1, 16, 32>}, {transform_indices = @transform_28, window_bounds = array<i64: 1, 8, 32>}, {transform_indices = @transform_29, window_bounds = array<i64: 1, 16, 9>}, {transform_indices = @transform_30, window_bounds = array<i64: 1, 8, 9>}, {transform_indices = @transform_31, window_bounds = array<i64: 1, 16, 1>}, {transform_indices = @transform_32, window_bounds = array<i64: 1, 8, 1>}]} {
    %cst = arith.constant 0.000000e+00 : f32
    %0 = vector.broadcast %cst : f32 to vector<16x8xf32>
    %c0 = arith.constant 0 : index
    %c0_0 = arith.constant 0 : index
    %1 = vector.load %arg34[%c0, %c0_0] : memref<16x40xf32, #tpu.memory_space<vmem>>, vector<16x8xf32>
    tpu.vector_store %arg34[%c0, %c0_0], %0 {strides = array<i32>} : memref<16x40xf32, #tpu.memory_space<vmem>>, vector<16x8xf32>,
    %c0_1 = arith.constant 0 : index
    %c0_2 = arith.constant 0 : index
    %c0_3 = arith.constant 0 : index
    %2 = vector.load %arg1[%c0_1, %c0_2, %c0_3] : memref<1x12x32xf32, #tpu.memory_space<vmem>>, vector<1x12x32xf32>
    %3 = vector.shape_cast %2 : vector<1x12x32xf32> to vector<12x32xf32>
    %c0_4 = arith.constant 0 : index
    %c0_5 = arith.constant 0 : index
    %4 = vector.load %arg2[%c0_4, %c0_5] : memref<16x12xf32, #tpu.memory_space<vmem>>, vector<16x12xf32>
    %cst_6 = arith.constant dense<0.000000e+00> : vector<16x32xf32>
    %5 = tpu.matmul %4, %3, %cst_6 {dimension_numbers = #tpu.dot_dimension_numbers<[1], [0], [0], [1], [0, 0, 1, 1], [], []>} : vector<16x12xf32>, vector<12x32xf32>, vector<16x32xf32> -> vector<16x32xf32>
    %c0_7 = arith.constant 0 : index
    %c0_8 = arith.constant 0 : index
    %6 = vector.load %arg3[%c0_7, %c0_8] : memref<16x1xf32, #tpu.memory_space<vmem>>, vector<16x1xf32>
    %7 = vector.broadcast %6 : vector<16x1xf32> to vector<16x32xf32>
    %8 = arith.addf %5, %7 : vector<16x32xf32>
    %c0_9 = arith.constant 0 : index
    %c8 = arith.constant 8 : index
    %9 = vector.load %arg34[%c0_9, %c8] : memref<16x40xf32, #tpu.memory_space<vmem>>, vector<16x32xf32>
    tpu.vector_store %arg34[%c0_9, %c8], %8 {strides = array<i32>} : memref<16x40xf32, #tpu.memory_space<vmem>>, vector<16x32xf32>,
    %c0_10 = arith.constant 0 : index
    %c8_11 = arith.constant 8 : index
    %10 = vector.load %arg34[%c0_10, %c8_11] : memref<16x40xf32, #tpu.memory_space<vmem>>, vector<16x32xf32>
    %c0_12 = arith.constant 0 : index
    %c0_13 = arith.constant 0 : index
    %c0_14 = arith.constant 0 : index
    %11 = vector.load %arg4[%c0_12, %c0_13, %c0_14] : memref<9x16x16xf32, #tpu.memory_space<vmem>>, vector<1x16x16xf32>
    %12 = vector.shape_cast %11 : vector<1x16x16xf32> to vector<16x16xf32>
    %c0_15 = arith.constant 0 : index
    %c6 = arith.constant 6 : index
    %13 = vector.load %arg34[%c0_15, %c6] : memref<16x40xf32, #tpu.memory_space<vmem>>, vector<16x32xf32>
    %cst_16 = arith.constant dense<0.000000e+00> : vector<16x32xf32>
    %14 = tpu.matmul %12, %13, %cst_16 {dimension_numbers = #tpu.dot_dimension_numbers<[1], [0], [0], [1], [0, 0, 1, 1], [], []>} : vector<16x16xf32>, vector<16x32xf32>, vector<16x32xf32> -> vector<16x32xf32>
    %c1 = arith.constant 1 : index
    %c0_17 = arith.constant 0 : index
    %c0_18 = arith.constant 0 : index
    %15 = vector.load %arg4[%c1, %c0_17, %c0_18] : memref<9x16x16xf32, #tpu.memory_space<vmem>>, vector<1x16x16xf32>
    %16 = vector.shape_cast %15 : vector<1x16x16xf32> to vector<16x16xf32>
    %c0_19 = arith.constant 0 : index
    %c7 = arith.constant 7 : index
    %17 = vector.load %arg34[%c0_19, %c7] : memref<16x40xf32, #tpu.memory_space<vmem>>, vector<16x32xf32>
    %cst_20 = arith.constant dense<0.000000e+00> : vector<16x32xf32>
    %18 = tpu.matmul %16, %17, %cst_20 {dimension_numbers = #tpu.dot_dimension_numbers<[1], [0], [0], [1], [0, 0, 1, 1], [], []>} : vector<16x16xf32>, vector<16x32xf32>, vector<16x32xf32> -> vector<16x32xf32>
    %19 = arith.addf %14, %18 : vector<16x32xf32>
    %c2 = arith.constant 2 : index
    %c0_21 = arith.constant 0 : index
    %c0_22 = arith.constant 0 : index
    %20 = vector.load %arg4[%c2, %c0_21, %c0_22] : memref<9x16x16xf32, #tpu.memory_space<vmem>>, vector<1x16x16xf32>
    %21 = vector.shape_cast %20 : vector<1x16x16xf32> to vector<16x16xf32>
    %cst_23 = arith.constant dense<0.000000e+00> : vector<16x32xf32>
    %22 = tpu.matmul %21, %10, %cst_23 {dimension_numbers = #tpu.dot_dimension_numbers<[1], [0], [0], [1], [0, 0, 1, 1], [], []>} : vector<16x16xf32>, vector<16x32xf32>, vector<16x32xf32> -> vector<16x32xf32>
    %23 = arith.addf %19, %22 : vector<16x32xf32>
    %c0_24 = arith.constant 0 : index
    %c0_25 = arith.constant 0 : index
    %c0_26 = arith.constant 0 : index
    %24 = vector.load %arg5[%c0_24, %c0_25, %c0_26] : memref<3x16x1xf32, #tpu.memory_space<vmem>>, vector<1x16x1xf32>
    %25 = vector.shape_cast %24 : vector<1x16x1xf32> to vector<16x1xf32>
    %26 = vector.broadcast %25 : vector<16x1xf32> to vector<16x32xf32>
    %27 = arith.addf %23, %26 : vector<16x32xf32>
    %cst_27 = arith.constant 0.000000e+00 : f32
    %28 = vector.broadcast %cst_27 : f32 to vector<16x32xf32>
    %29 = arith.maximumf %27, %28 : vector<16x32xf32>
    %c0_28 = arith.constant 0 : index
    %c0_29 = arith.constant 0 : index
    %c0_30 = arith.constant 0 : index
    %30 = vector.load %arg6[%c0_28, %c0_29, %c0_30] : memref<3x16x16xf32, #tpu.memory_space<vmem>>, vector<1x16x16xf32>
    %31 = vector.shape_cast %30 : vector<1x16x16xf32> to vector<16x16xf32>
    %cst_31 = arith.constant dense<0.000000e+00> : vector<16x32xf32>
    %32 = tpu.matmul %31, %29, %cst_31 {dimension_numbers = #tpu.dot_dimension_numbers<[1], [0], [0], [1], [0, 0, 1, 1], [], []>} : vector<16x16xf32>, vector<16x32xf32>, vector<16x32xf32> -> vector<16x32xf32>
    %c0_32 = arith.constant 0 : index
    %c0_33 = arith.constant 0 : index
    %c0_34 = arith.constant 0 : index
    %33 = vector.load %arg7[%c0_32, %c0_33, %c0_34] : memref<3x16x1xf32, #tpu.memory_space<vmem>>, vector<1x16x1xf32>
    %34 = vector.shape_cast %33 : vector<1x16x1xf32> to vector<16x1xf32>
    %35 = vector.broadcast %34 : vector<16x1xf32> to vector<16x32xf32>
    %36 = arith.addf %32, %35 : vector<16x32xf32>
    %37 = arith.addf %10, %36 : vector<16x32xf32>
    %c0_35 = arith.constant 0 : index
    %c8_36 = arith.constant 8 : index
    %38 = vector.load %arg34[%c0_35, %c8_36] : memref<16x40xf32, #tpu.memory_space<vmem>>, vector<16x32xf32>
    tpu.vector_store %arg34[%c0_35, %c8_36], %37 {strides = array<i32>} : memref<16x40xf32, #tpu.memory_space<vmem>>, vector<16x32xf32>,
    %c0_37 = arith.constant 0 : index
    %c8_38 = arith.constant 8 : index
    %39 = vector.load %arg34[%c0_37, %c8_38] : memref<16x40xf32, #tpu.memory_space<vmem>>, vector<16x32xf32>
    %c3 = arith.constant 3 : index
    %c0_39 = arith.constant 0 : index
    %c0_40 = arith.constant 0 : index
    %40 = vector.load %arg4[%c3, %c0_39, %c0_40] : memref<9x16x16xf32, #tpu.memory_space<vmem>>, vector<1x16x16xf32>
    %41 = vector.shape_cast %40 : vector<1x16x16xf32> to vector<16x16xf32>
    %c0_41 = arith.constant 0 : index
    %c4 = arith.constant 4 : index
    %42 = vector.load %arg34[%c0_41, %c4] : memref<16x40xf32, #tpu.memory_space<vmem>>, vector<16x32xf32>
    %cst_42 = arith.constant dense<0.000000e+00> : vector<16x32xf32>
    %43 = tpu.matmul %41, %42, %cst_42 {dimension_numbers = #tpu.dot_dimension_numbers<[1], [0], [0], [1], [0, 0, 1, 1], [], []>} : vector<16x16xf32>, vector<16x32xf32>, vector<16x32xf32> -> vector<16x32xf32>
    %c4_43 = arith.constant 4 : index
    %c0_44 = arith.constant 0 : index
    %c0_45 = arith.constant 0 : index
    %44 = vector.load %arg4[%c4_43, %c0_44, %c0_45] : memref<9x16x16xf32, #tpu.memory_space<vmem>>, vector<1x16x16xf32>
    %45 = vector.shape_cast %44 : vector<1x16x16xf32> to vector<16x16xf32>
    %c0_46 = arith.constant 0 : index
    %c6_47 = arith.constant 6 : index
    %46 = vector.load %arg34[%c0_46, %c6_47] : memref<16x40xf32, #tpu.memory_space<vmem>>, vector<16x32xf32>
    %cst_48 = arith.constant dense<0.000000e+00> : vector<16x32xf32>
    %47 = tpu.matmul %45, %46, %cst_48 {dimension_numbers = #tpu.dot_dimension_numbers<[1], [0], [0], [1], [0, 0, 1, 1], [], []>} : vector<16x16xf32>, vector<16x32xf32>, vector<16x32xf32> -> vector<16x32xf32>
    %48 = arith.addf %43, %47 : vector<16x32xf32>
    %c5 = arith.constant 5 : index
    %c0_49 = arith.constant 0 : index
    %c0_50 = arith.constant 0 : index
    %49 = vector.load %arg4[%c5, %c0_49, %c0_50] : memref<9x16x16xf32, #tpu.memory_space<vmem>>, vector<1x16x16xf32>
    %50 = vector.shape_cast %49 : vector<1x16x16xf32> to vector<16x16xf32>
    %cst_51 = arith.constant dense<0.000000e+00> : vector<16x32xf32>
    %51 = tpu.matmul %50, %39, %cst_51 {dimension_numbers = #tpu.dot_dimension_numbers<[1], [0], [0], [1], [0, 0, 1, 1], [], []>} : vector<16x16xf32>, vector<16x32xf32>, vector<16x32xf32> -> vector<16x32xf32>
    %52 = arith.addf %48, %51 : vector<16x32xf32>
    %c1_52 = arith.constant 1 : index
    %c0_53 = arith.constant 0 : index
    %c0_54 = arith.constant 0 : index
    %53 = vector.load %arg5[%c1_52, %c0_53, %c0_54] : memref<3x16x1xf32, #tpu.memory_space<vmem>>, vector<1x16x1xf32>
    %54 = vector.shape_cast %53 : vector<1x16x1xf32> to vector<16x1xf32>
    %55 = vector.broadcast %54 : vector<16x1xf32> to vector<16x32xf32>
    %56 = arith.addf %52, %55 : vector<16x32xf32>
    %cst_55 = arith.constant 0.000000e+00 : f32
    %57 = vector.broadcast %cst_55 : f32 to vector<16x32xf32>
    %58 = arith.maximumf %56, %57 : vector<16x32xf32>
    %c1_56 = arith.constant 1 : index
    %c0_57 = arith.constant 0 : index
    %c0_58 = arith.constant 0 : index
    %59 = vector.load %arg6[%c1_56, %c0_57, %c0_58] : memref<3x16x16xf32, #tpu.memory_space<vmem>>, vector<1x16x16xf32>
    %60 = vector.shape_cast %59 : vector<1x16x16xf32> to vector<16x16xf32>
    %cst_59 = arith.constant dense<0.000000e+00> : vector<16x32xf32>
    %61 = tpu.matmul %60, %58, %cst_59 {dimension_numbers = #tpu.dot_dimension_numbers<[1], [0], [0], [1], [0, 0, 1, 1], [], []>} : vector<16x16xf32>, vector<16x32xf32>, vector<16x32xf32> -> vector<16x32xf32>
    %c1_60 = arith.constant 1 : index
    %c0_61 = arith.constant 0 : index
    %c0_62 = arith.constant 0 : index
    %62 = vector.load %arg7[%c1_60, %c0_61, %c0_62] : memref<3x16x1xf32, #tpu.memory_space<vmem>>, vector<1x16x1xf32>
    %63 = vector.shape_cast %62 : vector<1x16x1xf32> to vector<16x1xf32>
    %64 = vector.broadcast %63 : vector<16x1xf32> to vector<16x32xf32>
    %65 = arith.addf %61, %64 : vector<16x32xf32>
    %66 = arith.addf %39, %65 : vector<16x32xf32>
    %c0_63 = arith.constant 0 : index
    %c8_64 = arith.constant 8 : index
    %67 = vector.load %arg34[%c0_63, %c8_64] : memref<16x40xf32, #tpu.memory_space<vmem>>, vector<16x32xf32>
    tpu.vector_store %arg34[%c0_63, %c8_64], %66 {strides = array<i32>} : memref<16x40xf32, #tpu.memory_space<vmem>>, vector<16x32xf32>,
    %c0_65 = arith.constant 0 : index
    %c8_66 = arith.constant 8 : index
    %68 = vector.load %arg34[%c0_65, %c8_66] : memref<16x40xf32, #tpu.memory_space<vmem>>, vector<16x32xf32>
    %c6_67 = arith.constant 6 : index
    %c0_68 = arith.constant 0 : index
    %c0_69 = arith.constant 0 : index
    %69 = vector.load %arg4[%c6_67, %c0_68, %c0_69] : memref<9x16x16xf32, #tpu.memory_space<vmem>>, vector<1x16x16xf32>
    %70 = vector.shape_cast %69 : vector<1x16x16xf32> to vector<16x16xf32>
    %c0_70 = arith.constant 0 : index
    %c0_71 = arith.constant 0 : index
    %71 = vector.load %arg34[%c0_70, %c0_71] : memref<16x40xf32, #tpu.memory_space<vmem>>, vector<16x32xf32>
    %cst_72 = arith.constant dense<0.000000e+00> : vector<16x32xf32>
    %72 = tpu.matmul %70, %71, %cst_72 {dimension_numbers = #tpu.dot_dimension_numbers<[1], [0], [0], [1], [0, 0, 1, 1], [], []>} : vector<16x16xf32>, vector<16x32xf32>, vector<16x32xf32> -> vector<16x32xf32>
    %c7_73 = arith.constant 7 : index
    %c0_74 = arith.constant 0 : index
    %c0_75 = arith.constant 0 : index
    %73 = vector.load %arg4[%c7_73, %c0_74, %c0_75] : memref<9x16x16xf32, #tpu.memory_space<vmem>>, vector<1x16x16xf32>
    %74 = vector.shape_cast %73 : vector<1x16x16xf32> to vector<16x16xf32>
    %c0_76 = arith.constant 0 : index
    %c4_77 = arith.constant 4 : index
    %75 = vector.load %arg34[%c0_76, %c4_77] : memref<16x40xf32, #tpu.memory_space<vmem>>, vector<16x32xf32>
    %cst_78 = arith.constant dense<0.000000e+00> : vector<16x32xf32>
    %76 = tpu.matmul %74, %75, %cst_78 {dimension_numbers = #tpu.dot_dimension_numbers<[1], [0], [0], [1], [0, 0, 1, 1], [], []>} : vector<16x16xf32>, vector<16x32xf32>, vector<16x32xf32> -> vector<16x32xf32>
    %77 = arith.addf %72, %76 : vector<16x32xf32>
    %c8_79 = arith.constant 8 : index
    %c0_80 = arith.constant 0 : index
    %c0_81 = arith.constant 0 : index
    %78 = vector.load %arg4[%c8_79, %c0_80, %c0_81] : memref<9x16x16xf32, #tpu.memory_space<vmem>>, vector<1x16x16xf32>
    %79 = vector.shape_cast %78 : vector<1x16x16xf32> to vector<16x16xf32>
    %cst_82 = arith.constant dense<0.000000e+00> : vector<16x32xf32>
    %80 = tpu.matmul %79, %68, %cst_82 {dimension_numbers = #tpu.dot_dimension_numbers<[1], [0], [0], [1], [0, 0, 1, 1], [], []>} : vector<16x16xf32>, vector<16x32xf32>, vector<16x32xf32> -> vector<16x32xf32>
    %81 = arith.addf %77, %80 : vector<16x32xf32>
    %c2_83 = arith.constant 2 : index
    %c0_84 = arith.constant 0 : index
    %c0_85 = arith.constant 0 : index
    %82 = vector.load %arg5[%c2_83, %c0_84, %c0_85] : memref<3x16x1xf32, #tpu.memory_space<vmem>>, vector<1x16x1xf32>
    %83 = vector.shape_cast %82 : vector<1x16x1xf32> to vector<16x1xf32>
    %84 = vector.broadcast %83 : vector<16x1xf32> to vector<16x32xf32>
    %85 = arith.addf %81, %84 : vector<16x32xf32>
    %cst_86 = arith.constant 0.000000e+00 : f32
    %86 = vector.broadcast %cst_86 : f32 to vector<16x32xf32>
    %87 = arith.maximumf %85, %86 : vector<16x32xf32>
    %c2_87 = arith.constant 2 : index
    %c0_88 = arith.constant 0 : index
    %c0_89 = arith.constant 0 : index
    %88 = vector.load %arg6[%c2_87, %c0_88, %c0_89] : memref<3x16x16xf32, #tpu.memory_space<vmem>>, vector<1x16x16xf32>
    %89 = vector.shape_cast %88 : vector<1x16x16xf32> to vector<16x16xf32>
    %cst_90 = arith.constant dense<0.000000e+00> : vector<16x32xf32>
    %90 = tpu.matmul %89, %87, %cst_90 {dimension_numbers = #tpu.dot_dimension_numbers<[1], [0], [0], [1], [0, 0, 1, 1], [], []>} : vector<16x16xf32>, vector<16x32xf32>, vector<16x32xf32> -> vector<16x32xf32>
    %c2_91 = arith.constant 2 : index
    %c0_92 = arith.constant 0 : index
    %c0_93 = arith.constant 0 : index
    %91 = vector.load %arg7[%c2_91, %c0_92, %c0_93] : memref<3x16x1xf32, #tpu.memory_space<vmem>>, vector<1x16x1xf32>
    %92 = vector.shape_cast %91 : vector<1x16x1xf32> to vector<16x1xf32>
    %93 = vector.broadcast %92 : vector<16x1xf32> to vector<16x32xf32>
    %94 = arith.addf %90, %93 : vector<16x32xf32>
    %95 = arith.addf %68, %94 : vector<16x32xf32>
    %c0_94 = arith.constant 0 : index
    %c8_95 = arith.constant 8 : index
    %96 = vector.load %arg34[%c0_94, %c8_95] : memref<16x40xf32, #tpu.memory_space<vmem>>, vector<16x32xf32>
    tpu.vector_store %arg34[%c0_94, %c8_95], %95 {strides = array<i32>} : memref<16x40xf32, #tpu.memory_space<vmem>>, vector<16x32xf32>,
    %c0_96 = arith.constant 0 : index
    %c8_97 = arith.constant 8 : index
    %97 = vector.load %arg34[%c0_96, %c8_97] : memref<16x40xf32, #tpu.memory_space<vmem>>, vector<16x32xf32>
    %c0_98 = arith.constant 0 : index
    %c0_99 = arith.constant 0 : index
    %98 = vector.load %arg8[%c0_98, %c0_99] : memref<8x16xf32, #tpu.memory_space<vmem>>, vector<8x16xf32>
    %cst_100 = arith.constant dense<0.000000e+00> : vector<8x32xf32>
    %99 = tpu.matmul %98, %97, %cst_100 {dimension_numbers = #tpu.dot_dimension_numbers<[1], [0], [0], [1], [0, 0, 1, 1], [], []>} : vector<8x16xf32>, vector<16x32xf32>, vector<8x32xf32> -> vector<8x32xf32>
    %c0_101 = arith.constant 0 : index
    %c0_102 = arith.constant 0 : index
    %100 = vector.load %arg9[%c0_101, %c0_102] : memref<8x1xf32, #tpu.memory_space<vmem>>, vector<8x1xf32>
    %101 = vector.broadcast %100 : vector<8x1xf32> to vector<8x32xf32>
    %102 = arith.addf %99, %101 : vector<8x32xf32>
    %c0_103 = arith.constant 0 : index
    %c0_104 = arith.constant 0 : index
    %c0_105 = arith.constant 0 : index
    %103 = vector.load %arg28[%c0_103, %c0_104, %c0_105] : memref<1x16x32xf32, #tpu.memory_space<vmem>>, vector<1x16x32xf32>
    %104 = vector.shape_cast %103 : vector<1x16x32xf32> to vector<16x32xf32>
    %105 = vector.shape_cast %97 : vector<16x32xf32> to vector<1x16x32xf32>
    tpu.vector_store %arg28[%c0_103, %c0_104, %c0_105], %105 {strides = array<i32>} : memref<1x16x32xf32, #tpu.memory_space<vmem>>, vector<1x16x32xf32>,
    %c0_106 = arith.constant 0 : index
    %c0_107 = arith.constant 0 : index
    %c0_108 = arith.constant 0 : index
    %106 = vector.load %arg29[%c0_106, %c0_107, %c0_108] : memref<1x8x32xf32, #tpu.memory_space<vmem>>, vector<1x8x32xf32>
    %107 = vector.shape_cast %106 : vector<1x8x32xf32> to vector<8x32xf32>
    %108 = vector.shape_cast %102 : vector<8x32xf32> to vector<1x8x32xf32>
    tpu.vector_store %arg29[%c0_106, %c0_107, %c0_108], %108 {strides = array<i32>} : memref<1x8x32xf32, #tpu.memory_space<vmem>>, vector<1x8x32xf32>,
    %c0_109 = arith.constant 0 : index
    %c0_110 = arith.constant 0 : index
    %109 = vector.load %arg10[%c0_109, %c0_110] : memref<16x8xf32, #tpu.memory_space<vmem>>, vector<16x8xf32>
    %cst_111 = arith.constant dense<0.000000e+00> : vector<16x32xf32>
    %110 = tpu.matmul %109, %102, %cst_111 {dimension_numbers = #tpu.dot_dimension_numbers<[1], [0], [0], [1], [0, 0, 1, 1], [], []>} : vector<16x8xf32>, vector<8x32xf32>, vector<16x32xf32> -> vector<16x32xf32>
    %c0_112 = arith.constant 0 : index
    %c0_113 = arith.constant 0 : index
    %111 = vector.load %arg11[%c0_112, %c0_113] : memref<16x1xf32, #tpu.memory_space<vmem>>, vector<16x1xf32>
    %112 = vector.broadcast %111 : vector<16x1xf32> to vector<16x32xf32>
    %113 = arith.addf %110, %112 : vector<16x32xf32>
    %c0_114 = arith.constant 0 : index
    %c8_115 = arith.constant 8 : index
    %114 = vector.load %arg34[%c0_114, %c8_115] : memref<16x40xf32, #tpu.memory_space<vmem>>, vector<16x32xf32>
    tpu.vector_store %arg34[%c0_114, %c8_115], %113 {strides = array<i32>} : memref<16x40xf32, #tpu.memory_space<vmem>>, vector<16x32xf32>,
    %c0_116 = arith.constant 0 : index
    %c8_117 = arith.constant 8 : index
    %115 = vector.load %arg34[%c0_116, %c8_117] : memref<16x40xf32, #tpu.memory_space<vmem>>, vector<16x32xf32>
    %c0_118 = arith.constant 0 : index
    %c0_119 = arith.constant 0 : index
    %c0_120 = arith.constant 0 : index
    %116 = vector.load %arg12[%c0_118, %c0_119, %c0_120] : memref<6x16x16xf32, #tpu.memory_space<vmem>>, vector<1x16x16xf32>
    %117 = vector.shape_cast %116 : vector<1x16x16xf32> to vector<16x16xf32>
    %c0_121 = arith.constant 0 : index
    %c6_122 = arith.constant 6 : index
    %118 = vector.load %arg34[%c0_121, %c6_122] : memref<16x40xf32, #tpu.memory_space<vmem>>, vector<16x32xf32>
    %cst_123 = arith.constant dense<0.000000e+00> : vector<16x32xf32>
    %119 = tpu.matmul %117, %118, %cst_123 {dimension_numbers = #tpu.dot_dimension_numbers<[1], [0], [0], [1], [0, 0, 1, 1], [], []>} : vector<16x16xf32>, vector<16x32xf32>, vector<16x32xf32> -> vector<16x32xf32>
    %c1_124 = arith.constant 1 : index
    %c0_125 = arith.constant 0 : index
    %c0_126 = arith.constant 0 : index
    %120 = vector.load %arg12[%c1_124, %c0_125, %c0_126] : memref<6x16x16xf32, #tpu.memory_space<vmem>>, vector<1x16x16xf32>
    %121 = vector.shape_cast %120 : vector<1x16x16xf32> to vector<16x16xf32>
    %c0_127 = arith.constant 0 : index
    %c7_128 = arith.constant 7 : index
    %122 = vector.load %arg34[%c0_127, %c7_128] : memref<16x40xf32, #tpu.memory_space<vmem>>, vector<16x32xf32>
    %cst_129 = arith.constant dense<0.000000e+00> : vector<16x32xf32>
    %123 = tpu.matmul %121, %122, %cst_129 {dimension_numbers = #tpu.dot_dimension_numbers<[1], [0], [0], [1], [0, 0, 1, 1], [], []>} : vector<16x16xf32>, vector<16x32xf32>, vector<16x32xf32> -> vector<16x32xf32>
    %124 = arith.addf %119, %123 : vector<16x32xf32>
    %c2_130 = arith.constant 2 : index
    %c0_131 = arith.constant 0 : index
    %c0_132 = arith.constant 0 : index
    %125 = vector.load %arg12[%c2_130, %c0_131, %c0_132] : memref<6x16x16xf32, #tpu.memory_space<vmem>>, vector<1x16x16xf32>
    %126 = vector.shape_cast %125 : vector<1x16x16xf32> to vector<16x16xf32>
    %cst_133 = arith.constant dense<0.000000e+00> : vector<16x32xf32>
    %127 = tpu.matmul %126, %115, %cst_133 {dimension_numbers = #tpu.dot_dimension_numbers<[1], [0], [0], [1], [0, 0, 1, 1], [], []>} : vector<16x16xf32>, vector<16x32xf32>, vector<16x32xf32> -> vector<16x32xf32>
    %128 = arith.addf %124, %127 : vector<16x32xf32>
    %c0_134 = arith.constant 0 : index
    %c0_135 = arith.constant 0 : index
    %c0_136 = arith.constant 0 : index
    %129 = vector.load %arg13[%c0_134, %c0_135, %c0_136] : memref<2x16x1xf32, #tpu.memory_space<vmem>>, vector<1x16x1xf32>
    %130 = vector.shape_cast %129 : vector<1x16x1xf32> to vector<16x1xf32>
    %131 = vector.broadcast %130 : vector<16x1xf32> to vector<16x32xf32>
    %132 = arith.addf %128, %131 : vector<16x32xf32>
    %cst_137 = arith.constant 0.000000e+00 : f32
    %133 = vector.broadcast %cst_137 : f32 to vector<16x32xf32>
    %134 = arith.maximumf %132, %133 : vector<16x32xf32>
    %c0_138 = arith.constant 0 : index
    %c0_139 = arith.constant 0 : index
    %c0_140 = arith.constant 0 : index
    %135 = vector.load %arg14[%c0_138, %c0_139, %c0_140] : memref<2x16x16xf32, #tpu.memory_space<vmem>>, vector<1x16x16xf32>
    %136 = vector.shape_cast %135 : vector<1x16x16xf32> to vector<16x16xf32>
    %cst_141 = arith.constant dense<0.000000e+00> : vector<16x32xf32>
    %137 = tpu.matmul %136, %134, %cst_141 {dimension_numbers = #tpu.dot_dimension_numbers<[1], [0], [0], [1], [0, 0, 1, 1], [], []>} : vector<16x16xf32>, vector<16x32xf32>, vector<16x32xf32> -> vector<16x32xf32>
    %c0_142 = arith.constant 0 : index
    %c0_143 = arith.constant 0 : index
    %c0_144 = arith.constant 0 : index
    %138 = vector.load %arg15[%c0_142, %c0_143, %c0_144] : memref<2x16x1xf32, #tpu.memory_space<vmem>>, vector<1x16x1xf32>
    %139 = vector.shape_cast %138 : vector<1x16x1xf32> to vector<16x1xf32>
    %140 = vector.broadcast %139 : vector<16x1xf32> to vector<16x32xf32>
    %141 = arith.addf %137, %140 : vector<16x32xf32>
    %142 = arith.addf %115, %141 : vector<16x32xf32>
    %c0_145 = arith.constant 0 : index
    %c8_146 = arith.constant 8 : index
    %143 = vector.load %arg34[%c0_145, %c8_146] : memref<16x40xf32, #tpu.memory_space<vmem>>, vector<16x32xf32>
    tpu.vector_store %arg34[%c0_145, %c8_146], %142 {strides = array<i32>} : memref<16x40xf32, #tpu.memory_space<vmem>>, vector<16x32xf32>,
    %c0_147 = arith.constant 0 : index
    %c8_148 = arith.constant 8 : index
    %144 = vector.load %arg34[%c0_147, %c8_148] : memref<16x40xf32, #tpu.memory_space<vmem>>, vector<16x32xf32>
    %c3_149 = arith.constant 3 : index
    %c0_150 = arith.constant 0 : index
    %c0_151 = arith.constant 0 : index
    %145 = vector.load %arg12[%c3_149, %c0_150, %c0_151] : memref<6x16x16xf32, #tpu.memory_space<vmem>>, vector<1x16x16xf32>
    %146 = vector.shape_cast %145 : vector<1x16x16xf32> to vector<16x16xf32>
    %c0_152 = arith.constant 0 : index
    %c4_153 = arith.constant 4 : index
    %147 = vector.load %arg34[%c0_152, %c4_153] : memref<16x40xf32, #tpu.memory_space<vmem>>, vector<16x32xf32>
    %cst_154 = arith.constant dense<0.000000e+00> : vector<16x32xf32>
    %148 = tpu.matmul %146, %147, %cst_154 {dimension_numbers = #tpu.dot_dimension_numbers<[1], [0], [0], [1], [0, 0, 1, 1], [], []>} : vector<16x16xf32>, vector<16x32xf32>, vector<16x32xf32> -> vector<16x32xf32>
    %c4_155 = arith.constant 4 : index
    %c0_156 = arith.constant 0 : index
    %c0_157 = arith.constant 0 : index
    %149 = vector.load %arg12[%c4_155, %c0_156, %c0_157] : memref<6x16x16xf32, #tpu.memory_space<vmem>>, vector<1x16x16xf32>
    %150 = vector.shape_cast %149 : vector<1x16x16xf32> to vector<16x16xf32>
    %c0_158 = arith.constant 0 : index
    %c6_159 = arith.constant 6 : index
    %151 = vector.load %arg34[%c0_158, %c6_159] : memref<16x40xf32, #tpu.memory_space<vmem>>, vector<16x32xf32>
    %cst_160 = arith.constant dense<0.000000e+00> : vector<16x32xf32>
    %152 = tpu.matmul %150, %151, %cst_160 {dimension_numbers = #tpu.dot_dimension_numbers<[1], [0], [0], [1], [0, 0, 1, 1], [], []>} : vector<16x16xf32>, vector<16x32xf32>, vector<16x32xf32> -> vector<16x32xf32>
    %153 = arith.addf %148, %152 : vector<16x32xf32>
    %c5_161 = arith.constant 5 : index
    %c0_162 = arith.constant 0 : index
    %c0_163 = arith.constant 0 : index
    %154 = vector.load %arg12[%c5_161, %c0_162, %c0_163] : memref<6x16x16xf32, #tpu.memory_space<vmem>>, vector<1x16x16xf32>
    %155 = vector.shape_cast %154 : vector<1x16x16xf32> to vector<16x16xf32>
    %cst_164 = arith.constant dense<0.000000e+00> : vector<16x32xf32>
    %156 = tpu.matmul %155, %144, %cst_164 {dimension_numbers = #tpu.dot_dimension_numbers<[1], [0], [0], [1], [0, 0, 1, 1], [], []>} : vector<16x16xf32>, vector<16x32xf32>, vector<16x32xf32> -> vector<16x32xf32>
    %157 = arith.addf %153, %156 : vector<16x32xf32>
    %c1_165 = arith.constant 1 : index
    %c0_166 = arith.constant 0 : index
    %c0_167 = arith.constant 0 : index
    %158 = vector.load %arg13[%c1_165, %c0_166, %c0_167] : memref<2x16x1xf32, #tpu.memory_space<vmem>>, vector<1x16x1xf32>
    %159 = vector.shape_cast %158 : vector<1x16x1xf32> to vector<16x1xf32>
    %160 = vector.broadcast %159 : vector<16x1xf32> to vector<16x32xf32>
    %161 = arith.addf %157, %160 : vector<16x32xf32>
    %cst_168 = arith.constant 0.000000e+00 : f32
    %162 = vector.broadcast %cst_168 : f32 to vector<16x32xf32>
    %163 = arith.maximumf %161, %162 : vector<16x32xf32>
    %c1_169 = arith.constant 1 : index
    %c0_170 = arith.constant 0 : index
    %c0_171 = arith.constant 0 : index
    %164 = vector.load %arg14[%c1_169, %c0_170, %c0_171] : memref<2x16x16xf32, #tpu.memory_space<vmem>>, vector<1x16x16xf32>
    %165 = vector.shape_cast %164 : vector<1x16x16xf32> to vector<16x16xf32>
    %cst_172 = arith.constant dense<0.000000e+00> : vector<16x32xf32>
    %166 = tpu.matmul %165, %163, %cst_172 {dimension_numbers = #tpu.dot_dimension_numbers<[1], [0], [0], [1], [0, 0, 1, 1], [], []>} : vector<16x16xf32>, vector<16x32xf32>, vector<16x32xf32> -> vector<16x32xf32>
    %c1_173 = arith.constant 1 : index
    %c0_174 = arith.constant 0 : index
    %c0_175 = arith.constant 0 : index
    %167 = vector.load %arg15[%c1_173, %c0_174, %c0_175] : memref<2x16x1xf32, #tpu.memory_space<vmem>>, vector<1x16x1xf32>
    %168 = vector.shape_cast %167 : vector<1x16x1xf32> to vector<16x1xf32>
    %169 = vector.broadcast %168 : vector<16x1xf32> to vector<16x32xf32>
    %170 = arith.addf %166, %169 : vector<16x32xf32>
    %171 = arith.addf %144, %170 : vector<16x32xf32>
    %c0_176 = arith.constant 0 : index
    %c8_177 = arith.constant 8 : index
    %172 = vector.load %arg34[%c0_176, %c8_177] : memref<16x40xf32, #tpu.memory_space<vmem>>, vector<16x32xf32>
    tpu.vector_store %arg34[%c0_176, %c8_177], %171 {strides = array<i32>} : memref<16x40xf32, #tpu.memory_space<vmem>>, vector<16x32xf32>,
    %c0_178 = arith.constant 0 : index
    %c8_179 = arith.constant 8 : index
    %173 = vector.load %arg34[%c0_178, %c8_179] : memref<16x40xf32, #tpu.memory_space<vmem>>, vector<16x32xf32>
    %c0_180 = arith.constant 0 : index
    %c0_181 = arith.constant 0 : index
    %174 = vector.load %arg18[%c0_180, %c0_181] : memref<32x9xf32, #tpu.memory_space<vmem>>, vector<32x9xf32>
    %cst_182 = arith.constant dense<0.000000e+00> : vector<16x9xf32>
    %175 = tpu.matmul %173, %174, %cst_182 {dimension_numbers = #tpu.dot_dimension_numbers<[1], [0], [0], [1], [0, 0, 1, 1], [], []>} : vector<16x32xf32>, vector<32x9xf32>, vector<16x9xf32> -> vector<16x9xf32>
    %c0_183 = arith.constant 0 : index
    %c0_184 = arith.constant 0 : index
    %176 = vector.load %arg16[%c0_183, %c0_184] : memref<8x16xf32, #tpu.memory_space<vmem>>, vector<8x16xf32>
    %cst_185 = arith.constant dense<0.000000e+00> : vector<8x9xf32>
    %177 = tpu.matmul %176, %175, %cst_185 {dimension_numbers = #tpu.dot_dimension_numbers<[1], [0], [0], [1], [0, 0, 1, 1], [], []>} : vector<8x16xf32>, vector<16x9xf32>, vector<8x9xf32> -> vector<8x9xf32>
    %c0_186 = arith.constant 0 : index
    %c0_187 = arith.constant 0 : index
    %178 = vector.load %arg17[%c0_186, %c0_187] : memref<8x1xf32, #tpu.memory_space<vmem>>, vector<8x1xf32>
    %179 = vector.broadcast %178 : vector<8x1xf32> to vector<8x9xf32>
    %180 = arith.addf %177, %179 : vector<8x9xf32>
    %c0_188 = arith.constant 0 : index
    %c0_189 = arith.constant 0 : index
    %c0_190 = arith.constant 0 : index
    %181 = vector.load %arg30[%c0_188, %c0_189, %c0_190] : memref<1x16x9xf32, #tpu.memory_space<vmem>>, vector<1x16x9xf32>
    %182 = vector.shape_cast %181 : vector<1x16x9xf32> to vector<16x9xf32>
    %183 = vector.shape_cast %175 : vector<16x9xf32> to vector<1x16x9xf32>
    tpu.vector_store %arg30[%c0_188, %c0_189, %c0_190], %183 {strides = array<i32>} : memref<1x16x9xf32, #tpu.memory_space<vmem>>, vector<1x16x9xf32>,
    %c0_191 = arith.constant 0 : index
    %c0_192 = arith.constant 0 : index
    %c0_193 = arith.constant 0 : index
    %184 = vector.load %arg31[%c0_191, %c0_192, %c0_193] : memref<1x8x9xf32, #tpu.memory_space<vmem>>, vector<1x8x9xf32>
    %185 = vector.shape_cast %184 : vector<1x8x9xf32> to vector<8x9xf32>
    %186 = vector.shape_cast %180 : vector<8x9xf32> to vector<1x8x9xf32>
    tpu.vector_store %arg31[%c0_191, %c0_192, %c0_193], %186 {strides = array<i32>} : memref<1x8x9xf32, #tpu.memory_space<vmem>>, vector<1x8x9xf32>,
    %c0_194 = arith.constant 0 : index
    %c0_195 = arith.constant 0 : index
    %187 = vector.load %arg19[%c0_194, %c0_195] : memref<16x8xf32, #tpu.memory_space<vmem>>, vector<16x8xf32>
    %cst_196 = arith.constant dense<0.000000e+00> : vector<16x9xf32>
    %188 = tpu.matmul %187, %180, %cst_196 {dimension_numbers = #tpu.dot_dimension_numbers<[1], [0], [0], [1], [0, 0, 1, 1], [], []>} : vector<16x8xf32>, vector<8x9xf32>, vector<16x9xf32> -> vector<16x9xf32>
    %c0_197 = arith.constant 0 : index
    %c0_198 = arith.constant 0 : index
    %189 = vector.load %arg20[%c0_197, %c0_198] : memref<16x1xf32, #tpu.memory_space<vmem>>, vector<16x1xf32>
    %190 = vector.broadcast %189 : vector<16x1xf32> to vector<16x9xf32>
    %191 = arith.addf %188, %190 : vector<16x9xf32>
    %c0_199 = arith.constant 0 : index
    %c8_200 = arith.constant 8 : index
    %192 = vector.load %arg34[%c0_199, %c8_200] : memref<16x40xf32, #tpu.memory_space<vmem>>, vector<16x9xf32>
    tpu.vector_store %arg34[%c0_199, %c8_200], %191 {strides = array<i32>} : memref<16x40xf32, #tpu.memory_space<vmem>>, vector<16x9xf32>,
    %c0_201 = arith.constant 0 : index
    %c8_202 = arith.constant 8 : index
    %193 = vector.load %arg34[%c0_201, %c8_202] : memref<16x40xf32, #tpu.memory_space<vmem>>, vector<16x9xf32>
    %c0_203 = arith.constant 0 : index
    %c0_204 = arith.constant 0 : index
    %c0_205 = arith.constant 0 : index
    %194 = vector.load %arg21[%c0_203, %c0_204, %c0_205] : memref<6x16x16xf32, #tpu.memory_space<vmem>>, vector<1x16x16xf32>
    %195 = vector.shape_cast %194 : vector<1x16x16xf32> to vector<16x16xf32>
    %c0_206 = arith.constant 0 : index
    %c6_207 = arith.constant 6 : index
    %196 = vector.load %arg34[%c0_206, %c6_207] : memref<16x40xf32, #tpu.memory_space<vmem>>, vector<16x9xf32>
    %cst_208 = arith.constant dense<0.000000e+00> : vector<16x9xf32>
    %197 = tpu.matmul %195, %196, %cst_208 {dimension_numbers = #tpu.dot_dimension_numbers<[1], [0], [0], [1], [0, 0, 1, 1], [], []>} : vector<16x16xf32>, vector<16x9xf32>, vector<16x9xf32> -> vector<16x9xf32>
    %c1_209 = arith.constant 1 : index
    %c0_210 = arith.constant 0 : index
    %c0_211 = arith.constant 0 : index
    %198 = vector.load %arg21[%c1_209, %c0_210, %c0_211] : memref<6x16x16xf32, #tpu.memory_space<vmem>>, vector<1x16x16xf32>
    %199 = vector.shape_cast %198 : vector<1x16x16xf32> to vector<16x16xf32>
    %c0_212 = arith.constant 0 : index
    %c7_213 = arith.constant 7 : index
    %200 = vector.load %arg34[%c0_212, %c7_213] : memref<16x40xf32, #tpu.memory_space<vmem>>, vector<16x9xf32>
    %cst_214 = arith.constant dense<0.000000e+00> : vector<16x9xf32>
    %201 = tpu.matmul %199, %200, %cst_214 {dimension_numbers = #tpu.dot_dimension_numbers<[1], [0], [0], [1], [0, 0, 1, 1], [], []>} : vector<16x16xf32>, vector<16x9xf32>, vector<16x9xf32> -> vector<16x9xf32>
    %202 = arith.addf %197, %201 : vector<16x9xf32>
    %c2_215 = arith.constant 2 : index
    %c0_216 = arith.constant 0 : index
    %c0_217 = arith.constant 0 : index
    %203 = vector.load %arg21[%c2_215, %c0_216, %c0_217] : memref<6x16x16xf32, #tpu.memory_space<vmem>>, vector<1x16x16xf32>
    %204 = vector.shape_cast %203 : vector<1x16x16xf32> to vector<16x16xf32>
    %cst_218 = arith.constant dense<0.000000e+00> : vector<16x9xf32>
    %205 = tpu.matmul %204, %193, %cst_218 {dimension_numbers = #tpu.dot_dimension_numbers<[1], [0], [0], [1], [0, 0, 1, 1], [], []>} : vector<16x16xf32>, vector<16x9xf32>, vector<16x9xf32> -> vector<16x9xf32>
    %206 = arith.addf %202, %205 : vector<16x9xf32>
    %c0_219 = arith.constant 0 : index
    %c0_220 = arith.constant 0 : index
    %c0_221 = arith.constant 0 : index
    %207 = vector.load %arg22[%c0_219, %c0_220, %c0_221] : memref<2x16x1xf32, #tpu.memory_space<vmem>>, vector<1x16x1xf32>
    %208 = vector.shape_cast %207 : vector<1x16x1xf32> to vector<16x1xf32>
    %209 = vector.broadcast %208 : vector<16x1xf32> to vector<16x9xf32>
    %210 = arith.addf %206, %209 : vector<16x9xf32>
    %cst_222 = arith.constant 0.000000e+00 : f32
    %211 = vector.broadcast %cst_222 : f32 to vector<16x9xf32>
    %212 = arith.maximumf %210, %211 : vector<16x9xf32>
    %c0_223 = arith.constant 0 : index
    %c0_224 = arith.constant 0 : index
    %c0_225 = arith.constant 0 : index
    %213 = vector.load %arg23[%c0_223, %c0_224, %c0_225] : memref<2x16x16xf32, #tpu.memory_space<vmem>>, vector<1x16x16xf32>
    %214 = vector.shape_cast %213 : vector<1x16x16xf32> to vector<16x16xf32>
    %cst_226 = arith.constant dense<0.000000e+00> : vector<16x9xf32>
    %215 = tpu.matmul %214, %212, %cst_226 {dimension_numbers = #tpu.dot_dimension_numbers<[1], [0], [0], [1], [0, 0, 1, 1], [], []>} : vector<16x16xf32>, vector<16x9xf32>, vector<16x9xf32> -> vector<16x9xf32>
    %c0_227 = arith.constant 0 : index
    %c0_228 = arith.constant 0 : index
    %c0_229 = arith.constant 0 : index
    %216 = vector.load %arg24[%c0_227, %c0_228, %c0_229] : memref<2x16x1xf32, #tpu.memory_space<vmem>>, vector<1x16x1xf32>
    %217 = vector.shape_cast %216 : vector<1x16x1xf32> to vector<16x1xf32>
    %218 = vector.broadcast %217 : vector<16x1xf32> to vector<16x9xf32>
    %219 = arith.addf %215, %218 : vector<16x9xf32>
    %220 = arith.addf %193, %219 : vector<16x9xf32>
    %c0_230 = arith.constant 0 : index
    %c8_231 = arith.constant 8 : index
    %221 = vector.load %arg34[%c0_230, %c8_231] : memref<16x40xf32, #tpu.memory_space<vmem>>, vector<16x9xf32>
    tpu.vector_store %arg34[%c0_230, %c8_231], %220 {strides = array<i32>} : memref<16x40xf32, #tpu.memory_space<vmem>>, vector<16x9xf32>,
    %c0_232 = arith.constant 0 : index
    %c8_233 = arith.constant 8 : index
    %222 = vector.load %arg34[%c0_232, %c8_233] : memref<16x40xf32, #tpu.memory_space<vmem>>, vector<16x9xf32>
    %c3_234 = arith.constant 3 : index
    %c0_235 = arith.constant 0 : index
    %c0_236 = arith.constant 0 : index
    %223 = vector.load %arg21[%c3_234, %c0_235, %c0_236] : memref<6x16x16xf32, #tpu.memory_space<vmem>>, vector<1x16x16xf32>
    %224 = vector.shape_cast %223 : vector<1x16x16xf32> to vector<16x16xf32>
    %c0_237 = arith.constant 0 : index
    %c4_238 = arith.constant 4 : index
    %225 = vector.load %arg34[%c0_237, %c4_238] : memref<16x40xf32, #tpu.memory_space<vmem>>, vector<16x9xf32>
    %cst_239 = arith.constant dense<0.000000e+00> : vector<16x9xf32>
    %226 = tpu.matmul %224, %225, %cst_239 {dimension_numbers = #tpu.dot_dimension_numbers<[1], [0], [0], [1], [0, 0, 1, 1], [], []>} : vector<16x16xf32>, vector<16x9xf32>, vector<16x9xf32> -> vector<16x9xf32>
    %c4_240 = arith.constant 4 : index
    %c0_241 = arith.constant 0 : index
    %c0_242 = arith.constant 0 : index
    %227 = vector.load %arg21[%c4_240, %c0_241, %c0_242] : memref<6x16x16xf32, #tpu.memory_space<vmem>>, vector<1x16x16xf32>
    %228 = vector.shape_cast %227 : vector<1x16x16xf32> to vector<16x16xf32>
    %c0_243 = arith.constant 0 : index
    %c6_244 = arith.constant 6 : index
    %229 = vector.load %arg34[%c0_243, %c6_244] : memref<16x40xf32, #tpu.memory_space<vmem>>, vector<16x9xf32>
    %cst_245 = arith.constant dense<0.000000e+00> : vector<16x9xf32>
    %230 = tpu.matmul %228, %229, %cst_245 {dimension_numbers = #tpu.dot_dimension_numbers<[1], [0], [0], [1], [0, 0, 1, 1], [], []>} : vector<16x16xf32>, vector<16x9xf32>, vector<16x9xf32> -> vector<16x9xf32>
    %231 = arith.addf %226, %230 : vector<16x9xf32>
    %c5_246 = arith.constant 5 : index
    %c0_247 = arith.constant 0 : index
    %c0_248 = arith.constant 0 : index
    %232 = vector.load %arg21[%c5_246, %c0_247, %c0_248] : memref<6x16x16xf32, #tpu.memory_space<vmem>>, vector<1x16x16xf32>
    %233 = vector.shape_cast %232 : vector<1x16x16xf32> to vector<16x16xf32>
    %cst_249 = arith.constant dense<0.000000e+00> : vector<16x9xf32>
    %234 = tpu.matmul %233, %222, %cst_249 {dimension_numbers = #tpu.dot_dimension_numbers<[1], [0], [0], [1], [0, 0, 1, 1], [], []>} : vector<16x16xf32>, vector<16x9xf32>, vector<16x9xf32> -> vector<16x9xf32>
    %235 = arith.addf %231, %234 : vector<16x9xf32>
    %c1_250 = arith.constant 1 : index
    %c0_251 = arith.constant 0 : index
    %c0_252 = arith.constant 0 : index
    %236 = vector.load %arg22[%c1_250, %c0_251, %c0_252] : memref<2x16x1xf32, #tpu.memory_space<vmem>>, vector<1x16x1xf32>
    %237 = vector.shape_cast %236 : vector<1x16x1xf32> to vector<16x1xf32>
    %238 = vector.broadcast %237 : vector<16x1xf32> to vector<16x9xf32>
    %239 = arith.addf %235, %238 : vector<16x9xf32>
    %cst_253 = arith.constant 0.000000e+00 : f32
    %240 = vector.broadcast %cst_253 : f32 to vector<16x9xf32>
    %241 = arith.maximumf %239, %240 : vector<16x9xf32>
    %c1_254 = arith.constant 1 : index
    %c0_255 = arith.constant 0 : index
    %c0_256 = arith.constant 0 : index
    %242 = vector.load %arg23[%c1_254, %c0_255, %c0_256] : memref<2x16x16xf32, #tpu.memory_space<vmem>>, vector<1x16x16xf32>
    %243 = vector.shape_cast %242 : vector<1x16x16xf32> to vector<16x16xf32>
    %cst_257 = arith.constant dense<0.000000e+00> : vector<16x9xf32>
    %244 = tpu.matmul %243, %241, %cst_257 {dimension_numbers = #tpu.dot_dimension_numbers<[1], [0], [0], [1], [0, 0, 1, 1], [], []>} : vector<16x16xf32>, vector<16x9xf32>, vector<16x9xf32> -> vector<16x9xf32>
    %c1_258 = arith.constant 1 : index
    %c0_259 = arith.constant 0 : index
    %c0_260 = arith.constant 0 : index
    %245 = vector.load %arg24[%c1_258, %c0_259, %c0_260] : memref<2x16x1xf32, #tpu.memory_space<vmem>>, vector<1x16x1xf32>
    %246 = vector.shape_cast %245 : vector<1x16x1xf32> to vector<16x1xf32>
    %247 = vector.broadcast %246 : vector<16x1xf32> to vector<16x9xf32>
    %248 = arith.addf %244, %247 : vector<16x9xf32>
    %249 = arith.addf %222, %248 : vector<16x9xf32>
    %c0_261 = arith.constant 0 : index
    %c8_262 = arith.constant 8 : index
    %250 = vector.load %arg34[%c0_261, %c8_262] : memref<16x40xf32, #tpu.memory_space<vmem>>, vector<16x9xf32>
    tpu.vector_store %arg34[%c0_261, %c8_262], %249 {strides = array<i32>} : memref<16x40xf32, #tpu.memory_space<vmem>>, vector<16x9xf32>,
    %c0_263 = arith.constant 0 : index
    %c8_264 = arith.constant 8 : index
    %251 = vector.load %arg34[%c0_263, %c8_264] : memref<16x40xf32, #tpu.memory_space<vmem>>, vector<16x9xf32>
    %c0_265 = arith.constant 0 : index
    %c0_266 = arith.constant 0 : index
    %252 = vector.load %arg27[%c0_265, %c0_266] : memref<9x1xf32, #tpu.memory_space<vmem>>, vector<9x1xf32>
    %cst_267 = arith.constant dense<0.000000e+00> : vector<16x1xf32>
    %253 = tpu.matmul %251, %252, %cst_267 {dimension_numbers = #tpu.dot_dimension_numbers<[1], [0], [0], [1], [0, 0, 1, 1], [], []>} : vector<16x9xf32>, vector<9x1xf32>, vector<16x1xf32> -> vector<16x1xf32>
    %c0_268 = arith.constant 0 : index
    %c0_269 = arith.constant 0 : index
    %254 = vector.load %arg25[%c0_268, %c0_269] : memref<8x16xf32, #tpu.memory_space<vmem>>, vector<8x16xf32>
    %cst_270 = arith.constant dense<0.000000e+00> : vector<8x1xf32>
    %255 = tpu.matmul %254, %253, %cst_270 {dimension_numbers = #tpu.dot_dimension_numbers<[1], [0], [0], [1], [0, 0, 1, 1], [], []>} : vector<8x16xf32>, vector<16x1xf32>, vector<8x1xf32> -> vector<8x1xf32>
    %c0_271 = arith.constant 0 : index
    %c0_272 = arith.constant 0 : index
    %256 = vector.load %arg26[%c0_271, %c0_272] : memref<8x1xf32, #tpu.memory_space<vmem>>, vector<8x1xf32>
    %257 = arith.addf %255, %256 : vector<8x1xf32>
    %c0_273 = arith.constant 0 : index
    %c0_274 = arith.constant 0 : index
    %c0_275 = arith.constant 0 : index
    %258 = vector.load %arg32[%c0_273, %c0_274, %c0_275] : memref<1x16x1xf32, #tpu.memory_space<vmem>>, vector<1x16x1xf32>
    %259 = vector.shape_cast %258 : vector<1x16x1xf32> to vector<16x1xf32>
    %260 = vector.shape_cast %253 : vector<16x1xf32> to vector<1x16x1xf32>
    tpu.vector_store %arg32[%c0_273, %c0_274, %c0_275], %260 {strides = array<i32>} : memref<1x16x1xf32, #tpu.memory_space<vmem>>, vector<1x16x1xf32>,
    %c0_276 = arith.constant 0 : index
    %c0_277 = arith.constant 0 : index
    %c0_278 = arith.constant 0 : index
    %261 = vector.load %arg33[%c0_276, %c0_277, %c0_278] : memref<1x8x1xf32, #tpu.memory_space<vmem>>, vector<1x8x1xf32>
    %262 = vector.shape_cast %261 : vector<1x8x1xf32> to vector<8x1xf32>
    %263 = vector.shape_cast %257 : vector<8x1xf32> to vector<1x8x1xf32>
    tpu.vector_store %arg33[%c0_276, %c0_277, %c0_278], %263 {strides = array<i32>} : memref<1x8x1xf32, #tpu.memory_space<vmem>>, vector<1x8x1xf32>,
    return
  }
  func.func @transform_0(%arg0: i32) -> (i32, i32, i32) {
    %c0_i32 = arith.constant 0 : i32
    %c0_i32_0 = arith.constant 0 : i32
    %c0_i32_1 = arith.constant 0 : i32
    return %arg0, %c0_i32, %c0_i32_0 : i32, i32, i32
  }
  func.func @transform_1(%arg0: i32) -> (i32, i32) {
    %c0_i32 = arith.constant 0 : i32
    %c0_i32_0 = arith.constant 0 : i32
    %c0_i32_1 = arith.constant 0 : i32
    return %c0_i32, %c0_i32_0 : i32, i32
  }
  func.func @transform_2(%arg0: i32) -> (i32, i32) {
    %c0_i32 = arith.constant 0 : i32
    %c0_i32_0 = arith.constant 0 : i32
    %c0_i32_1 = arith.constant 0 : i32
    return %c0_i32, %c0_i32_0 : i32, i32
  }
  func.func @transform_3(%arg0: i32) -> (i32, i32, i32) {
    %c0_i32 = arith.constant 0 : i32
    %c0_i32_0 = arith.constant 0 : i32
    %c0_i32_1 = arith.constant 0 : i32
    %c0_i32_2 = arith.constant 0 : i32
    return %c0_i32, %c0_i32_0, %c0_i32_1 : i32, i32, i32
  }
  func.func @transform_4(%arg0: i32) -> (i32, i32, i32) {
    %c0_i32 = arith.constant 0 : i32
    %c0_i32_0 = arith.constant 0 : i32
    %c0_i32_1 = arith.constant 0 : i32
    %c0_i32_2 = arith.constant 0 : i32
    return %c0_i32, %c0_i32_0, %c0_i32_1 : i32, i32, i32
  }
  func.func @transform_5(%arg0: i32) -> (i32, i32, i32) {
    %c0_i32 = arith.constant 0 : i32
    %c0_i32_0 = arith.constant 0 : i32
    %c0_i32_1 = arith.constant 0 : i32
    %c0_i32_2 = arith.constant 0 : i32
    return %c0_i32, %c0_i32_0, %c0_i32_1 : i32, i32, i32
  }
  func.func @transform_6(%arg0: i32) -> (i32, i32, i32) {
    %c0_i32 = arith.constant 0 : i32
    %c0_i32_0 = arith.constant 0 : i32
    %c0_i32_1 = arith.constant 0 : i32
    %c0_i32_2 = arith.constant 0 : i32
    return %c0_i32, %c0_i32_0, %c0_i32_1 : i32, i32, i32
  }
  func.func @transform_7(%arg0: i32) -> (i32, i32) {
    %c0_i32 = arith.constant 0 : i32
    %c0_i32_0 = arith.constant 0 : i32
    %c0_i32_1 = arith.constant 0 : i32
    return %c0_i32, %c0_i32_0 : i32, i32
  }
  func.func @transform_8(%arg0: i32) -> (i32, i32) {
    %c0_i32 = arith.constant 0 : i32
    %c0_i32_0 = arith.constant 0 : i32
    %c0_i32_1 = arith.constant 0 : i32
    return %c0_i32, %c0_i32_0 : i32, i32
  }
  func.func @transform_9(%arg0: i32) -> (i32, i32) {
    %c0_i32 = arith.constant 0 : i32
    %c0_i32_0 = arith.constant 0 : i32
    %c0_i32_1 = arith.constant 0 : i32
    return %c0_i32, %c0_i32_0 : i32, i32
  }
  func.func @transform_10(%arg0: i32) -> (i32, i32) {
    %c0_i32 = arith.constant 0 : i32
    %c0_i32_0 = arith.constant 0 : i32
    %c0_i32_1 = arith.constant 0 : i32
    return %c0_i32, %c0_i32_0 : i32, i32
  }
  func.func @transform_11(%arg0: i32) -> (i32, i32, i32) {
    %c0_i32 = arith.constant 0 : i32
    %c0_i32_0 = arith.constant 0 : i32
    %c0_i32_1 = arith.constant 0 : i32
    %c0_i32_2 = arith.constant 0 : i32
    return %c0_i32, %c0_i32_0, %c0_i32_1 : i32, i32, i32
  }
  func.func @transform_12(%arg0: i32) -> (i32, i32, i32) {
    %c0_i32 = arith.constant 0 : i32
    %c0_i32_0 = arith.constant 0 : i32
    %c0_i32_1 = arith.constant 0 : i32
    %c0_i32_2 = arith.constant 0 : i32
    return %c0_i32, %c0_i32_0, %c0_i32_1 : i32, i32, i32
  }
  func.func @transform_13(%arg0: i32) -> (i32, i32, i32) {
    %c0_i32 = arith.constant 0 : i32
    %c0_i32_0 = arith.constant 0 : i32
    %c0_i32_1 = arith.constant 0 : i32
    %c0_i32_2 = arith.constant 0 : i32
    return %c0_i32, %c0_i32_0, %c0_i32_1 : i32, i32, i32
  }
  func.func @transform_14(%arg0: i32) -> (i32, i32, i32) {
    %c0_i32 = arith.constant 0 : i32
    %c0_i32_0 = arith.constant 0 : i32
    %c0_i32_1 = arith.constant 0 : i32
    %c0_i32_2 = arith.constant 0 : i32
    return %c0_i32, %c0_i32_0, %c0_i32_1 : i32, i32, i32
  }
  func.func @transform_15(%arg0: i32) -> (i32, i32) {
    %c0_i32 = arith.constant 0 : i32
    %c0_i32_0 = arith.constant 0 : i32
    %c0_i32_1 = arith.constant 0 : i32
    return %c0_i32, %c0_i32_0 : i32, i32
  }
  func.func @transform_16(%arg0: i32) -> (i32, i32) {
    %c0_i32 = arith.constant 0 : i32
    %c0_i32_0 = arith.constant 0 : i32
    %c0_i32_1 = arith.constant 0 : i32
    return %c0_i32, %c0_i32_0 : i32, i32
  }
  func.func @transform_17(%arg0: i32) -> (i32, i32) {
    %c0_i32 = arith.constant 0 : i32
    %c0_i32_0 = arith.constant 0 : i32
    %c0_i32_1 = arith.constant 0 : i32
    return %c0_i32, %c0_i32_0 : i32, i32
  }
  func.func @transform_18(%arg0: i32) -> (i32, i32) {
    %c0_i32 = arith.constant 0 : i32
    %c0_i32_0 = arith.constant 0 : i32
    %c0_i32_1 = arith.constant 0 : i32
    return %c0_i32, %c0_i32_0 : i32, i32
  }
  func.func @transform_19(%arg0: i32) -> (i32, i32) {
    %c0_i32 = arith.constant 0 : i32
    %c0_i32_0 = arith.constant 0 : i32
    %c0_i32_1 = arith.constant 0 : i32
    return %c0_i32, %c0_i32_0 : i32, i32
  }
  func.func @transform_20(%arg0: i32) -> (i32, i32, i32) {
    %c0_i32 = arith.constant 0 : i32
    %c0_i32_0 = arith.constant 0 : i32
    %c0_i32_1 = arith.constant 0 : i32
    %c0_i32_2 = arith.constant 0 : i32
    return %c0_i32, %c0_i32_0, %c0_i32_1 : i32, i32, i32
  }
  func.func @transform_21(%arg0: i32) -> (i32, i32, i32) {
    %c0_i32 = arith.constant 0 : i32
    %c0_i32_0 = arith.constant 0 : i32
    %c0_i32_1 = arith.constant 0 : i32
    %c0_i32_2 = arith.constant 0 : i32
    return %c0_i32, %c0_i32_0, %c0_i32_1 : i32, i32, i32
  }
  func.func @transform_22(%arg0: i32) -> (i32, i32, i32) {
    %c0_i32 = arith.constant 0 : i32
    %c0_i32_0 = arith.constant 0 : i32
    %c0_i32_1 = arith.constant 0 : i32
    %c0_i32_2 = arith.constant 0 : i32
    return %c0_i32, %c0_i32_0, %c0_i32_1 : i32, i32, i32
  }
  func.func @transform_23(%arg0: i32) -> (i32, i32, i32) {
    %c0_i32 = arith.constant 0 : i32
    %c0_i32_0 = arith.constant 0 : i32
    %c0_i32_1 = arith.constant 0 : i32
    %c0_i32_2 = arith.constant 0 : i32
    return %c0_i32, %c0_i32_0, %c0_i32_1 : i32, i32, i32
  }
  func.func @transform_24(%arg0: i32) -> (i32, i32) {
    %c0_i32 = arith.constant 0 : i32
    %c0_i32_0 = arith.constant 0 : i32
    %c0_i32_1 = arith.constant 0 : i32
    return %c0_i32, %c0_i32_0 : i32, i32
  }
  func.func @transform_25(%arg0: i32) -> (i32, i32) {
    %c0_i32 = arith.constant 0 : i32
    %c0_i32_0 = arith.constant 0 : i32
    %c0_i32_1 = arith.constant 0 : i32
    return %c0_i32, %c0_i32_0 : i32, i32
  }
  func.func @transform_26(%arg0: i32) -> (i32, i32) {
    %c0_i32 = arith.constant 0 : i32
    %c0_i32_0 = arith.constant 0 : i32
    %c0_i32_1 = arith.constant 0 : i32
    return %c0_i32, %c0_i32_0 : i32, i32
  }
  func.func @transform_27(%arg0: i32) -> (i32, i32, i32) {
    %c0_i32 = arith.constant 0 : i32
    %c0_i32_0 = arith.constant 0 : i32
    %c0_i32_1 = arith.constant 0 : i32
    return %arg0, %c0_i32, %c0_i32_0 : i32, i32, i32
  }
  func.func @transform_28(%arg0: i32) -> (i32, i32, i32) {
    %c0_i32 = arith.constant 0 : i32
    %c0_i32_0 = arith.constant 0 : i32
    %c0_i32_1 = arith.constant 0 : i32
    return %arg0, %c0_i32, %c0_i32_0 : i32, i32, i32
  }
  func.func @transform_29(%arg0: i32) -> (i32, i32, i32) {
    %c0_i32 = arith.constant 0 : i32
    %c0_i32_0 = arith.constant 0 : i32
    %c0_i32_1 = arith.constant 0 : i32
    return %arg0, %c0_i32, %c0_i32_0 : i32, i32, i32
  }
  func.func @transform_30(%arg0: i32) -> (i32, i32, i32) {
    %c0_i32 = arith.constant 0 : i32
    %c0_i32_0 = arith.constant 0 : i32
    %c0_i32_1 = arith.constant 0 : i32
    return %arg0, %c0_i32, %c0_i32_0 : i32, i32, i32
  }
  func.func @transform_31(%arg0: i32) -> (i32, i32, i32) {
    %c0_i32 = arith.constant 0 : i32
    %c0_i32_0 = arith.constant 0 : i32
    %c0_i32_1 = arith.constant 0 : i32
    return %arg0, %c0_i32, %c0_i32_0 : i32, i32, i32
  }
  func.func @transform_32(%arg0: i32) -> (i32, i32, i32) {
    %c0_i32 = arith.constant 0 : i32
    %c0_i32_0 = arith.constant 0 : i32
    %c0_i32_1 = arith.constant 0 : i32
    return %arg0, %c0_i32, %c0_i32_0 : i32, i32, i32
  }
}

</mosaic_0001>

<llo_original>
// kernel: hierarch_tcn2_forward.1
$region0: #{hierarch_tcn2_forward.1}
  #allocation0 [shape = 'u32[]', space=smem, size = 0x4, offset = 0x4, fixed_abs, tag = 'smem constant byte address 0x4 - core index']
  #allocation1 [shape = 'u32[144,128]{1,0:T(1,128)}', space=vmem, size = 0x12000, scoped, tag = 'internal scratch']
  #allocation2 [shape = 'f32[16,40]{1,0:T(8,128)}', space=vmem, size = 0x2000, scoped, tag = 'scratch operand']
  %s0 = inlined_call_operand.smem [shape: u32[33], index: -1, kind: input, shape index: {}]
  %s1 = sld [smem:[%s0]]
  %s2 = scalar_lea.smem %s0, 1
  %s3 = sld [smem:[%s2]]
  %s4 = scalar_lea.smem %s0, 2
  %s5 = sld [smem:[%s4]]
  %s6 = scalar_lea.smem %s0, 3
  %s7 = sld [smem:[%s6]]
  %s8 = scalar_lea.smem %s0, 4
  %s9 = sld [smem:[%s8]]
  %s10 = scalar_lea.smem %s0, 5
  %s11 = sld [smem:[%s10]]
  %s12 = scalar_lea.smem %s0, 6
  %s13 = sld [smem:[%s12]]
  %s14 = scalar_lea.smem %s0, 7
  %s15 = sld [smem:[%s14]]
  %s16 = scalar_lea.smem %s0, 8
  %s17 = sld [smem:[%s16]]
  %s18 = scalar_lea.smem %s0, 9
  %s19 = sld [smem:[%s18]]
  %s20 = scalar_lea.smem %s0, 10
  %s21 = sld [smem:[%s20]]
  %s22 = scalar_lea.smem %s0, 11
  %s23 = sld [smem:[%s22]]
  %s24 = scalar_lea.smem %s0, 12
  %s25 = sld [smem:[%s24]]
  %s26 = scalar_lea.smem %s0, 13
  %s27 = sld [smem:[%s26]]
  %s28 = scalar_lea.smem %s0, 14
  %s29 = sld [smem:[%s28]]
  %s30 = scalar_lea.smem %s0, 15
  %s31 = sld [smem:[%s30]]
  %s32 = scalar_lea.smem %s0, 16
  %s33 = sld [smem:[%s32]]
  %s34 = scalar_lea.smem %s0, 17
  %s35 = sld [smem:[%s34]]
  %s36 = scalar_lea.smem %s0, 18
  %s37 = sld [smem:[%s36]]
  %s38 = scalar_lea.smem %s0, 19
  %s39 = sld [smem:[%s38]]
  %s40 = scalar_lea.smem %s0, 20
  %s41 = sld [smem:[%s40]]
  %s42 = scalar_lea.smem %s0, 21
  %s43 = sld [smem:[%s42]]
  %s44 = scalar_lea.smem %s0, 22
  %s45 = sld [smem:[%s44]]
  %s46 = scalar_lea.smem %s0, 23
  %s47 = sld [smem:[%s46]]
  %s48 = scalar_lea.smem %s0, 24
  %s49 = sld [smem:[%s48]]
  %s50 = scalar_lea.smem %s0, 25
  %s51 = sld [smem:[%s50]]
  %s52 = scalar_lea.smem %s0, 26
  %s53 = sld [smem:[%s52]]
  %s54 = scalar_lea.smem %s0, 27
  %s55 = sld [smem:[%s54]]
  %s56 = scalar_lea.smem %s0, 28
  %s57 = sld [smem:[%s56]]
  %s58 = scalar_lea.smem %s0, 29
  %s59 = sld [smem:[%s58]]
  %s60 = scalar_lea.smem %s0, 30
  %s61 = sld [smem:[%s60]]
  %s62 = scalar_lea.smem %s0, 31
  %s63 = sld [smem:[%s62]]
  %s64 = scalar_lea.smem %s0, 32
  %s65 = sld [smem:[%s64]]
  %66 = xla_tuple %s55, %s57, %s59, %s61, %s63, %s65
  %s67 = sld [smem:[#allocation0]]
  $region201: #{hierarch_tcn2_forward.1} parent=0
    _
  %s69 = ssub.s32 1, %s67
  %s70 = scalar_select 0, %s69, %s67
  $region1: #{hierarch_tcn2_forward.1} parent=0
    #allocation3 [shape = 'u8[8192]{0}', space=vmem, size = 0x2000, scoped, tag = 'input window, operand 1, single buffered']
    #allocation4 [shape = 's32[2]{0}', space=sflag, size = 0x8, scoped, tag = 'scoped memory for hierarch_tcn2_forward.1']
    #allocation5 [shape = 's32[2]{0}', space=sflag, size = 0x8, scoped, tag = 'scoped memory for hierarch_tcn2_forward.1']
    #allocation6 [shape = 'u8[4096]{0}', space=vmem, size = 0x1000, scoped, tag = 'input window, operand 7, single buffered']
    #allocation7 [shape = 's32[1]{0}', space=sflag, size = 0x4, scoped, tag = 'scoped memory for hierarch_tcn2_forward.1']
    #allocation8 [shape = 'u8[4096]{0}', space=vmem, size = 0x1000, scoped, tag = 'input window, operand 15, single buffered']
    #allocation9 [shape = 'u8[16384]{0}', space=vmem, size = 0x4000, scoped, tag = 'input window, operand 22, single buffered']
    #allocation10 [shape = 's32[1]{0}', space=sflag, size = 0x4, scoped, tag = 'scoped memory for hierarch_tcn2_forward.1']
    #allocation11 [shape = 'u8[4096]{0}', space=vmem, size = 0x1000, scoped, tag = 'input window, operand 24, single buffered']
    #allocation12 [shape = 'u8[16384]{0}', space=vmem, size = 0x4000, scoped, tag = 'output window, operand 0']
    #allocation13 [shape = 'u8[8192]{0}', space=vmem, size = 0x2000, scoped, tag = 'output window, operand 1']
    #allocation14 [shape = 's32[2]{0}', space=sflag, size = 0x8, scoped, tag = 'scoped memory for hierarch_tcn2_forward.1']
    %71 = vsyncpa [#allocation4], 0
    %72 = vsyncpa [#allocation7], 0
    %73 = vsyncpa [#allocation10], 0
    %74 = vsyncpa [#allocation5], 0
    %s75 = scalar_lea.sflag [#allocation5], 1
    %76 = vsyncpa %s75, 0
    %77 = vsyncpa [#allocation14], 0
    %s78 = scalar_lea.sflag [#allocation14], 1
    %79 = vsyncpa %s78, 0
    loop: start=0, step=1, limit=4
    $region2: #{hierarch_tcn2_forward.1} parent=1 // loop_pre_header
      _
    $region3: #{hierarch_tcn2_forward.1} parent=1 // loop_header
      %s81 = sphi 0, %s85
      %p82 = scmp.ge.s32.totalorder %s81, 4
      %s91 = sphi 0, %s93
      %s94 = sphi 0, %s91
      %s95 = sphi 0, %s94
      %s111 = sphi 0, %s95
      %s115 = sphi 0, %s115
      %s117 = sphi 0, %s115
      %s118 = sphi 0, %s117
      %s132 = sphi 0, %s118
      %s136 = sphi 0, %s136
      %s138 = sphi 0, %s136
      %s139 = sphi 0, %s138
      %s153 = sphi 0, %s139
      %s157 = sphi 0, %s157
      %s159 = sphi 0, %s157
      %s160 = sphi 0, %s159
      %s174 = sphi 0, %s160
      %s178 = sphi 0, %s178
      %s180 = sphi 0, %s178
      %s181 = sphi 0, %s180
      %s195 = sphi 0, %s181
      %s199 = sphi 0, %s199
      %s201 = sphi 0, %s199
      %s202 = sphi 0, %s201
      %s216 = sphi 0, %s202
      %s220 = sphi 0, %s220
      %s222 = sphi 0, %s220
      %s223 = sphi 0, %s222
      %s237 = sphi 0, %s223
      %s241 = sphi 0, %s241
      %s243 = sphi 0, %s241
      %s244 = sphi 0, %s243
      %s258 = sphi 0, %s244
      %s262 = sphi 0, %s262
      %s264 = sphi 0, %s262
      %s265 = sphi 0, %s264
      %s279 = sphi 0, %s265
      %s283 = sphi 0, %s283
      %s285 = sphi 0, %s283
      %s286 = sphi 0, %s285
      %s300 = sphi 0, %s286
      %s304 = sphi 0, %s304
      %s306 = sphi 0, %s304
      %s307 = sphi 0, %s306
      %s321 = sphi 0, %s307
      %s325 = sphi 0, %s325
      %s327 = sphi 0, %s325
      %s328 = sphi 0, %s327
      %s342 = sphi 0, %s328
      %s346 = sphi 0, %s346
      %s348 = sphi 0, %s346
      %s349 = sphi 0, %s348
      %s363 = sphi 0, %s349
      %s367 = sphi 0, %s367
      %s369 = sphi 0, %s367
      %s370 = sphi 0, %s369
      %s384 = sphi 0, %s370
      %s388 = sphi 0, %s388
      %s390 = sphi 0, %s388
      %s391 = sphi 0, %s390
      %s405 = sphi 0, %s391
      %s409 = sphi 0, %s409
      %s411 = sphi 0, %s409
      %s412 = sphi 0, %s411
      %s426 = sphi 0, %s412
      %s430 = sphi 0, %s430
      %s432 = sphi 0, %s430
      %s433 = sphi 0, %s432
      %s447 = sphi 0, %s433
      %s451 = sphi 0, %s451
      %s453 = sphi 0, %s451
      %s454 = sphi 0, %s453
      %s468 = sphi 0, %s454
      %s472 = sphi 0, %s472
      %s474 = sphi 0, %s472
      %s475 = sphi 0, %s474
      %s489 = sphi 0, %s475
      %s493 = sphi 0, %s493
      %s495 = sphi 0, %s493
      %s496 = sphi 0, %s495
      %s510 = sphi 0, %s496
      %s514 = sphi 0, %s514
      %s516 = sphi 0, %s514
      %s517 = sphi 0, %s516
      %s531 = sphi 0, %s517
      %s535 = sphi 0, %s535
      %s537 = sphi 0, %s535
      %s538 = sphi 0, %s537
      %s552 = sphi 0, %s538
      %s556 = sphi 0, %s556
      %s558 = sphi 0, %s556
      %s559 = sphi 0, %s558
      %s573 = sphi 0, %s559
      %s577 = sphi 0, %s577
      %s579 = sphi 0, %s577
      %s580 = sphi 0, %s579
      %s594 = sphi 0, %s580
      %s598 = sphi 0, %s598
      %s600 = sphi 0, %s598
      %s601 = sphi 0, %s600
      %s615 = sphi 0, %s601
      %s619 = sphi 0, %s619
      %s621 = sphi 0, %s619
      %s622 = sphi 0, %s621
      %s636 = sphi 0, %s622
      %s640 = sphi 0, %s640
      %s642 = sphi 0, %s640
      %s643 = sphi 0, %s642
      %s657 = sphi 0, %s643
      %s663 = sphi 0, %s665
      %s666 = sphi 0, %s663
      %s667 = sphi 0, %s666
      %s683 = sphi 0, %s667
      %s689 = sphi 0, %s691
      %s692 = sphi 0, %s689
      %s693 = sphi 0, %s692
      %s709 = sphi 0, %s693
      %s715 = sphi 0, %s717
      %s718 = sphi 0, %s715
      %s719 = sphi 0, %s718
      %s735 = sphi 0, %s719
      %s741 = sphi 0, %s743
      %s744 = sphi 0, %s741
      %s745 = sphi 0, %s744
      %s761 = sphi 0, %s745
      %s767 = sphi 0, %s769
      %s770 = sphi 0, %s767
      %s771 = sphi 0, %s770
      %s787 = sphi 0, %s771
      %s793 = sphi 0, %s795
      %s796 = sphi 0, %s793
      %s797 = sphi 0, %s796
      %s813 = sphi 0, %s797
    $region4: #{hierarch_tcn2_forward.1} parent=1 // loop_header_branch
      %84 = sbr.rel (%p82) target = $region8
    $region5: #{hierarch_tcn2_forward.1} parent=1 // loop_body
      %s86 = ssub.s32 %s81, 1
      %s87 = ssub.s32 %s81, 2
      %s88 = sadd.s32 %s81, 1
      %s89 = ssub.s32 %s81, %s88
      %p90 = scmp.eq.s32.totalorder %s89, 0
      %s92 = sadd.s32 %s91, 1
      %s93 = scalar_select %p90, %s91, %s92
      %p96 = pneg %p90
      %p97 = scmp.eq.s32.totalorder %s81, 1
      %p98 = por %p96, %p97
      %p99 = scmp.ne.s32.totalorder %s91, %s94
      %p100 = scmp.eq.s32.totalorder %s81, 0
      %p101 = por %p99, %p100
      %p102 = scmp.ne.s32.totalorder %s91, %s94
      %p103 = scmp.eq.s32.totalorder %s86, 1
      %p104 = por %p102, %p103
      %p105 = scmp.ne.s32.totalorder %s94, %s95
      %p106 = scmp.eq.s32.totalorder %s86, 0
      %p107 = por %p105, %p106
      %p108 = scmp.ne.s32.totalorder %s94, %s95
      %p109 = scmp.eq.s32.totalorder %s87, 1
      %p110 = por %p108, %p109
      %p112 = scmp.ne.s32.totalorder %s95, %s111
      %p113 = scmp.eq.s32.totalorder %s87, 0
      %p114 = por %p112, %p113
      %s116 = sadd.s32 %s115, 1
      %p119 = scmp.eq.s32.totalorder %s81, 1
      %p120 = scmp.ne.s32.totalorder %s115, %s117
      %p121 = scmp.eq.s32.totalorder %s81, 0
      %p122 = por %p120, %p121
      %p123 = scmp.ne.s32.totalorder %s115, %s117
      %p124 = scmp.eq.s32.totalorder %s86, 1
      %p125 = por %p123, %p124
      %p126 = scmp.ne.s32.totalorder %s117, %s118
      %p127 = scmp.eq.s32.totalorder %s86, 0
      %p128 = por %p126, %p127
      %p129 = scmp.ne.s32.totalorder %s117, %s118
      %p130 = scmp.eq.s32.totalorder %s87, 1
      %p131 = por %p129, %p130
      %p133 = scmp.ne.s32.totalorder %s118, %s132
      %p134 = scmp.eq.s32.totalorder %s87, 0
      %p135 = por %p133, %p134
      %s137 = sadd.s32 %s136, 1
      %p140 = scmp.eq.s32.totalorder %s81, 1
      %p141 = scmp.ne.s32.totalorder %s136, %s138
      %p142 = scmp.eq.s32.totalorder %s81, 0
      %p143 = por %p141, %p142
      %p144 = scmp.ne.s32.totalorder %s136, %s138
      %p145 = scmp.eq.s32.totalorder %s86, 1
      %p146 = por %p144, %p145
      %p147 = scmp.ne.s32.totalorder %s138, %s139
      %p148 = scmp.eq.s32.totalorder %s86, 0
      %p149 = por %p147, %p148
      %p150 = scmp.ne.s32.totalorder %s138, %s139
      %p151 = scmp.eq.s32.totalorder %s87, 1
      %p152 = por %p150, %p151
      %p154 = scmp.ne.s32.totalorder %s139, %s153
      %p155 = scmp.eq.s32.totalorder %s87, 0
      %p156 = por %p154, %p155
      %s158 = sadd.s32 %s157, 1
      %p161 = scmp.eq.s32.totalorder %s81, 1
      %p162 = scmp.ne.s32.totalorder %s157, %s159
      %p163 = scmp.eq.s32.totalorder %s81, 0
      %p164 = por %p162, %p163
      %p165 = scmp.ne.s32.totalorder %s157, %s159
      %p166 = scmp.eq.s32.totalorder %s86, 1
      %p167 = por %p165, %p166
      %p168 = scmp.ne.s32.totalorder %s159, %s160
      %p169 = scmp.eq.s32.totalorder %s86, 0
      %p170 = por %p168, %p169
      %p171 = scmp.ne.s32.totalorder %s159, %s160
      %p172 = scmp.eq.s32.totalorder %s87, 1
      %p173 = por %p171, %p172
      %p175 = scmp.ne.s32.totalorder %s160, %s174
      %p176 = scmp.eq.s32.totalorder %s87, 0
      %p177 = por %p175, %p176
      %s179 = sadd.s32 %s178, 1
      %p182 = scmp.eq.s32.totalorder %s81, 1
      %p183 = scmp.ne.s32.totalorder %s178, %s180
      %p184 = scmp.eq.s32.totalorder %s81, 0
      %p185 = por %p183, %p184
      %p186 = scmp.ne.s32.totalorder %s178, %s180
      %p187 = scmp.eq.s32.totalorder %s86, 1
      %p188 = por %p186, %p187
      %p189 = scmp.ne.s32.totalorder %s180, %s181
      %p190 = scmp.eq.s32.totalorder %s86, 0
      %p191 = por %p189, %p190
      %p192 = scmp.ne.s32.totalorder %s180, %s181
      %p193 = scmp.eq.s32.totalorder %s87, 1
      %p194 = por %p192, %p193
      %p196 = scmp.ne.s32.totalorder %s181, %s195
      %p197 = scmp.eq.s32.totalorder %s87, 0
      %p198 = por %p196, %p197
      %s200 = sadd.s32 %s199, 1
      %p203 = scmp.eq.s32.totalorder %s81, 1
      %p204 = scmp.ne.s32.totalorder %s199, %s201
      %p205 = scmp.eq.s32.totalorder %s81, 0
      %p206 = por %p204, %p205
      %p207 = scmp.ne.s32.totalorder %s199, %s201
      %p208 = scmp.eq.s32.totalorder %s86, 1
      %p209 = por %p207, %p208
      %p210 = scmp.ne.s32.totalorder %s201, %s202
      %p211 = scmp.eq.s32.totalorder %s86, 0
      %p212 = por %p210, %p211
      %p213 = scmp.ne.s32.totalorder %s201, %s202
      %p214 = scmp.eq.s32.totalorder %s87, 1
      %p215 = por %p213, %p214
      %p217 = scmp.ne.s32.totalorder %s202, %s216
      %p218 = scmp.eq.s32.totalorder %s87, 0
      %p219 = por %p217, %p218
      %s221 = sadd.s32 %s220, 1
      %p224 = scmp.eq.s32.totalorder %s81, 1
      %p225 = scmp.ne.s32.totalorder %s220, %s222
      %p226 = scmp.eq.s32.totalorder %s81, 0
      %p227 = por %p225, %p226
      %p228 = scmp.ne.s32.totalorder %s220, %s222
      %p229 = scmp.eq.s32.totalorder %s86, 1
      %p230 = por %p228, %p229
      %p231 = scmp.ne.s32.totalorder %s222, %s223
      %p232 = scmp.eq.s32.totalorder %s86, 0
      %p233 = por %p231, %p232
      %p234 = scmp.ne.s32.totalorder %s222, %s223
      %p235 = scmp.eq.s32.totalorder %s87, 1
      %p236 = por %p234, %p235
      %p238 = scmp.ne.s32.totalorder %s223, %s237
      %p239 = scmp.eq.s32.totalorder %s87, 0
      %p240 = por %p238, %p239
      %s242 = sadd.s32 %s241, 1
      %p245 = scmp.eq.s32.totalorder %s81, 1
      %p246 = scmp.ne.s32.totalorder %s241, %s243
      %p247 = scmp.eq.s32.totalorder %s81, 0
      %p248 = por %p246, %p247
      %p249 = scmp.ne.s32.totalorder %s241, %s243
      %p250 = scmp.eq.s32.totalorder %s86, 1
      %p251 = por %p249, %p250
      %p252 = scmp.ne.s32.totalorder %s243, %s244
      %p253 = scmp.eq.s32.totalorder %s86, 0
      %p254 = por %p252, %p253
      %p255 = scmp.ne.s32.totalorder %s243, %s244
      %p256 = scmp.eq.s32.totalorder %s87, 1
      %p257 = por %p255, %p256
      %p259 = scmp.ne.s32.totalorder %s244, %s258
      %p260 = scmp.eq.s32.totalorder %s87, 0
      %p261 = por %p259, %p260
      %s263 = sadd.s32 %s262, 1
      %p266 = scmp.eq.s32.totalorder %s81, 1
      %p267 = scmp.ne.s32.totalorder %s262, %s264
      %p268 = scmp.eq.s32.totalorder %s81, 0
      %p269 = por %p267, %p268
      %p270 = scmp.ne.s32.totalorder %s262, %s264
      %p271 = scmp.eq.s32.totalorder %s86, 1
      %p272 = por %p270, %p271
      %p273 = scmp.ne.s32.totalorder %s264, %s265
      %p274 = scmp.eq.s32.totalorder %s86, 0
      %p275 = por %p273, %p274
      %p276 = scmp.ne.s32.totalorder %s264, %s265
      %p277 = scmp.eq.s32.totalorder %s87, 1
      %p278 = por %p276, %p277
      %p280 = scmp.ne.s32.totalorder %s265, %s279
      %p281 = scmp.eq.s32.totalorder %s87, 0
      %p282 = por %p280, %p281
      %s284 = sadd.s32 %s283, 1
      %p287 = scmp.eq.s32.totalorder %s81, 1
      %p288 = scmp.ne.s32.totalorder %s283, %s285
      %p289 = scmp.eq.s32.totalorder %s81, 0
      %p290 = por %p288, %p289
      %p291 = scmp.ne.s32.totalorder %s283, %s285
      %p292 = scmp.eq.s32.totalorder %s86, 1
      %p293 = por %p291, %p292
      %p294 = scmp.ne.s32.totalorder %s285, %s286
      %p295 = scmp.eq.s32.totalorder %s86, 0
      %p296 = por %p294, %p295
      %p297 = scmp.ne.s32.totalorder %s285, %s286
      %p298 = scmp.eq.s32.totalorder %s87, 1
      %p299 = por %p297, %p298
      %p301 = scmp.ne.s32.totalorder %s286, %s300
      %p302 = scmp.eq.s32.totalorder %s87, 0
      %p303 = por %p301, %p302
      %s305 = sadd.s32 %s304, 1
      %p308 = scmp.eq.s32.totalorder %s81, 1
      %p309 = scmp.ne.s32.totalorder %s304, %s306
      %p310 = scmp.eq.s32.totalorder %s81, 0
      %p311 = por %p309, %p310
      %p312 = scmp.ne.s32.totalorder %s304, %s306
      %p313 = scmp.eq.s32.totalorder %s86, 1
      %p314 = por %p312, %p313
      %p315 = scmp.ne.s32.totalorder %s306, %s307
      %p316 = scmp.eq.s32.totalorder %s86, 0
      %p317 = por %p315, %p316
      %p318 = scmp.ne.s32.totalorder %s306, %s307
      %p319 = scmp.eq.s32.totalorder %s87, 1
      %p320 = por %p318, %p319
      %p322 = scmp.ne.s32.totalorder %s307, %s321
      %p323 = scmp.eq.s32.totalorder %s87, 0
      %p324 = por %p322, %p323
      %s326 = sadd.s32 %s325, 1
      %p329 = scmp.eq.s32.totalorder %s81, 1
      %p330 = scmp.ne.s32.totalorder %s325, %s327
      %p331 = scmp.eq.s32.totalorder %s81, 0
      %p332 = por %p330, %p331
      %p333 = scmp.ne.s32.totalorder %s325, %s327
      %p334 = scmp.eq.s32.totalorder %s86, 1
      %p335 = por %p333, %p334
      %p336 = scmp.ne.s32.totalorder %s327, %s328
      %p337 = scmp.eq.s32.totalorder %s86, 0
      %p338 = por %p336, %p337
      %p339 = scmp.ne.s32.totalorder %s327, %s328
      %p340 = scmp.eq.s32.totalorder %s87, 1
      %p341 = por %p339, %p340
      %p343 = scmp.ne.s32.totalorder %s328, %s342
      %p344 = scmp.eq.s32.totalorder %s87, 0
      %p345 = por %p343, %p344
      %s347 = sadd.s32 %s346, 1
      %p350 = scmp.eq.s32.totalorder %s81, 1
      %p351 = scmp.ne.s32.totalorder %s346, %s348
      %p352 = scmp.eq.s32.totalorder %s81, 0
      %p353 = por %p351, %p352
      %p354 = scmp.ne.s32.totalorder %s346, %s348
      %p355 = scmp.eq.s32.totalorder %s86, 1
      %p356 = por %p354, %p355
      %p357 = scmp.ne.s32.totalorder %s348, %s349
      %p358 = scmp.eq.s32.totalorder %s86, 0
      %p359 = por %p357, %p358
      %p360 = scmp.ne.s32.totalorder %s348, %s349
      %p361 = scmp.eq.s32.totalorder %s87, 1
      %p362 = por %p360, %p361
      %p364 = scmp.ne.s32.totalorder %s349, %s363
      %p365 = scmp.eq.s32.totalorder %s87, 0
      %p366 = por %p364, %p365
      %s368 = sadd.s32 %s367, 1
      %p371 = scmp.eq.s32.totalorder %s81, 1
      %p372 = scmp.ne.s32.totalorder %s367, %s369
      %p373 = scmp.eq.s32.totalorder %s81, 0
      %p374 = por %p372, %p373
      %p375 = scmp.ne.s32.totalorder %s367, %s369
      %p376 = scmp.eq.s32.totalorder %s86, 1
      %p377 = por %p375, %p376
      %p378 = scmp.ne.s32.totalorder %s369, %s370
      %p379 = scmp.eq.s32.totalorder %s86, 0
      %p380 = por %p378, %p379
      %p381 = scmp.ne.s32.totalorder %s369, %s370
      %p382 = scmp.eq.s32.totalorder %s87, 1
      %p383 = por %p381, %p382
      %p385 = scmp.ne.s32.totalorder %s370, %s384
      %p386 = scmp.eq.s32.totalorder %s87, 0
      %p387 = por %p385, %p386
      %s389 = sadd.s32 %s388, 1
      %p392 = scmp.eq.s32.totalorder %s81, 1
      %p393 = scmp.ne.s32.totalorder %s388, %s390
      %p394 = scmp.eq.s32.totalorder %s81, 0
      %p395 = por %p393, %p394
      %p396 = scmp.ne.s32.totalorder %s388, %s390
      %p397 = scmp.eq.s32.totalorder %s86, 1
      %p398 = por %p396, %p397
      %p399 = scmp.ne.s32.totalorder %s390, %s391
      %p400 = scmp.eq.s32.totalorder %s86, 0
      %p401 = por %p399, %p400
      %p402 = scmp.ne.s32.totalorder %s390, %s391
      %p403 = scmp.eq.s32.totalorder %s87, 1
      %p404 = por %p402, %p403
      %p406 = scmp.ne.s32.totalorder %s391, %s405
      %p407 = scmp.eq.s32.totalorder %s87, 0
      %p408 = por %p406, %p407
      %s410 = sadd.s32 %s409, 1
      %p413 = scmp.eq.s32.totalorder %s81, 1
      %p414 = scmp.ne.s32.totalorder %s409, %s411
      %p415 = scmp.eq.s32.totalorder %s81, 0
      %p416 = por %p414, %p415
      %p417 = scmp.ne.s32.totalorder %s409, %s411
      %p418 = scmp.eq.s32.totalorder %s86, 1
      %p419 = por %p417, %p418
      %p420 = scmp.ne.s32.totalorder %s411, %s412
      %p421 = scmp.eq.s32.totalorder %s86, 0
      %p422 = por %p420, %p421
      %p423 = scmp.ne.s32.totalorder %s411, %s412
      %p424 = scmp.eq.s32.totalorder %s87, 1
      %p425 = por %p423, %p424
      %p427 = scmp.ne.s32.totalorder %s412, %s426
      %p428 = scmp.eq.s32.totalorder %s87, 0
      %p429 = por %p427, %p428
      %s431 = sadd.s32 %s430, 1
      %p434 = scmp.eq.s32.totalorder %s81, 1
      %p435 = scmp.ne.s32.totalorder %s430, %s432
      %p436 = scmp.eq.s32.totalorder %s81, 0
      %p437 = por %p435, %p436
      %p438 = scmp.ne.s32.totalorder %s430, %s432
      %p439 = scmp.eq.s32.totalorder %s86, 1
      %p440 = por %p438, %p439
      %p441 = scmp.ne.s32.totalorder %s432, %s433
      %p442 = scmp.eq.s32.totalorder %s86, 0
      %p443 = por %p441, %p442
      %p444 = scmp.ne.s32.totalorder %s432, %s433
      %p445 = scmp.eq.s32.totalorder %s87, 1
      %p446 = por %p444, %p445
      %p448 = scmp.ne.s32.totalorder %s433, %s447
      %p449 = scmp.eq.s32.totalorder %s87, 0
      %p450 = por %p448, %p449
      %s452 = sadd.s32 %s451, 1
      %p455 = scmp.eq.s32.totalorder %s81, 1
      %p456 = scmp.ne.s32.totalorder %s451, %s453
      %p457 = scmp.eq.s32.totalorder %s81, 0
      %p458 = por %p456, %p457
      %p459 = scmp.ne.s32.totalorder %s451, %s453
      %p460 = scmp.eq.s32.totalorder %s86, 1
      %p461 = por %p459, %p460
      %p462 = scmp.ne.s32.totalorder %s453, %s454
      %p463 = scmp.eq.s32.totalorder %s86, 0
      %p464 = por %p462, %p463
      %p465 = scmp.ne.s32.totalorder %s453, %s454
      %p466 = scmp.eq.s32.totalorder %s87, 1
      %p467 = por %p465, %p466
      %p469 = scmp.ne.s32.totalorder %s454, %s468
      %p470 = scmp.eq.s32.totalorder %s87, 0
      %p471 = por %p469, %p470
      %s473 = sadd.s32 %s472, 1
      %p476 = scmp.eq.s32.totalorder %s81, 1
      %p477 = scmp.ne.s32.totalorder %s472, %s474
      %p478 = scmp.eq.s32.totalorder %s81, 0
      %p479 = por %p477, %p478
      %p480 = scmp.ne.s32.totalorder %s472, %s474
      %p481 = scmp.eq.s32.totalorder %s86, 1
      %p482 = por %p480, %p481
      %p483 = scmp.ne.s32.totalorder %s474, %s475
      %p484 = scmp.eq.s32.totalorder %s86, 0
      %p485 = por %p483, %p484
      %p486 = scmp.ne.s32.totalorder %s474, %s475
      %p487 = scmp.eq.s32.totalorder %s87, 1
      %p488 = por %p486, %p487
      %p490 = scmp.ne.s32.totalorder %s475, %s489
      %p491 = scmp.eq.s32.totalorder %s87, 0
      %p492 = por %p490, %p491
      %s494 = sadd.s32 %s493, 1
      %p497 = scmp.eq.s32.totalorder %s81, 1
      %p498 = scmp.ne.s32.totalorder %s493, %s495
      %p499 = scmp.eq.s32.totalorder %s81, 0
      %p500 = por %p498, %p499
      %p501 = scmp.ne.s32.totalorder %s493, %s495
      %p502 = scmp.eq.s32.totalorder %s86, 1
      %p503 = por %p501, %p502
      %p504 = scmp.ne.s32.totalorder %s495, %s496
      %p505 = scmp.eq.s32.totalorder %s86, 0
      %p506 = por %p504, %p505
      %p507 = scmp.ne.s32.totalorder %s495, %s496
      %p508 = scmp.eq.s32.totalorder %s87, 1
      %p509 = por %p507, %p508
      %p511 = scmp.ne.s32.totalorder %s496, %s510
      %p512 = scmp.eq.s32.totalorder %s87, 0
      %p513 = por %p511, %p512
      %s515 = sadd.s32 %s514, 1
      %p518 = scmp.eq.s32.totalorder %s81, 1
      %p519 = scmp.ne.s32.totalorder %s514, %s516
      %p520 = scmp.eq.s32.totalorder %s81, 0
      %p521 = por %p519, %p520
      %p522 = scmp.ne.s32.totalorder %s514, %s516
      %p523 = scmp.eq.s32.totalorder %s86, 1
      %p524 = por %p522, %p523
      %p525 = scmp.ne.s32.totalorder %s516, %s517
      %p526 = scmp.eq.s32.totalorder %s86, 0
      %p527 = por %p525, %p526
      %p528 = scmp.ne.s32.totalorder %s516, %s517
      %p529 = scmp.eq.s32.totalorder %s87, 1
      %p530 = por %p528, %p529
      %p532 = scmp.ne.s32.totalorder %s517, %s531
      %p533 = scmp.eq.s32.totalorder %s87, 0
      %p534 = por %p532, %p533
      %s536 = sadd.s32 %s535, 1
      %p539 = scmp.eq.s32.totalorder %s81, 1
      %p540 = scmp.ne.s32.totalorder %s535, %s537
      %p541 = scmp.eq.s32.totalorder %s81, 0
      %p542 = por %p540, %p541
      %p543 = scmp.ne.s32.totalorder %s535, %s537
      %p544 = scmp.eq.s32.totalorder %s86, 1
      %p545 = por %p543, %p544
      %p546 = scmp.ne.s32.totalorder %s537, %s538
      %p547 = scmp.eq.s32.totalorder %s86, 0
      %p548 = por %p546, %p547
      %p549 = scmp.ne.s32.totalorder %s537, %s538
      %p550 = scmp.eq.s32.totalorder %s87, 1
      %p551 = por %p549, %p550
      %p553 = scmp.ne.s32.totalorder %s538, %s552
      %p554 = scmp.eq.s32.totalorder %s87, 0
      %p555 = por %p553, %p554
      %s557 = sadd.s32 %s556, 1
      %p560 = scmp.eq.s32.totalorder %s81, 1
      %p561 = scmp.ne.s32.totalorder %s556, %s558
      %p562 = scmp.eq.s32.totalorder %s81, 0
      %p563 = por %p561, %p562
      %p564 = scmp.ne.s32.totalorder %s556, %s558
      %p565 = scmp.eq.s32.totalorder %s86, 1
      %p566 = por %p564, %p565
      %p567 = scmp.ne.s32.totalorder %s558, %s559
      %p568 = scmp.eq.s32.totalorder %s86, 0
      %p569 = por %p567, %p568
      %p570 = scmp.ne.s32.totalorder %s558, %s559
      %p571 = scmp.eq.s32.totalorder %s87, 1
      %p572 = por %p570, %p571
      %p574 = scmp.ne.s32.totalorder %s559, %s573
      %p575 = scmp.eq.s32.totalorder %s87, 0
      %p576 = por %p574, %p575
      %s578 = sadd.s32 %s577, 1
      %p581 = scmp.eq.s32.totalorder %s81, 1
      %p582 = scmp.ne.s32.totalorder %s577, %s579
      %p583 = scmp.eq.s32.totalorder %s81, 0
      %p584 = por %p582, %p583
      %p585 = scmp.ne.s32.totalorder %s577, %s579
      %p586 = scmp.eq.s32.totalorder %s86, 1
      %p587 = por %p585, %p586
      %p588 = scmp.ne.s32.totalorder %s579, %s580
      %p589 = scmp.eq.s32.totalorder %s86, 0
      %p590 = por %p588, %p589
      %p591 = scmp.ne.s32.totalorder %s579, %s580
      %p592 = scmp.eq.s32.totalorder %s87, 1
      %p593 = por %p591, %p592
      %p595 = scmp.ne.s32.totalorder %s580, %s594
      %p596 = scmp.eq.s32.totalorder %s87, 0
      %p597 = por %p595, %p596
      %s599 = sadd.s32 %s598, 1
      %p602 = scmp.eq.s32.totalorder %s81, 1
      %p603 = scmp.ne.s32.totalorder %s598, %s600
      %p604 = scmp.eq.s32.totalorder %s81, 0
      %p605 = por %p603, %p604
      %p606 = scmp.ne.s32.totalorder %s598, %s600
      %p607 = scmp.eq.s32.totalorder %s86, 1
      %p608 = por %p606, %p607
      %p609 = scmp.ne.s32.totalorder %s600, %s601
      %p610 = scmp.eq.s32.totalorder %s86, 0
      %p611 = por %p609, %p610
      %p612 = scmp.ne.s32.totalorder %s600, %s601
      %p613 = scmp.eq.s32.totalorder %s87, 1
      %p614 = por %p612, %p613
      %p616 = scmp.ne.s32.totalorder %s601, %s615
      %p617 = scmp.eq.s32.totalorder %s87, 0
      %p618 = por %p616, %p617
      %s620 = sadd.s32 %s619, 1
      %p623 = scmp.eq.s32.totalorder %s81, 1
      %p624 = scmp.ne.s32.totalorder %s619, %s621
      %p625 = scmp.eq.s32.totalorder %s81, 0
      %p626 = por %p624, %p625
      %p627 = scmp.ne.s32.totalorder %s619, %s621
      %p628 = scmp.eq.s32.totalorder %s86, 1
      %p629 = por %p627, %p628
      %p630 = scmp.ne.s32.totalorder %s621, %s622
      %p631 = scmp.eq.s32.totalorder %s86, 0
      %p632 = por %p630, %p631
      %p633 = scmp.ne.s32.totalorder %s621, %s622
      %p634 = scmp.eq.s32.totalorder %s87, 1
      %p635 = por %p633, %p634
      %p637 = scmp.ne.s32.totalorder %s622, %s636
      %p638 = scmp.eq.s32.totalorder %s87, 0
      %p639 = por %p637, %p638
      %s641 = sadd.s32 %s640, 1
      %p644 = scmp.eq.s32.totalorder %s81, 1
      %p645 = scmp.ne.s32.totalorder %s640, %s642
      %p646 = scmp.eq.s32.totalorder %s81, 0
      %p647 = por %p645, %p646
      %p648 = scmp.ne.s32.totalorder %s640, %s642
      %p649 = scmp.eq.s32.totalorder %s86, 1
      %p650 = por %p648, %p649
      %p651 = scmp.ne.s32.totalorder %s642, %s643
      %p652 = scmp.eq.s32.totalorder %s86, 0
      %p653 = por %p651, %p652
      %p654 = scmp.ne.s32.totalorder %s642, %s643
      %p655 = scmp.eq.s32.totalorder %s87, 1
      %p656 = por %p654, %p655
      %p658 = scmp.ne.s32.totalorder %s643, %s657
      %p659 = scmp.eq.s32.totalorder %s87, 0
      %p660 = por %p658, %p659
      %s661 = ssub.s32 %s81, %s88
      %p662 = scmp.eq.s32.totalorder %s661, 0
      %s664 = sadd.s32 %s663, 1
      %s665 = scalar_select %p662, %s663, %s664
      %p668 = pneg %p662
      %p669 = scmp.eq.s32.totalorder %s81, 1
      %p670 = por %p668, %p669
      %p671 = scmp.ne.s32.totalorder %s663, %s666
      %p672 = scmp.eq.s32.totalorder %s81, 0
      %p673 = por %p671, %p672
      %p674 = scmp.ne.s32.totalorder %s663, %s666
      %p675 = scmp.eq.s32.totalorder %s86, 1
      %p676 = por %p674, %p675
      %p677 = scmp.ne.s32.totalorder %s666, %s667
      %p678 = scmp.eq.s32.totalorder %s86, 0
      %p679 = por %p677, %p678
      %p680 = scmp.ne.s32.totalorder %s666, %s667
      %p681 = scmp.eq.s32.totalorder %s87, 1
      %p682 = por %p680, %p681
      %p684 = scmp.ne.s32.totalorder %s667, %s683
      %p685 = scmp.eq.s32.totalorder %s87, 0
      %p686 = por %p684, %p685
      %s687 = ssub.s32 %s81, %s88
      %p688 = scmp.eq.s32.totalorder %s687, 0
      %s690 = sadd.s32 %s689, 1
      %s691 = scalar_select %p688, %s689, %s690
      %p694 = pneg %p688
      %p695 = scmp.eq.s32.totalorder %s81, 1
      %p696 = por %p694, %p695
      %p697 = scmp.ne.s32.totalorder %s689, %s692
      %p698 = scmp.eq.s32.totalorder %s81, 0
      %p699 = por %p697, %p698
      %p700 = scmp.ne.s32.totalorder %s689, %s692
      %p701 = scmp.eq.s32.totalorder %s86, 1
      %p702 = por %p700, %p701
      %p703 = scmp.ne.s32.totalorder %s692, %s693
      %p704 = scmp.eq.s32.totalorder %s86, 0
      %p705 = por %p703, %p704
      %p706 = scmp.ne.s32.totalorder %s692, %s693
      %p707 = scmp.eq.s32.totalorder %s87, 1
      %p708 = por %p706, %p707
      %p710 = scmp.ne.s32.totalorder %s693, %s709
      %p711 = scmp.eq.s32.totalorder %s87, 0
      %p712 = por %p710, %p711
      %s713 = ssub.s32 %s81, %s88
      %p714 = scmp.eq.s32.totalorder %s713, 0
      %s716 = sadd.s32 %s715, 1
      %s717 = scalar_select %p714, %s715, %s716
      %p720 = pneg %p714
      %p721 = scmp.eq.s32.totalorder %s81, 1
      %p722 = por %p720, %p721
      %p723 = scmp.ne.s32.totalorder %s715, %s718
      %p724 = scmp.eq.s32.totalorder %s81, 0
      %p725 = por %p723, %p724
      %p726 = scmp.ne.s32.totalorder %s715, %s718
      %p727 = scmp.eq.s32.totalorder %s86, 1
      %p728 = por %p726, %p727
      %p729 = scmp.ne.s32.totalorder %s718, %s719
      %p730 = scmp.eq.s32.totalorder %s86, 0
      %p731 = por %p729, %p730
      %p732 = scmp.ne.s32.totalorder %s718, %s719
      %p733 = scmp.eq.s32.totalorder %s87, 1
      %p734 = por %p732, %p733
      %p736 = scmp.ne.s32.totalorder %s719, %s735
      %p737 = scmp.eq.s32.totalorder %s87, 0
      %p738 = por %p736, %p737
      %s739 = ssub.s32 %s81, %s88
      %p740 = scmp.eq.s32.totalorder %s739, 0
      %s742 = sadd.s32 %s741, 1
      %s743 = scalar_select %p740, %s741, %s742
      %p746 = pneg %p740
      %p747 = scmp.eq.s32.totalorder %s81, 1
      %p748 = por %p746, %p747
      %p749 = scmp.ne.s32.totalorder %s741, %s744
      %p750 = scmp.eq.s32.totalorder %s81, 0
      %p751 = por %p749, %p750
      %p752 = scmp.ne.s32.totalorder %s741, %s744
      %p753 = scmp.eq.s32.totalorder %s86, 1
      %p754 = por %p752, %p753
      %p755 = scmp.ne.s32.totalorder %s744, %s745
      %p756 = scmp.eq.s32.totalorder %s86, 0
      %p757 = por %p755, %p756
      %p758 = scmp.ne.s32.totalorder %s744, %s745
      %p759 = scmp.eq.s32.totalorder %s87, 1
      %p760 = por %p758, %p759
      %p762 = scmp.ne.s32.totalorder %s745, %s761
      %p763 = scmp.eq.s32.totalorder %s87, 0
      %p764 = por %p762, %p763
      %s765 = ssub.s32 %s81, %s88
      %p766 = scmp.eq.s32.totalorder %s765, 0
      %s768 = sadd.s32 %s767, 1
      %s769 = scalar_select %p766, %s767, %s768
      %p772 = pneg %p766
      %p773 = scmp.eq.s32.totalorder %s81, 1
      %p774 = por %p772, %p773
      %p775 = scmp.ne.s32.totalorder %s767, %s770
      %p776 = scmp.eq.s32.totalorder %s81, 0
      %p777 = por %p775, %p776
      %p778 = scmp.ne.s32.totalorder %s767, %s770
      %p779 = scmp.eq.s32.totalorder %s86, 1
      %p780 = por %p778, %p779
      %p781 = scmp.ne.s32.totalorder %s770, %s771
      %p782 = scmp.eq.s32.totalorder %s86, 0
      %p783 = por %p781, %p782
      %p784 = scmp.ne.s32.totalorder %s770, %s771
      %p785 = scmp.eq.s32.totalorder %s87, 1
      %p786 = por %p784, %p785
      %p788 = scmp.ne.s32.totalorder %s771, %s787
      %p789 = scmp.eq.s32.totalorder %s87, 0
      %p790 = por %p788, %p789
      %s791 = ssub.s32 %s81, %s88
      %p792 = scmp.eq.s32.totalorder %s791, 0
      %s794 = sadd.s32 %s793, 1
      %s795 = scalar_select %p792, %s793, %s794
      %p798 = pneg %p792
      %p799 = scmp.eq.s32.totalorder %s81, 1
      %p800 = por %p798, %p799
      %p801 = scmp.ne.s32.totalorder %s793, %s796
      %p802 = scmp.eq.s32.totalorder %s81, 0
      %p803 = por %p801, %p802
      %p804 = scmp.ne.s32.totalorder %s793, %s796
      %p805 = scmp.eq.s32.totalorder %s86, 1
      %p806 = por %p804, %p805
      %p807 = scmp.ne.s32.totalorder %s796, %s797
      %p808 = scmp.eq.s32.totalorder %s86, 0
      %p809 = por %p807, %p808
      %p810 = scmp.ne.s32.totalorder %s796, %s797
      %p811 = scmp.eq.s32.totalorder %s87, 1
      %p812 = por %p810, %p811
      %p814 = scmp.ne.s32.totalorder %s797, %s813
      %p815 = scmp.eq.s32.totalorder %s87, 0
      %p816 = por %p814, %p815
      %p817 = scmp.le.s32.totalorder 1, %s81
      %p818 = scmp.lt.s32.totalorder %s81, 3
      %p819 = pnand %p817, %p818
      %p820 = pneg %p819
      // Predicated region
      $region9: #{hierarch_tcn2_forward.1} parent=5 // pred_check
        _
      $region10: #{hierarch_tcn2_forward.1} parent=5 // pred_check_branch
        %822 = sbr.rel (%p819) target = $region12
      $region11: #{hierarch_tcn2_forward.1} parent=5 // pred_region
        %s823 = ssub.s32 %s81, 1
        // Predicated region
        $region13: #{hierarch_tcn2_forward.1} parent=11 // pred_check
          %p824 = pneg %p128
        $region14: #{hierarch_tcn2_forward.1} parent=11 // pred_check_branch
          %826 = sbr.rel (%p824) target = $region16
        $region15: #{hierarch_tcn2_forward.1} parent=11 // pred_region
          %s828 = ssub.s32 256, 256
          %829 = vsyncadd [#allocation4], %s828
          %s830 = sshll.u32 [#allocation3], 4
          %s831 = int_to_ptr.vmem [resolvable:$true] %s830
          %836 = dma.hbm_to_vmem [thread:$0]  %s3, 256, %s831, [#allocation4], 128, 128, 8
        $region16: #{hierarch_tcn2_forward.1} parent=11 // pred_fallthru
          _
        // Predicated region
        $region17: #{hierarch_tcn2_forward.1} parent=11 // pred_check
          %p837 = pneg %p149
        $region18: #{hierarch_tcn2_forward.1} parent=11 // pred_check_branch
          %839 = sbr.rel (%p837) target = $region20
        $region19: #{hierarch_tcn2_forward.1} parent=11 // pred_region
          _
        $region20: #{hierarch_tcn2_forward.1} parent=11 // pred_fallthru
          _
        // Predicated region
        $region21: #{hierarch_tcn2_forward.1} parent=11 // pred_check
          %p840 = pneg %p170
        $region22: #{hierarch_tcn2_forward.1} parent=11 // pred_check_branch
          %842 = sbr.rel (%p840) target = $region24
        $region23: #{hierarch_tcn2_forward.1} parent=11 // pred_region
          _
        $region24: #{hierarch_tcn2_forward.1} parent=11 // pred_fallthru
          _
        // Predicated region
        $region25: #{hierarch_tcn2_forward.1} parent=11 // pred_check
          %p843 = pneg %p191
        $region26: #{hierarch_tcn2_forward.1} parent=11 // pred_check_branch
          %845 = sbr.rel (%p843) target = $region28
        $region27: #{hierarch_tcn2_forward.1} parent=11 // pred_region
          _
        $region28: #{hierarch_tcn2_forward.1} parent=11 // pred_fallthru
          _
        // Predicated region
        $region29: #{hierarch_tcn2_forward.1} parent=11 // pred_check
          %p846 = pneg %p212
        $region30: #{hierarch_tcn2_forward.1} parent=11 // pred_check_branch
          %848 = sbr.rel (%p846) target = $region32
        $region31: #{hierarch_tcn2_forward.1} parent=11 // pred_region
          _
        $region32: #{hierarch_tcn2_forward.1} parent=11 // pred_fallthru
          _
        // Predicated region
        $region33: #{hierarch_tcn2_forward.1} parent=11 // pred_check
          %p849 = pneg %p233
        $region34: #{hierarch_tcn2_forward.1} parent=11 // pred_check_branch
          %851 = sbr.rel (%p849) target = $region36
        $region35: #{hierarch_tcn2_forward.1} parent=11 // pred_region
          _
        $region36: #{hierarch_tcn2_forward.1} parent=11 // pred_fallthru
          _
        // Predicated region
        $region37: #{hierarch_tcn2_forward.1} parent=11 // pred_check
          %p852 = pneg %p254
        $region38: #{hierarch_tcn2_forward.1} parent=11 // pred_check_branch
          %854 = sbr.rel (%p852) target = $region40
        $region39: #{hierarch_tcn2_forward.1} parent=11 // pred_region
          %s856 = ssub.s32 128, 128
          %857 = vsyncadd [#allocation7], %s856
          %s859 = sshll.u32 [#allocation6], 4
          %s860 = int_to_ptr.vmem [resolvable:$true] %s859
          %862 = dma.hbm_to_vmem [thread:$0]  %s15, 128, %s860, [#allocation7]
        $region40: #{hierarch_tcn2_forward.1} parent=11 // pred_fallthru
          _
        // Predicated region
        $region41: #{hierarch_tcn2_forward.1} parent=11 // pred_check
          %p863 = pneg %p275
        $region42: #{hierarch_tcn2_forward.1} parent=11 // pred_check_branch
          %865 = sbr.rel (%p863) target = $region44
        $region43: #{hierarch_tcn2_forward.1} parent=11 // pred_region
          _
        $region44: #{hierarch_tcn2_forward.1} parent=11 // pred_fallthru
          _
        // Predicated region
        $region45: #{hierarch_tcn2_forward.1} parent=11 // pred_check
          %p866 = pneg %p296
        $region46: #{hierarch_tcn2_forward.1} parent=11 // pred_check_branch
          %868 = sbr.rel (%p866) target = $region48
        $region47: #{hierarch_tcn2_forward.1} parent=11 // pred_region
          _
        $region48: #{hierarch_tcn2_forward.1} parent=11 // pred_fallthru
          _
        // Predicated region
        $region49: #{hierarch_tcn2_forward.1} parent=11 // pred_check
          %p869 = pneg %p317
        $region50: #{hierarch_tcn2_forward.1} parent=11 // pred_check_branch
          %871 = sbr.rel (%p869) target = $region52
        $region51: #{hierarch_tcn2_forward.1} parent=11 // pred_region
          _
        $region52: #{hierarch_tcn2_forward.1} parent=11 // pred_fallthru
          _
        // Predicated region
        $region53: #{hierarch_tcn2_forward.1} parent=11 // pred_check
          %p872 = pneg %p338
        $region54: #{hierarch_tcn2_forward.1} parent=11 // pred_check_branch
          %874 = sbr.rel (%p872) target = $region56
        $region55: #{hierarch_tcn2_forward.1} parent=11 // pred_region
          _
        $region56: #{hierarch_tcn2_forward.1} parent=11 // pred_fallthru
          _
        // Predicated region
        $region57: #{hierarch_tcn2_forward.1} parent=11 // pred_check
          %p875 = pneg %p359
        $region58: #{hierarch_tcn2_forward.1} parent=11 // pred_check_branch
          %877 = sbr.rel (%p875) target = $region60
        $region59: #{hierarch_tcn2_forward.1} parent=11 // pred_region
          _
        $region60: #{hierarch_tcn2_forward.1} parent=11 // pred_fallthru
          _
        // Predicated region
        $region61: #{hierarch_tcn2_forward.1} parent=11 // pred_check
          %p878 = pneg %p380
        $region62: #{hierarch_tcn2_forward.1} parent=11 // pred_check_branch
          %880 = sbr.rel (%p878) target = $region64
        $region63: #{hierarch_tcn2_forward.1} parent=11 // pred_region
          _
        $region64: #{hierarch_tcn2_forward.1} parent=11 // pred_fallthru
          _
        // Predicated region
        $region65: #{hierarch_tcn2_forward.1} parent=11 // pred_check
          %p881 = pneg %p401
        $region66: #{hierarch_tcn2_forward.1} parent=11 // pred_check_branch
          %883 = sbr.rel (%p881) target = $region68
        $region67: #{hierarch_tcn2_forward.1} parent=11 // pred_region
          _
        $region68: #{hierarch_tcn2_forward.1} parent=11 // pred_fallthru
          _
        // Predicated region
        $region69: #{hierarch_tcn2_forward.1} parent=11 // pred_check
          %p884 = pneg %p422
        $region70: #{hierarch_tcn2_forward.1} parent=11 // pred_check_branch
          %886 = sbr.rel (%p884) target = $region72
        $region71: #{hierarch_tcn2_forward.1} parent=11 // pred_region
          %s888 = ssub.s32 128, 128
          %889 = vsyncadd [#allocation7], %s888
          %s891 = sshll.u32 [#allocation8], 4
          %s892 = int_to_ptr.vmem [resolvable:$true] %s891
          %894 = dma.hbm_to_vmem [thread:$0]  %s31, 128, %s892, [#allocation7]
        $region72: #{hierarch_tcn2_forward.1} parent=11 // pred_fallthru
          _
        // Predicated region
        $region73: #{hierarch_tcn2_forward.1} parent=11 // pred_check
          %p895 = pneg %p443
        $region74: #{hierarch_tcn2_forward.1} parent=11 // pred_check_branch
          %897 = sbr.rel (%p895) target = $region76
        $region75: #{hierarch_tcn2_forward.1} parent=11 // pred_region
          _
        $region76: #{hierarch_tcn2_forward.1} parent=11 // pred_fallthru
          _
        // Predicated region
        $region77: #{hierarch_tcn2_forward.1} parent=11 // pred_check
          %p898 = pneg %p464
        $region78: #{hierarch_tcn2_forward.1} parent=11 // pred_check_branch
          %900 = sbr.rel (%p898) target = $region80
        $region79: #{hierarch_tcn2_forward.1} parent=11 // pred_region
          _
        $region80: #{hierarch_tcn2_forward.1} parent=11 // pred_fallthru
          _
        // Predicated region
        $region81: #{hierarch_tcn2_forward.1} parent=11 // pred_check
          %p901 = pneg %p485
        $region82: #{hierarch_tcn2_forward.1} parent=11 // pred_check_branch
          %903 = sbr.rel (%p901) target = $region84
        $region83: #{hierarch_tcn2_forward.1} parent=11 // pred_region
          _
        $region84: #{hierarch_tcn2_forward.1} parent=11 // pred_fallthru
          _
        // Predicated region
        $region85: #{hierarch_tcn2_forward.1} parent=11 // pred_check
          %p904 = pneg %p506
        $region86: #{hierarch_tcn2_forward.1} parent=11 // pred_check_branch
          %906 = sbr.rel (%p904) target = $region88
        $region87: #{hierarch_tcn2_forward.1} parent=11 // pred_region
          _
        $region88: #{hierarch_tcn2_forward.1} parent=11 // pred_fallthru
          _
        // Predicated region
        $region89: #{hierarch_tcn2_forward.1} parent=11 // pred_check
          %p907 = pneg %p527
        $region90: #{hierarch_tcn2_forward.1} parent=11 // pred_check_branch
          %909 = sbr.rel (%p907) target = $region92
        $region91: #{hierarch_tcn2_forward.1} parent=11 // pred_region
          _
        $region92: #{hierarch_tcn2_forward.1} parent=11 // pred_fallthru
          _
        // Predicated region
        $region93: #{hierarch_tcn2_forward.1} parent=11 // pred_check
          %p910 = pneg %p548
        $region94: #{hierarch_tcn2_forward.1} parent=11 // pred_check_branch
          %912 = sbr.rel (%p910) target = $region96
        $region95: #{hierarch_tcn2_forward.1} parent=11 // pred_region
          _
        $region96: #{hierarch_tcn2_forward.1} parent=11 // pred_fallthru
          _
        // Predicated region
        $region97: #{hierarch_tcn2_forward.1} parent=11 // pred_check
          %p913 = pneg %p569
        $region98: #{hierarch_tcn2_forward.1} parent=11 // pred_check_branch
          %915 = sbr.rel (%p913) target = $region100
        $region99: #{hierarch_tcn2_forward.1} parent=11 // pred_region
          %s917 = ssub.s32 512, 512
          %918 = vsyncadd [#allocation10], %s917
          %s919 = sshll.u32 [#allocation9], 4
          %s920 = int_to_ptr.vmem [resolvable:$true] %s919
          %925 = dma.hbm_to_vmem [thread:$0]  %s45, 512, %s920, [#allocation10], 128, 128, 8
        $region100: #{hierarch_tcn2_forward.1} parent=11 // pred_fallthru
          _
        // Predicated region
        $region101: #{hierarch_tcn2_forward.1} parent=11 // pred_check
          %p926 = pneg %p590
        $region102: #{hierarch_tcn2_forward.1} parent=11 // pred_check_branch
          %928 = sbr.rel (%p926) target = $region104
        $region103: #{hierarch_tcn2_forward.1} parent=11 // pred_region
          _
        $region104: #{hierarch_tcn2_forward.1} parent=11 // pred_fallthru
          _
        // Predicated region
        $region105: #{hierarch_tcn2_forward.1} parent=11 // pred_check
          %p929 = pneg %p611
        $region106: #{hierarch_tcn2_forward.1} parent=11 // pred_check_branch
          %931 = sbr.rel (%p929) target = $region108
        $region107: #{hierarch_tcn2_forward.1} parent=11 // pred_region
          %s933 = ssub.s32 128, 128
          %934 = vsyncadd [#allocation10], %s933
          %s936 = sshll.u32 [#allocation11], 4
          %s937 = int_to_ptr.vmem [resolvable:$true] %s936
          %939 = dma.hbm_to_vmem [thread:$0]  %s49, 128, %s937, [#allocation10]
        $region108: #{hierarch_tcn2_forward.1} parent=11 // pred_fallthru
          _
        // Predicated region
        $region109: #{hierarch_tcn2_forward.1} parent=11 // pred_check
          %p940 = pneg %p632
        $region110: #{hierarch_tcn2_forward.1} parent=11 // pred_check_branch
          %942 = sbr.rel (%p940) target = $region112
        $region111: #{hierarch_tcn2_forward.1} parent=11 // pred_region
          _
        $region112: #{hierarch_tcn2_forward.1} parent=11 // pred_fallthru
          _
        // Predicated region
        $region113: #{hierarch_tcn2_forward.1} parent=11 // pred_check
          %p943 = pneg %p653
        $region114: #{hierarch_tcn2_forward.1} parent=11 // pred_check_branch
          %945 = sbr.rel (%p943) target = $region116
        $region115: #{hierarch_tcn2_forward.1} parent=11 // pred_region
          _
        $region116: #{hierarch_tcn2_forward.1} parent=11 // pred_fallthru
          _
      $region12: #{hierarch_tcn2_forward.1} parent=5 // pred_fallthru
        _
      %p946 = scmp.lt.s32.totalorder %s81, 2
      // Predicated region
      $region117: #{hierarch_tcn2_forward.1} parent=5 // pred_check
        %p947 = pneg %p946
      $region118: #{hierarch_tcn2_forward.1} parent=5 // pred_check_branch
        %949 = sbr.rel (%p947) target = $region120
      $region119: #{hierarch_tcn2_forward.1} parent=5 // pred_region
        // Predicated region
        $region121: #{hierarch_tcn2_forward.1} parent=119 // pred_check
          %p950 = pneg %p101
        $region122: #{hierarch_tcn2_forward.1} parent=119 // pred_check_branch
          %952 = sbr.rel (%p950) target = $region124
        $region123: #{hierarch_tcn2_forward.1} parent=119 // pred_region
          %p953 = scmp.lt.s32.totalorder %s81, 1
          %s954 = scalar_select %p953, %s81, 1
          %s955 = smul.addr %s954, 2
          %s956 = smul.addr %s955, 8
          %s957 = scalar_lea.vmem %s1, %s956
        $region124: #{hierarch_tcn2_forward.1} parent=119 // pred_fallthru
          _
      $region120: #{hierarch_tcn2_forward.1} parent=5 // pred_fallthru
        _
      %p958 = scmp.le.s32.totalorder 1, %s81
      %p959 = scmp.lt.s32.totalorder %s81, 3
      %p960 = pnand %p958, %p959
      %p961 = pneg %p960
      // Predicated region
      $region125: #{hierarch_tcn2_forward.1} parent=5 // pred_check
        _
      $region126: #{hierarch_tcn2_forward.1} parent=5 // pred_check_branch
        %963 = sbr.rel (%p960) target = $region128
      $region127: #{hierarch_tcn2_forward.1} parent=5 // pred_region
        %s964 = ssub.s32 %s81, 1
        // Predicated region
        $region129: #{hierarch_tcn2_forward.1} parent=127 // pred_check
          %p965 = pneg %p128
        $region130: #{hierarch_tcn2_forward.1} parent=127 // pred_check_branch
          %967 = sbr.rel (%p965) target = $region132
        $region131: #{hierarch_tcn2_forward.1} parent=127 // pred_region
          %968 = dma.done [#allocation4], 256
        $region132: #{hierarch_tcn2_forward.1} parent=127 // pred_fallthru
          _
        // Predicated region
        $region133: #{hierarch_tcn2_forward.1} parent=127 // pred_check
          %p969 = pneg %p254
        $region134: #{hierarch_tcn2_forward.1} parent=127 // pred_check_branch
          %971 = sbr.rel (%p969) target = $region136
        $region135: #{hierarch_tcn2_forward.1} parent=127 // pred_region
          %972 = dma.done [#allocation7], 128
        $region136: #{hierarch_tcn2_forward.1} parent=127 // pred_fallthru
          _
        // Predicated region
        $region137: #{hierarch_tcn2_forward.1} parent=127 // pred_check
          %p973 = pneg %p422
        $region138: #{hierarch_tcn2_forward.1} parent=127 // pred_check_branch
          %975 = sbr.rel (%p973) target = $region140
        $region139: #{hierarch_tcn2_forward.1} parent=127 // pred_region
          %976 = dma.done [#allocation7], 128
        $region140: #{hierarch_tcn2_forward.1} parent=127 // pred_fallthru
          _
        // Predicated region
        $region141: #{hierarch_tcn2_forward.1} parent=127 // pred_check
          %p977 = pneg %p569
        $region142: #{hierarch_tcn2_forward.1} parent=127 // pred_check_branch
          %979 = sbr.rel (%p977) target = $region144
        $region143: #{hierarch_tcn2_forward.1} parent=127 // pred_region
          %980 = dma.done [#allocation10], 512
        $region144: #{hierarch_tcn2_forward.1} parent=127 // pred_fallthru
          _
        // Predicated region
        $region145: #{hierarch_tcn2_forward.1} parent=127 // pred_check
          %p981 = pneg %p611
        $region146: #{hierarch_tcn2_forward.1} parent=127 // pred_check_branch
          %983 = sbr.rel (%p981) target = $region148
        $region147: #{hierarch_tcn2_forward.1} parent=127 // pred_region
          %984 = dma.done [#allocation10], 128
        $region148: #{hierarch_tcn2_forward.1} parent=127 // pred_fallthru
          _
        %p985 = scmp.lt.s32.totalorder %s86, 1
        %s986 = scalar_select %p985, %s86, 1
        %s987 = smul.addr %s986, 2
        %s988 = smul.addr %s987, 8
        %s989 = scalar_lea.vmem %s1, %s988
        %p990 = pneg %p107
        %p991 = pneg %p104
        %p992 = pneg %p128
        %p993 = pneg %p125
        %p994 = pneg %p149
        %p995 = pneg %p146
        %p996 = pneg %p170
        %p997 = pneg %p167
        %p998 = pneg %p191
        %p999 = pneg %p188
        %p1000 = pneg %p212
        %p1001 = pneg %p209
        %p1002 = pneg %p233
        %p1003 = pneg %p230
        %p1004 = pneg %p254
        %p1005 = pneg %p251
        %p1006 = pneg %p275
        %p1007 = pneg %p272
        %p1008 = pneg %p296
        %p1009 = pneg %p293
        %p1010 = pneg %p317
        %p1011 = pneg %p314
        %p1012 = pneg %p338
        %p1013 = pneg %p335
        %p1014 = pneg %p359
        %p1015 = pneg %p356
        %p1016 = pneg %p380
        %p1017 = pneg %p377
        %p1018 = pneg %p401
        %p1019 = pneg %p398
        %p1020 = pneg %p422
        %p1021 = pneg %p419
        %p1022 = pneg %p443
        %p1023 = pneg %p440
        %p1024 = pneg %p464
        %p1025 = pneg %p461
        %p1026 = pneg %p485
        %p1027 = pneg %p482
        %p1028 = pneg %p506
        %p1029 = pneg %p503
        %p1030 = pneg %p527
        %p1031 = pneg %p524
        %p1032 = pneg %p548
        %p1033 = pneg %p545
        %p1034 = pneg %p569
        %p1035 = pneg %p566
        %p1036 = pneg %p590
        %p1037 = pneg %p587
        %p1038 = pneg %p611
        %p1039 = pneg %p608
        %p1040 = pneg %p632
        %p1041 = pneg %p629
        %p1042 = pneg %p653
        %p1043 = pneg %p650
        %p1044 = pneg %p679
        %p1045 = pneg %p676
        %s1046 = sand.u32 %s666, 1
        %s1047 = scalar_lea.sflag [#allocation5], %s1046
        %s1048 = sand.u32 %s666, 1
        %s1049 = smul.addr %s1048, 16
        %s1050 = scalar_lea.vmem [#allocation12], %s1049
        %p1051 = pneg %p705
        %p1052 = pneg %p702
        %s1053 = sand.u32 %s692, 1
        %s1054 = scalar_lea.sflag [#allocation14], %s1053
        %s1055 = sand.u32 %s692, 1
        %s1056 = smul.addr %s1055, 8
        %s1057 = scalar_lea.vmem [#allocation13], %s1056
        %p1058 = pneg %p731
        %p1059 = pneg %p728
        %p1060 = scmp.lt.s32.totalorder %s86, 1
        %s1061 = scalar_select %p1060, %s86, 1
        %s1062 = smul.addr %s1061, 2
        %s1063 = smul.addr %s1062, 8
        %s1064 = scalar_lea.vmem %s59, %s1063
        %p1065 = pneg %p757
        %p1066 = pneg %p754
        %p1067 = scmp.lt.s32.totalorder %s86, 1
        %s1068 = scalar_select %p1067, %s86, 1
        %s1069 = smul.addr %s1068, 8
        %s1070 = scalar_lea.vmem %s61, %s1069
        %p1071 = pneg %p783
        %p1072 = pneg %p780
        %p1073 = scmp.lt.s32.totalorder %s86, 1
        %s1074 = scalar_select %p1073, %s86, 1
        %s1075 = smul.addr %s1074, 2
        %s1076 = smul.addr %s1075, 8
        %s1077 = scalar_lea.vmem %s63, %s1076
        %p1078 = pneg %p809
        %p1079 = pneg %p806
        %p1080 = scmp.lt.s32.totalorder %s86, 1
        %s1081 = scalar_select %p1080, %s86, 1
        %s1082 = smul.addr %s1081, 8
        %s1083 = scalar_lea.vmem %s65, %s1082
        %p1084 = scmp.lt.s32.totalorder %s86, 1
        %s1085 = scalar_select %p1084, %s86, 1
        %s1086 = smul.addr %s1085, 2
        %s1087 = smul.addr %s1086, 8
        %s1088 = scalar_lea.vmem %s1, %s1087
        %p1089 = scmp.lt.s32.totalorder %s86, 1
        %s1090 = scalar_select %p1089, %s86, 1
        %s1091 = smul.addr %s1090, 2
        %s1092 = smul.addr %s1091, 8
        %s1093 = scalar_lea.vmem %s59, %s1092
        %p1094 = scmp.lt.s32.totalorder %s86, 1
        %s1095 = scalar_select %p1094, %s86, 1
        %s1096 = smul.addr %s1095, 8
        %s1097 = scalar_lea.vmem %s61, %s1096
        %p1098 = scmp.lt.s32.totalorder %s86, 1
        %s1099 = scalar_select %p1098, %s86, 1
        %s1100 = smul.addr %s1099, 2
        %s1101 = smul.addr %s1100, 8
        %s1102 = scalar_lea.vmem %s63, %s1101
        %p1103 = scmp.lt.s32.totalorder %s86, 1
        %s1104 = scalar_select %p1103, %s86, 1
        %s1105 = smul.addr %s1104, 8
        %s1106 = scalar_lea.vmem %s65, %s1105
        %vm1107 = vcmask 64512
        %1108 = vst.msk [vmem:[#allocation2] sm:$0xff] %vm1107, 0.0
        %1109 = vst.msk [vmem:[#allocation2 + $0x8] sm:$0xff] %vm1107, 0.0
        %v1110 = vld [vmem:[%s1088] sm:$0xff]
        %v1111 = vld [vmem:[%s1088 + $0x8] sm:$0xf]
        %v1112 = vld [vmem:[#allocation3] sm:$0xff]
        %v1113 = vld [vmem:[#allocation3 + $0x8] sm:$0xff]
        %v1114 = vld [vmem:[%s5] sm:$0xff]
        %v1115 = vld [vmem:[%s5 + $0x8] sm:$0xff]
        %1117 = vset.pattern.permute.xlu0 0
        %1118 = vperm.xlu0 %1117, %v1114
        %v1119 = vpop.permute.xlu0 %1118
        %1122 = vset.pattern.permute.xlu0 0
        %1123 = vperm.xlu0 %1122, %v1115
        %v1124 = vpop.permute.xlu0 %1123
        %vm1126 = vcmask 97280
        %v1128 = vsel %vm1126, %v1112, 0
        %v1131 = vsel %vm1126, %v1113, 0
        %vm1133 = vcmask 1043456
        %v1135 = vsel %vm1133, %v1111, 0
        %1137 = vmatprep.subr.mxu0 0.0
        %1138 = vmatpush1.msra.mxu0 %v1110
        %1139 = vmatprep.subr.mxu0 0.0
        %1140 = vmatpush1.msra.mxu0 %v1135
        %1141 = vmatprep.subr.mxu0 0.0
        %1142 = vmatpush1.msra.mxu0 0.0
        %1143 = vmatprep.subr.mxu0 0.0
        %1144 = vmatpush1.msra.mxu0 0.0
        %1145 = vmatprep.subr.mxu0 0.0
        %1146 = vmatpush1.msra.mxu0 0.0
        %1147 = vmatprep.subr.mxu0 0.0
        %1148 = vmatpush1.msra.mxu0 0.0
        %1149 = vmatprep.subr.mxu0 0.0
        %1150 = vmatpush1.msra.mxu0 0.0
        %1151 = vmatprep.subr.mxu0 0.0
        %1152 = vmatpush1.msra.mxu0 0.0
        %1153 = vmatprep.subr.mxu0 0.0
        %1154 = vmatpush1.msra.mxu0 0.0
        %1155 = vmatprep.subr.mxu0 0.0
        %1156 = vmatpush1.msra.mxu0 0.0
        %1157 = vmatprep.subr.mxu0 0.0
        %1158 = vmatpush1.msra.mxu0 0.0
        %1159 = vmatprep.subr.mxu0 0.0
        %1160 = vmatpush1.msra.mxu0 0.0
        %1161 = vmatprep.subr.mxu0 0.0
        %1162 = vmatpush1.msra.mxu0 0.0
        %1163 = vmatprep.subr.mxu0 0.0
        %1164 = vmatpush1.msra.mxu0 0.0
        %1165 = vmatprep.subr.mxu0 0.0
        %1166 = vmatpush1.msra.mxu0 0.0
        %1167 = vmatprep.subr.mxu0 0.0
        %1168 = vmatpush1.msra.mxu0 0.0
        %1169 = vmatprep.subr.mxu0 0.0
        %1170 = vmatpush1.msra.mxu0 0.0
        %1171 = vmatprep.subr.mxu0 0.0
        %1172 = vmatpush1.msra.mxu0 0.0
        %1173 = vmatprep.subr.mxu0 0.0
        %1174 = vmatpush1.msra.mxu0 0.0
        %1175 = vmatprep.subr.mxu0 0.0
        %1176 = vmatpush1.msra.mxu0 0.0
        %1177 = vmatprep.subr.mxu0 0.0
        %1178 = vmatpush1.msra.mxu0 0.0
        %1179 = vmatprep.subr.mxu0 0.0
        %1180 = vmatpush1.msra.mxu0 0.0
        %1181 = vmatprep.subr.mxu0 0.0
        %1182 = vmatpush1.msra.mxu0 0.0
        %1183 = vmatprep.subr.mxu0 0.0
        %1184 = vmatpush1.msra.mxu0 0.0
        %1185 = vmatprep.subr.mxu0 0.0
        %1186 = vmatpush1.msra.mxu0 0.0
        %1187 = vmatprep.subr.mxu0 0.0
        %1188 = vmatpush1.msra.mxu0 0.0
        %1189 = vmatprep.subr.mxu0 0.0
        %1190 = vmatpush1.msra.mxu0 0.0
        %1191 = vmatprep.subr.mxu0 0.0
        %1192 = vmatpush1.msra.mxu0 0.0
        %1193 = vmatprep.subr.mxu0 0.0
        %1194 = vmatpush1.msra.mxu0 0.0
        %1195 = vmatprep.subr.mxu0 0.0
        %1196 = vmatpush1.msra.mxu0 0.0
        %1197 = vmatprep.subr.mxu0 0.0
        %1198 = vmatpush1.msra.mxu0 0.0
        %1199 = vmatprep.subr.mxu0 0.0
        %1200 = vmatpush1.msra.mxu0 0.0
        %1201 = vmatprep.mubr.f32.mxu0 0.0
        %1202 = vmatmul.mubr.f32.gmra.mrb[0].mxu0 %v1128
        %v1203 = vpop.f32.mrb[0].mxu0
        %v1204 = vadd.f32 %v1119, %v1203
        %v1205 = vpop.f32.mrb[0].mxu0
        %1206 = vmatprep.mubr.f32.mxu0 0.0
        %1207 = vmatmul.mubr.f32.gmra.mrb[0].mxu0 %v1131
        %v1208 = vpop.f32.mrb[0].mxu0
        %v1209 = vadd.f32 %v1124, %v1208
        %v1210 = vpop.f32.mrb[0].mxu0
        %1211 = vdwg.mxu0
        %1214 = vrot.lane.b32.xlu0 %v1204, 8
        %v1215 = vpop.permute.xlu0 %1214
        %1216 = vrot.lane.b32.xlu0 %v1209, 8
        %v1217 = vpop.permute.xlu0 %1216
        %vm1220 = vcmask 326720
        %1221 = vst.msk [vmem:[#allocation2] sm:$0xff] %vm1220, %v1215
        %1222 = vst.msk [vmem:[#allocation2 + $0x8] sm:$0xff] %vm1220, %v1217
        %v1223 = vld [vmem:[#allocation2] sm:$0xff]
        %v1224 = vld [vmem:[#allocation2 + $0x8] sm:$0xff]
        %v1225 = vld [vmem:[%s7] sm:$0xff]
        %v1226 = vld [vmem:[%s7 + $0x8] sm:$0xff]
        %s1227 = scalar_lea.vmem %s7, 16
        %v1228 = vld [vmem:[%s1227] sm:$0xff]
        %v1229 = vld [vmem:[%s1227 + $0x8] sm:$0xff]
        %1232 = vrot.lane.b32.xlu0 %v1223, 121
        %v1233 = vpop.permute.xlu0 %1232
        %1234 = vrot.lane.b32.xlu0 %v1224, 121
        %v1235 = vpop.permute.xlu0 %1234
        %vm1238 = vcmask 130048
        %v1240 = vsel %vm1238, %v1228, 0
        %v1243 = vsel %vm1238, %v1229, 0
        %1245 = vmatprep.subr.mxu0 0.0
        %1246 = vmatpush1.msra.mxu0 %v1233
        %1247 = vmatprep.subr.mxu0 0.0
        %1248 = vmatpush1.msra.mxu0 %v1235
        %1249 = vmatprep.subr.mxu0 0.0
        %1250 = vmatpush1.msra.mxu0 0.0
        %1251 = vmatprep.subr.mxu0 0.0
        %1252 = vmatpush1.msra.mxu0 0.0
        %1253 = vmatprep.subr.mxu0 0.0
        %1254 = vmatpush1.msra.mxu0 0.0
        %1255 = vmatprep.subr.mxu0 0.0
        %1256 = vmatpush1.msra.mxu0 0.0
        %1257 = vmatprep.subr.mxu0 0.0
        %1258 = vmatpush1.msra.mxu0 0.0
        %1259 = vmatprep.subr.mxu0 0.0
        %1260 = vmatpush1.msra.mxu0 0.0
        %1261 = vmatprep.subr.mxu0 0.0
        %1262 = vmatpush1.msra.mxu0 0.0
        %1263 = vmatprep.subr.mxu0 0.0
        %1264 = vmatpush1.msra.mxu0 0.0
        %1265 = vmatprep.subr.mxu0 0.0
        %1266 = vmatpush1.msra.mxu0 0.0
        %1267 = vmatprep.subr.mxu0 0.0
        %1268 = vmatpush1.msra.mxu0 0.0
        %1269 = vmatprep.subr.mxu0 0.0
        %1270 = vmatpush1.msra.mxu0 0.0
        %1271 = vmatprep.subr.mxu0 0.0
        %1272 = vmatpush1.msra.mxu0 0.0
        %1273 = vmatprep.subr.mxu0 0.0
        %1274 = vmatpush1.msra.mxu0 0.0
        %1275 = vmatprep.subr.mxu0 0.0
        %1276 = vmatpush1.msra.mxu0 0.0
        %1277 = vmatprep.subr.mxu0 0.0
        %1278 = vmatpush1.msra.mxu0 0.0
        %1279 = vmatprep.subr.mxu0 0.0
        %1280 = vmatpush1.msra.mxu0 0.0
        %1281 = vmatprep.subr.mxu0 0.0
        %1282 = vmatpush1.msra.mxu0 0.0
        %1283 = vmatprep.subr.mxu0 0.0
        %1284 = vmatpush1.msra.mxu0 0.0
        %1285 = vmatprep.subr.mxu0 0.0
        %1286 = vmatpush1.msra.mxu0 0.0
        %1287 = vmatprep.subr.mxu0 0.0
        %1288 = vmatpush1.msra.mxu0 0.0
        %1289 = vmatprep.subr.mxu0 0.0
        %1290 = vmatpush1.msra.mxu0 0.0
        %1291 = vmatprep.subr.mxu0 0.0
        %1292 = vmatpush1.msra.mxu0 0.0
        %1293 = vmatprep.subr.mxu0 0.0
        %1294 = vmatpush1.msra.mxu0 0.0
        %1295 = vmatprep.subr.mxu0 0.0
        %1296 = vmatpush1.msra.mxu0 0.0
        %1297 = vmatprep.subr.mxu0 0.0
        %1298 = vmatpush1.msra.mxu0 0.0
        %1299 = vmatprep.subr.mxu0 0.0
        %1300 = vmatpush1.msra.mxu0 0.0
        %1301 = vmatprep.subr.mxu0 0.0
        %1302 = vmatpush1.msra.mxu0 0.0
        %1303 = vmatprep.subr.mxu0 0.0
        %1304 = vmatpush1.msra.mxu0 0.0
        %1305 = vmatprep.subr.mxu0 0.0
        %1306 = vmatpush1.msra.mxu0 0.0
        %1307 = vmatprep.subr.mxu0 0.0
        %1308 = vmatpush1.msra.mxu0 0.0
        %1309 = vmatprep.mubr.f32.mxu0 0.0
        %1310 = vmatmul.mubr.f32.gmra.mrb[0].mxu0 %v1240
        %v1311 = vpop.f32.mrb[0].mxu0
        %v1312 = vadd.f32 0.0, %v1311
        %v1313 = vpop.f32.mrb[0].mxu0
        %1314 = vmatprep.mubr.f32.mxu0 0.0
        %1315 = vmatmul.mubr.f32.gmra.mrb[0].mxu0 %v1243
        %v1316 = vpop.f32.mrb[0].mxu0
        %v1317 = vadd.f32 0.0, %v1316
        %v1318 = vpop.f32.mrb[0].mxu0
        %1319 = vdwg.mxu0
        %1320 = vrot.lane.b32.xlu0 %v1223, 122
        %v1321 = vpop.permute.xlu0 %1320
        %1322 = vrot.lane.b32.xlu0 %v1224, 122
        %v1323 = vpop.permute.xlu0 %1322
        %v1327 = vsel %vm1238, %v1225, 0
        %v1330 = vsel %vm1238, %v1226, 0
        %1332 = vmatprep.subr.mxu0 0.0
        %1333 = vmatpush1.msra.mxu0 %v1321
        %1334 = vmatprep.subr.mxu0 0.0
        %1335 = vmatpush1.msra.mxu0 %v1323
        %1336 = vmatprep.subr.mxu0 0.0
        %1337 = vmatpush1.msra.mxu0 0.0
        %1338 = vmatprep.subr.mxu0 0.0
        %1339 = vmatpush1.msra.mxu0 0.0
        %1340 = vmatprep.subr.mxu0 0.0
        %1341 = vmatpush1.msra.mxu0 0.0
        %1342 = vmatprep.subr.mxu0 0.0
        %1343 = vmatpush1.msra.mxu0 0.0
        %1344 = vmatprep.subr.mxu0 0.0
        %1345 = vmatpush1.msra.mxu0 0.0
        %1346 = vmatprep.subr.mxu0 0.0
        %1347 = vmatpush1.msra.mxu0 0.0
        %1348 = vmatprep.subr.mxu0 0.0
        %1349 = vmatpush1.msra.mxu0 0.0
        %1350 = vmatprep.subr.mxu0 0.0
        %1351 = vmatpush1.msra.mxu0 0.0
        %1352 = vmatprep.subr.mxu0 0.0
        %1353 = vmatpush1.msra.mxu0 0.0
        %1354 = vmatprep.subr.mxu0 0.0
        %1355 = vmatpush1.msra.mxu0 0.0
        %1356 = vmatprep.subr.mxu0 0.0
        %1357 = vmatpush1.msra.mxu0 0.0
        %1358 = vmatprep.subr.mxu0 0.0
        %1359 = vmatpush1.msra.mxu0 0.0
        %1360 = vmatprep.subr.mxu0 0.0
        %1361 = vmatpush1.msra.mxu0 0.0
        %1362 = vmatprep.subr.mxu0 0.0
        %1363 = vmatpush1.msra.mxu0 0.0
        %1364 = vmatprep.subr.mxu0 0.0
        %1365 = vmatpush1.msra.mxu0 0.0
        %1366 = vmatprep.subr.mxu0 0.0
        %1367 = vmatpush1.msra.mxu0 0.0
        %1368 = vmatprep.subr.mxu0 0.0
        %1369 = vmatpush1.msra.mxu0 0.0
        %1370 = vmatprep.subr.mxu0 0.0
        %1371 = vmatpush1.msra.mxu0 0.0
        %1372 = vmatprep.subr.mxu0 0.0
        %1373 = vmatpush1.msra.mxu0 0.0
        %1374 = vmatprep.subr.mxu0 0.0
        %1375 = vmatpush1.msra.mxu0 0.0
        %1376 = vmatprep.subr.mxu0 0.0
        %1377 = vmatpush1.msra.mxu0 0.0
        %1378 = vmatprep.subr.mxu0 0.0
        %1379 = vmatpush1.msra.mxu0 0.0
        %1380 = vmatprep.subr.mxu0 0.0
        %1381 = vmatpush1.msra.mxu0 0.0
        %1382 = vmatprep.subr.mxu0 0.0
        %1383 = vmatpush1.msra.mxu0 0.0
        %1384 = vmatprep.subr.mxu0 0.0
        %1385 = vmatpush1.msra.mxu0 0.0
        %1386 = vmatprep.subr.mxu0 0.0
        %1387 = vmatpush1.msra.mxu0 0.0
        %1388 = vmatprep.subr.mxu0 0.0
        %1389 = vmatpush1.msra.mxu0 0.0
        %1390 = vmatprep.subr.mxu0 0.0
        %1391 = vmatpush1.msra.mxu0 0.0
        %1392 = vmatprep.subr.mxu0 0.0
        %1393 = vmatpush1.msra.mxu0 0.0
        %1394 = vmatprep.subr.mxu0 0.0
        %1395 = vmatpush1.msra.mxu0 0.0
        %1396 = vmatprep.mubr.f32.mxu0 0.0
        %1397 = vmatmul.mubr.f32.gmra.mrb[0].mxu0 %v1327
        %v1398 = vpop.f32.mrb[0].mxu0
        %v1399 = vadd.f32 %v1312, %v1398
        %v1400 = vpop.f32.mrb[0].mxu0
        %1401 = vmatprep.mubr.f32.mxu0 0.0
        %1402 = vmatmul.mubr.f32.gmra.mrb[0].mxu0 %v1330
        %v1403 = vpop.f32.mrb[0].mxu0
        %v1404 = vadd.f32 %v1317, %v1403
        %v1405 = vpop.f32.mrb[0].mxu0
        %1406 = vdwg.mxu0
        %s1407 = scalar_lea.vmem %s7, 32
        %v1408 = vld [vmem:[%s1407] sm:$0xff]
        %v1409 = vld [vmem:[%s1407 + $0x8] sm:$0xff]
        %1410 = vrot.lane.b32.xlu0 %v1223, 120
        %v1411 = vpop.permute.xlu0 %1410
        %1412 = vrot.lane.b32.xlu0 %v1224, 120
        %v1413 = vpop.permute.xlu0 %1412
        %v1417 = vsel %vm1238, %v1408, 0
        %v1420 = vsel %vm1238, %v1409, 0
        %1422 = vmatprep.subr.mxu0 0.0
        %1423 = vmatpush1.msra.mxu0 %v1411
        %1424 = vmatprep.subr.mxu0 0.0
        %1425 = vmatpush1.msra.mxu0 %v1413
        %1426 = vmatprep.subr.mxu0 0.0
        %1427 = vmatpush1.msra.mxu0 0.0
        %1428 = vmatprep.subr.mxu0 0.0
        %1429 = vmatpush1.msra.mxu0 0.0
        %1430 = vmatprep.subr.mxu0 0.0
        %1431 = vmatpush1.msra.mxu0 0.0
        %1432 = vmatprep.subr.mxu0 0.0
        %1433 = vmatpush1.msra.mxu0 0.0
        %1434 = vmatprep.subr.mxu0 0.0
        %1435 = vmatpush1.msra.mxu0 0.0
        %1436 = vmatprep.subr.mxu0 0.0
        %1437 = vmatpush1.msra.mxu0 0.0
        %1438 = vmatprep.subr.mxu0 0.0
        %1439 = vmatpush1.msra.mxu0 0.0
        %1440 = vmatprep.subr.mxu0 0.0
        %1441 = vmatpush1.msra.mxu0 0.0
        %1442 = vmatprep.subr.mxu0 0.0
        %1443 = vmatpush1.msra.mxu0 0.0
        %1444 = vmatprep.subr.mxu0 0.0
        %1445 = vmatpush1.msra.mxu0 0.0
        %1446 = vmatprep.subr.mxu0 0.0
        %1447 = vmatpush1.msra.mxu0 0.0
        %1448 = vmatprep.subr.mxu0 0.0
        %1449 = vmatpush1.msra.mxu0 0.0
        %1450 = vmatprep.subr.mxu0 0.0
        %1451 = vmatpush1.msra.mxu0 0.0
        %1452 = vmatprep.subr.mxu0 0.0
        %1453 = vmatpush1.msra.mxu0 0.0
        %1454 = vmatprep.subr.mxu0 0.0
        %1455 = vmatpush1.msra.mxu0 0.0
        %1456 = vmatprep.subr.mxu0 0.0
        %1457 = vmatpush1.msra.mxu0 0.0
        %1458 = vmatprep.subr.mxu0 0.0
        %1459 = vmatpush1.msra.mxu0 0.0
        %1460 = vmatprep.subr.mxu0 0.0
        %1461 = vmatpush1.msra.mxu0 0.0
        %1462 = vmatprep.subr.mxu0 0.0
        %1463 = vmatpush1.msra.mxu0 0.0
        %1464 = vmatprep.subr.mxu0 0.0
        %1465 = vmatpush1.msra.mxu0 0.0
        %1466 = vmatprep.subr.mxu0 0.0
        %1467 = vmatpush1.msra.mxu0 0.0
        %1468 = vmatprep.subr.mxu0 0.0
        %1469 = vmatpush1.msra.mxu0 0.0
        %1470 = vmatprep.subr.mxu0 0.0
        %1471 = vmatpush1.msra.mxu0 0.0
        %1472 = vmatprep.subr.mxu0 0.0
        %1473 = vmatpush1.msra.mxu0 0.0
        %1474 = vmatprep.subr.mxu0 0.0
        %1475 = vmatpush1.msra.mxu0 0.0
        %1476 = vmatprep.subr.mxu0 0.0
        %1477 = vmatpush1.msra.mxu0 0.0
        %1478 = vmatprep.subr.mxu0 0.0
        %1479 = vmatpush1.msra.mxu0 0.0
        %1480 = vmatprep.subr.mxu0 0.0
        %1481 = vmatpush1.msra.mxu0 0.0
        %1482 = vmatprep.subr.mxu0 0.0
        %1483 = vmatpush1.msra.mxu0 0.0
        %1484 = vmatprep.subr.mxu0 0.0
        %1485 = vmatpush1.msra.mxu0 0.0
        %1486 = vmatprep.mubr.f32.mxu0 0.0
        %1487 = vmatmul.mubr.f32.gmra.mrb[0].mxu0 %v1417
        %v1488 = vpop.f32.mrb[0].mxu0
        %v1489 = vadd.f32 0.0, %v1488
        %v1490 = vpop.f32.mrb[0].mxu0
        %1491 = vmatprep.mubr.f32.mxu0 0.0
        %1492 = vmatmul.mubr.f32.gmra.mrb[0].mxu0 %v1420
        %v1493 = vpop.f32.mrb[0].mxu0
        %v1494 = vadd.f32 0.0, %v1493
        %v1495 = vpop.f32.mrb[0].mxu0
        %1496 = vdwg.mxu0
        %v1497 = vadd.f32 %v1399, %v1489
        %v1498 = vadd.f32 %v1404, %v1494
        %v1499 = vld [vmem:[%s9] sm:$0xff]
        %v1500 = vld [vmem:[%s9 + $0x8] sm:$0xff]
        %1502 = vset.pattern.permute.xlu0 0
        %1503 = vperm.xlu0 %1502, %v1499
        %v1504 = vpop.permute.xlu0 %1503
        %1507 = vset.pattern.permute.xlu0 0
        %1508 = vperm.xlu0 %1507, %v1500
        %v1509 = vpop.permute.xlu0 %1508
        %v1511 = vadd.f32 %v1497, %v1504
        %v1512 = vadd.f32 %v1498, %v1509
        %v1513 = vmax.f32 %v1511, 0.0
        %v1514 = vmax.f32 %v1512, 0.0
        %v1515 = vld [vmem:[%s11] sm:$0xff]
        %v1516 = vld [vmem:[%s11 + $0x8] sm:$0xff]
        %v1517 = vld [vmem:[%s13] sm:$0xff]
        %v1518 = vld [vmem:[%s13 + $0x8] sm:$0xff]
        %1520 = vset.pattern.permute.xlu0 0
        %1521 = vperm.xlu0 %1520, %v1517
        %v1522 = vpop.permute.xlu0 %1521
        %1525 = vset.pattern.permute.xlu0 0
        %1526 = vperm.xlu0 %1525, %v1518
        %v1527 = vpop.permute.xlu0 %1526
        %v1530 = vsel %vm1238, %v1515, 0
        %v1533 = vsel %vm1238, %v1516, 0
        %1535 = vmatprep.subr.mxu0 0.0
        %1536 = vmatpush1.msra.mxu0 %v1513
        %1537 = vmatprep.subr.mxu0 0.0
        %1538 = vmatpush1.msra.mxu0 %v1514
        %1539 = vmatprep.subr.mxu0 0.0
        %1540 = vmatpush1.msra.mxu0 0.0
        %1541 = vmatprep.subr.mxu0 0.0
        %1542 = vmatpush1.msra.mxu0 0.0
        %1543 = vmatprep.subr.mxu0 0.0
        %1544 = vmatpush1.msra.mxu0 0.0
        %1545 = vmatprep.subr.mxu0 0.0
        %1546 = vmatpush1.msra.mxu0 0.0
        %1547 = vmatprep.subr.mxu0 0.0
        %1548 = vmatpush1.msra.mxu0 0.0
        %1549 = vmatprep.subr.mxu0 0.0
        %1550 = vmatpush1.msra.mxu0 0.0
        %1551 = vmatprep.subr.mxu0 0.0
        %1552 = vmatpush1.msra.mxu0 0.0
        %1553 = vmatprep.subr.mxu0 0.0
        %1554 = vmatpush1.msra.mxu0 0.0
        %1555 = vmatprep.subr.mxu0 0.0
        %1556 = vmatpush1.msra.mxu0 0.0
        %1557 = vmatprep.subr.mxu0 0.0
        %1558 = vmatpush1.msra.mxu0 0.0
        %1559 = vmatprep.subr.mxu0 0.0
        %1560 = vmatpush1.msra.mxu0 0.0
        %1561 = vmatprep.subr.mxu0 0.0
        %1562 = vmatpush1.msra.mxu0 0.0
        %1563 = vmatprep.subr.mxu0 0.0
        %1564 = vmatpush1.msra.mxu0 0.0
        %1565 = vmatprep.subr.mxu0 0.0
        %1566 = vmatpush1.msra.mxu0 0.0
        %1567 = vmatprep.subr.mxu0 0.0
        %1568 = vmatpush1.msra.mxu0 0.0
        %1569 = vmatprep.subr.mxu0 0.0
        %1570 = vmatpush1.msra.mxu0 0.0
        %1571 = vmatprep.subr.mxu0 0.0
        %1572 = vmatpush1.msra.mxu0 0.0
        %1573 = vmatprep.subr.mxu0 0.0
        %1574 = vmatpush1.msra.mxu0 0.0
        %1575 = vmatprep.subr.mxu0 0.0
        %1576 = vmatpush1.msra.mxu0 0.0
        %1577 = vmatprep.subr.mxu0 0.0
        %1578 = vmatpush1.msra.mxu0 0.0
        %1579 = vmatprep.subr.mxu0 0.0
        %1580 = vmatpush1.msra.mxu0 0.0
        %1581 = vmatprep.subr.mxu0 0.0
        %1582 = vmatpush1.msra.mxu0 0.0
        %1583 = vmatprep.subr.mxu0 0.0
        %1584 = vmatpush1.msra.mxu0 0.0
        %1585 = vmatprep.subr.mxu0 0.0
        %1586 = vmatpush1.msra.mxu0 0.0
        %1587 = vmatprep.subr.mxu0 0.0
        %1588 = vmatpush1.msra.mxu0 0.0
        %1589 = vmatprep.subr.mxu0 0.0
        %1590 = vmatpush1.msra.mxu0 0.0
        %1591 = vmatprep.subr.mxu0 0.0
        %1592 = vmatpush1.msra.mxu0 0.0
        %1593 = vmatprep.subr.mxu0 0.0
        %1594 = vmatpush1.msra.mxu0 0.0
        %1595 = vmatprep.subr.mxu0 0.0
        %1596 = vmatpush1.msra.mxu0 0.0
        %1597 = vmatprep.subr.mxu0 0.0
        %1598 = vmatpush1.msra.mxu0 0.0
        %1599 = vmatprep.mubr.f32.mxu0 0.0
        %1600 = vmatmul.mubr.f32.gmra.mrb[0].mxu0 %v1530
        %v1601 = vpop.f32.mrb[0].mxu0
        %v1602 = vadd.f32 %v1522, %v1601
        %v1603 = vpop.f32.mrb[0].mxu0
        %1604 = vmatprep.mubr.f32.mxu0 0.0
        %1605 = vmatmul.mubr.f32.gmra.mrb[0].mxu0 %v1533
        %v1606 = vpop.f32.mrb[0].mxu0
        %v1607 = vadd.f32 %v1527, %v1606
        %v1608 = vpop.f32.mrb[0].mxu0
        %1609 = vdwg.mxu0
        %1612 = vrot.lane.b32.xlu0 %v1602, 8
        %v1613 = vpop.permute.xlu0 %1612
        %1614 = vrot.lane.b32.xlu0 %v1607, 8
        %v1615 = vpop.permute.xlu0 %1614
        %v1618 = vadd.f32 %v1223, %v1613
        %v1619 = vadd.f32 %v1224, %v1615
        %1620 = vst.msk [vmem:[#allocation2] sm:$0xff] %vm1220, %v1618
        %1621 = vst.msk [vmem:[#allocation2 + $0x8] sm:$0xff] %vm1220, %v1619
        %v1622 = vld [vmem:[#allocation2] sm:$0xff]
        %v1623 = vld [vmem:[#allocation2 + $0x8] sm:$0xff]
        %s1624 = scalar_lea.vmem %s7, 48
        %v1625 = vld [vmem:[%s1624] sm:$0xff]
        %v1626 = vld [vmem:[%s1624 + $0x8] sm:$0xff]
        %s1627 = scalar_lea.vmem %s7, 64
        %v1628 = vld [vmem:[%s1627] sm:$0xff]
        %v1629 = vld [vmem:[%s1627 + $0x8] sm:$0xff]
        %1632 = vrot.lane.b32.xlu0 %v1622, 122
        %v1633 = vpop.permute.xlu0 %1632
        %1634 = vrot.lane.b32.xlu0 %v1623, 122
        %v1635 = vpop.permute.xlu0 %1634
        %v1639 = vsel %vm1238, %v1628, 0
        %v1642 = vsel %vm1238, %v1629, 0
        %1644 = vmatprep.subr.mxu0 0.0
        %1645 = vmatpush1.msra.mxu0 %v1633
        %1646 = vmatprep.subr.mxu0 0.0
        %1647 = vmatpush1.msra.mxu0 %v1635
        %1648 = vmatprep.subr.mxu0 0.0
        %1649 = vmatpush1.msra.mxu0 0.0
        %1650 = vmatprep.subr.mxu0 0.0
        %1651 = vmatpush1.msra.mxu0 0.0
        %1652 = vmatprep.subr.mxu0 0.0
        %1653 = vmatpush1.msra.mxu0 0.0
        %1654 = vmatprep.subr.mxu0 0.0
        %1655 = vmatpush1.msra.mxu0 0.0
        %1656 = vmatprep.subr.mxu0 0.0
        %1657 = vmatpush1.msra.mxu0 0.0
        %1658 = vmatprep.subr.mxu0 0.0
        %1659 = vmatpush1.msra.mxu0 0.0
        %1660 = vmatprep.subr.mxu0 0.0
        %1661 = vmatpush1.msra.mxu0 0.0
        %1662 = vmatprep.subr.mxu0 0.0
        %1663 = vmatpush1.msra.mxu0 0.0
        %1664 = vmatprep.subr.mxu0 0.0
        %1665 = vmatpush1.msra.mxu0 0.0
        %1666 = vmatprep.subr.mxu0 0.0
        %1667 = vmatpush1.msra.mxu0 0.0
        %1668 = vmatprep.subr.mxu0 0.0
        %1669 = vmatpush1.msra.mxu0 0.0
        %1670 = vmatprep.subr.mxu0 0.0
        %1671 = vmatpush1.msra.mxu0 0.0
        %1672 = vmatprep.subr.mxu0 0.0
        %1673 = vmatpush1.msra.mxu0 0.0
        %1674 = vmatprep.subr.mxu0 0.0
        %1675 = vmatpush1.msra.mxu0 0.0
        %1676 = vmatprep.subr.mxu0 0.0
        %1677 = vmatpush1.msra.mxu0 0.0
        %1678 = vmatprep.subr.mxu0 0.0
        %1679 = vmatpush1.msra.mxu0 0.0
        %1680 = vmatprep.subr.mxu0 0.0
        %1681 = vmatpush1.msra.mxu0 0.0
        %1682 = vmatprep.subr.mxu0 0.0
        %1683 = vmatpush1.msra.mxu0 0.0
        %1684 = vmatprep.subr.mxu0 0.0
        %1685 = vmatpush1.msra.mxu0 0.0
        %1686 = vmatprep.subr.mxu0 0.0
        %1687 = vmatpush1.msra.mxu0 0.0
        %1688 = vmatprep.subr.mxu0 0.0
        %1689 = vmatpush1.msra.mxu0 0.0
        %1690 = vmatprep.subr.mxu0 0.0
        %1691 = vmatpush1.msra.mxu0 0.0
        %1692 = vmatprep.subr.mxu0 0.0
        %1693 = vmatpush1.msra.mxu0 0.0
        %1694 = vmatprep.subr.mxu0 0.0
        %1695 = vmatpush1.msra.mxu0 0.0
        %1696 = vmatprep.subr.mxu0 0.0
        %1697 = vmatpush1.msra.mxu0 0.0
        %1698 = vmatprep.subr.mxu0 0.0
        %1699 = vmatpush1.msra.mxu0 0.0
        %1700 = vmatprep.subr.mxu0 0.0
        %1701 = vmatpush1.msra.mxu0 0.0
        %1702 = vmatprep.subr.mxu0 0.0
        %1703 = vmatpush1.msra.mxu0 0.0
        %1704 = vmatprep.subr.mxu0 0.0
        %1705 = vmatpush1.msra.mxu0 0.0
        %1706 = vmatprep.subr.mxu0 0.0
        %1707 = vmatpush1.msra.mxu0 0.0
        %1708 = vmatprep.mubr.f32.mxu0 0.0
        %1709 = vmatmul.mubr.f32.gmra.mrb[0].mxu0 %v1639
        %v1710 = vpop.f32.mrb[0].mxu0
        %v1711 = vadd.f32 0.0, %v1710
        %v1712 = vpop.f32.mrb[0].mxu0
        %1713 = vmatprep.mubr.f32.mxu0 0.0
        %1714 = vmatmul.mubr.f32.gmra.mrb[0].mxu0 %v1642
        %v1715 = vpop.f32.mrb[0].mxu0
        %v1716 = vadd.f32 0.0, %v1715
        %v1717 = vpop.f32.mrb[0].mxu0
        %1718 = vdwg.mxu0
        %1719 = vrot.lane.b32.xlu0 %v1622, 124
        %v1720 = vpop.permute.xlu0 %1719
        %1721 = vrot.lane.b32.xlu0 %v1623, 124
        %v1722 = vpop.permute.xlu0 %1721
        %v1726 = vsel %vm1238, %v1625, 0
        %v1729 = vsel %vm1238, %v1626, 0
        %1731 = vmatprep.subr.mxu0 0.0
        %1732 = vmatpush1.msra.mxu0 %v1720
        %1733 = vmatprep.subr.mxu0 0.0
        %1734 = vmatpush1.msra.mxu0 %v1722
        %1735 = vmatprep.subr.mxu0 0.0
        %1736 = vmatpush1.msra.mxu0 0.0
        %1737 = vmatprep.subr.mxu0 0.0
        %1738 = vmatpush1.msra.mxu0 0.0
        %1739 = vmatprep.subr.mxu0 0.0
        %1740 = vmatpush1.msra.mxu0 0.0
        %1741 = vmatprep.subr.mxu0 0.0
        %1742 = vmatpush1.msra.mxu0 0.0
        %1743 = vmatprep.subr.mxu0 0.0
        %1744 = vmatpush1.msra.mxu0 0.0
        %1745 = vmatprep.subr.mxu0 0.0
        %1746 = vmatpush1.msra.mxu0 0.0
        %1747 = vmatprep.subr.mxu0 0.0
        %1748 = vmatpush1.msra.mxu0 0.0
        %1749 = vmatprep.subr.mxu0 0.0
        %1750 = vmatpush1.msra.mxu0 0.0
        %1751 = vmatprep.subr.mxu0 0.0
        %1752 = vmatpush1.msra.mxu0 0.0
        %1753 = vmatprep.subr.mxu0 0.0
        %1754 = vmatpush1.msra.mxu0 0.0
        %1755 = vmatprep.subr.mxu0 0.0
        %1756 = vmatpush1.msra.mxu0 0.0
        %1757 = vmatprep.subr.mxu0 0.0
        %1758 = vmatpush1.msra.mxu0 0.0
        %1759 = vmatprep.subr.mxu0 0.0
        %1760 = vmatpush1.msra.mxu0 0.0
        %1761 = vmatprep.subr.mxu0 0.0
        %1762 = vmatpush1.msra.mxu0 0.0
        %1763 = vmatprep.subr.mxu0 0.0
        %1764 = vmatpush1.msra.mxu0 0.0
        %1765 = vmatprep.subr.mxu0 0.0
        %1766 = vmatpush1.msra.mxu0 0.0
        %1767 = vmatprep.subr.mxu0 0.0
        %1768 = vmatpush1.msra.mxu0 0.0
        %1769 = vmatprep.subr.mxu0 0.0
        %1770 = vmatpush1.msra.mxu0 0.0
        %1771 = vmatprep.subr.mxu0 0.0
        %1772 = vmatpush1.msra.mxu0 0.0
        %1773 = vmatprep.subr.mxu0 0.0
        %1774 = vmatpush1.msra.mxu0 0.0
        %1775 = vmatprep.subr.mxu0 0.0
        %1776 = vmatpush1.msra.mxu0 0.0
        %1777 = vmatprep.subr.mxu0 0.0
        %1778 = vmatpush1.msra.mxu0 0.0
        %1779 = vmatprep.subr.mxu0 0.0
        %1780 = vmatpush1.msra.mxu0 0.0
        %1781 = vmatprep.subr.mxu0 0.0
        %1782 = vmatpush1.msra.mxu0 0.0
        %1783 = vmatprep.subr.mxu0 0.0
        %1784 = vmatpush1.msra.mxu0 0.0
        %1785 = vmatprep.subr.mxu0 0.0
        %1786 = vmatpush1.msra.mxu0 0.0
        %1787 = vmatprep.subr.mxu0 0.0
        %1788 = vmatpush1.msra.mxu0 0.0
        %1789 = vmatprep.subr.mxu0 0.0
        %1790 = vmatpush1.msra.mxu0 0.0
        %1791 = vmatprep.subr.mxu0 0.0
        %1792 = vmatpush1.msra.mxu0 0.0
        %1793 = vmatprep.subr.mxu0 0.0
        %1794 = vmatpush1.msra.mxu0 0.0
        %1795 = vmatprep.mubr.f32.mxu0 0.0
        %1796 = vmatmul.mubr.f32.gmra.mrb[0].mxu0 %v1726
        %v1797 = vpop.f32.mrb[0].mxu0
        %v1798 = vadd.f32 %v1711, %v1797
        %v1799 = vpop.f32.mrb[0].mxu0
        %1800 = vmatprep.mubr.f32.mxu0 0.0
        %1801 = vmatmul.mubr.f32.gmra.mrb[0].mxu0 %v1729
        %v1802 = vpop.f32.mrb[0].mxu0
        %v1803 = vadd.f32 %v1716, %v1802
        %v1804 = vpop.f32.mrb[0].mxu0
        %1805 = vdwg.mxu0
        %s1806 = scalar_lea.vmem %s7, 80
        %v1807 = vld [vmem:[%s1806] sm:$0xff]
        %v1808 = vld [vmem:[%s1806 + $0x8] sm:$0xff]
        %1809 = vrot.lane.b32.xlu0 %v1622, 120
        %v1810 = vpop.permute.xlu0 %1809
        %1811 = vrot.lane.b32.xlu0 %v1623, 120
        %v1812 = vpop.permute.xlu0 %1811
        %v1816 = vsel %vm1238, %v1807, 0
        %v1819 = vsel %vm1238, %v1808, 0
        %1821 = vmatprep.subr.mxu0 0.0
        %1822 = vmatpush1.msra.mxu0 %v1810
        %1823 = vmatprep.subr.mxu0 0.0
        %1824 = vmatpush1.msra.mxu0 %v1812
        %1825 = vmatprep.subr.mxu0 0.0
        %1826 = vmatpush1.msra.mxu0 0.0
        %1827 = vmatprep.subr.mxu0 0.0
        %1828 = vmatpush1.msra.mxu0 0.0
        %1829 = vmatprep.subr.mxu0 0.0
        %1830 = vmatpush1.msra.mxu0 0.0
        %1831 = vmatprep.subr.mxu0 0.0
        %1832 = vmatpush1.msra.mxu0 0.0
        %1833 = vmatprep.subr.mxu0 0.0
        %1834 = vmatpush1.msra.mxu0 0.0
        %1835 = vmatprep.subr.mxu0 0.0
        %1836 = vmatpush1.msra.mxu0 0.0
        %1837 = vmatprep.subr.mxu0 0.0
        %1838 = vmatpush1.msra.mxu0 0.0
        %1839 = vmatprep.subr.mxu0 0.0
        %1840 = vmatpush1.msra.mxu0 0.0
        %1841 = vmatprep.subr.mxu0 0.0
        %1842 = vmatpush1.msra.mxu0 0.0
        %1843 = vmatprep.subr.mxu0 0.0
        %1844 = vmatpush1.msra.mxu0 0.0
        %1845 = vmatprep.subr.mxu0 0.0
        %1846 = vmatpush1.msra.mxu0 0.0
        %1847 = vmatprep.subr.mxu0 0.0
        %1848 = vmatpush1.msra.mxu0 0.0
        %1849 = vmatprep.subr.mxu0 0.0
        %1850 = vmatpush1.msra.mxu0 0.0
        %1851 = vmatprep.subr.mxu0 0.0
        %1852 = vmatpush1.msra.mxu0 0.0
        %1853 = vmatprep.subr.mxu0 0.0
        %1854 = vmatpush1.msra.mxu0 0.0
        %1855 = vmatprep.subr.mxu0 0.0
        %1856 = vmatpush1.msra.mxu0 0.0
        %1857 = vmatprep.subr.mxu0 0.0
        %1858 = vmatpush1.msra.mxu0 0.0
        %1859 = vmatprep.subr.mxu0 0.0
        %1860 = vmatpush1.msra.mxu0 0.0
        %1861 = vmatprep.subr.mxu0 0.0
        %1862 = vmatpush1.msra.mxu0 0.0
        %1863 = vmatprep.subr.mxu0 0.0
        %1864 = vmatpush1.msra.mxu0 0.0
        %1865 = vmatprep.subr.mxu0 0.0
        %1866 = vmatpush1.msra.mxu0 0.0
        %1867 = vmatprep.subr.mxu0 0.0
        %1868 = vmatpush1.msra.mxu0 0.0
        %1869 = vmatprep.subr.mxu0 0.0
        %1870 = vmatpush1.msra.mxu0 0.0
        %1871 = vmatprep.subr.mxu0 0.0
        %1872 = vmatpush1.msra.mxu0 0.0
        %1873 = vmatprep.subr.mxu0 0.0
        %1874 = vmatpush1.msra.mxu0 0.0
        %1875 = vmatprep.subr.mxu0 0.0
        %1876 = vmatpush1.msra.mxu0 0.0
        %1877 = vmatprep.subr.mxu0 0.0
        %1878 = vmatpush1.msra.mxu0 0.0
        %1879 = vmatprep.subr.mxu0 0.0
        %1880 = vmatpush1.msra.mxu0 0.0
        %1881 = vmatprep.subr.mxu0 0.0
        %1882 = vmatpush1.msra.mxu0 0.0
        %1883 = vmatprep.subr.mxu0 0.0
        %1884 = vmatpush1.msra.mxu0 0.0
        %1885 = vmatprep.mubr.f32.mxu0 0.0
        %1886 = vmatmul.mubr.f32.gmra.mrb[0].mxu0 %v1816
        %v1887 = vpop.f32.mrb[0].mxu0
        %v1888 = vadd.f32 0.0, %v1887
        %v1889 = vpop.f32.mrb[0].mxu0
        %1890 = vmatprep.mubr.f32.mxu0 0.0
        %1891 = vmatmul.mubr.f32.gmra.mrb[0].mxu0 %v1819
        %v1892 = vpop.f32.mrb[0].mxu0
        %v1893 = vadd.f32 0.0, %v1892
        %v1894 = vpop.f32.mrb[0].mxu0
        %1895 = vdwg.mxu0
        %v1896 = vadd.f32 %v1798, %v1888
        %v1897 = vadd.f32 %v1803, %v1893
        %s1898 = scalar_lea.vmem %s9, 16
        %v1899 = vld [vmem:[%s1898] sm:$0xff]
        %v1900 = vld [vmem:[%s1898 + $0x8] sm:$0xff]
        %1902 = vset.pattern.permute.xlu0 0
        %1903 = vperm.xlu0 %1902, %v1899
        %v1904 = vpop.permute.xlu0 %1903
        %1907 = vset.pattern.permute.xlu0 0
        %1908 = vperm.xlu0 %1907, %v1900
        %v1909 = vpop.permute.xlu0 %1908
        %v1911 = vadd.f32 %v1896, %v1904
        %v1912 = vadd.f32 %v1897, %v1909
        %v1913 = vmax.f32 %v1911, 0.0
        %v1914 = vmax.f32 %v1912, 0.0
        %s1915 = scalar_lea.vmem %s11, 16
        %v1916 = vld [vmem:[%s1915] sm:$0xff]
        %v1917 = vld [vmem:[%s1915 + $0x8] sm:$0xff]
        %s1918 = scalar_lea.vmem %s13, 16
        %v1919 = vld [vmem:[%s1918] sm:$0xff]
        %v1920 = vld [vmem:[%s1918 + $0x8] sm:$0xff]
        %1922 = vset.pattern.permute.xlu0 0
        %1923 = vperm.xlu0 %1922, %v1919
        %v1924 = vpop.permute.xlu0 %1923
        %1927 = vset.pattern.permute.xlu0 0
        %1928 = vperm.xlu0 %1927, %v1920
        %v1929 = vpop.permute.xlu0 %1928
        %v1932 = vsel %vm1238, %v1916, 0
        %v1935 = vsel %vm1238, %v1917, 0
        %1937 = vmatprep.subr.mxu0 0.0
        %1938 = vmatpush1.msra.mxu0 %v1913
        %1939 = vmatprep.subr.mxu0 0.0
        %1940 = vmatpush1.msra.mxu0 %v1914
        %1941 = vmatprep.subr.mxu0 0.0
        %1942 = vmatpush1.msra.mxu0 0.0
        %1943 = vmatprep.subr.mxu0 0.0
        %1944 = vmatpush1.msra.mxu0 0.0
        %1945 = vmatprep.subr.mxu0 0.0
        %1946 = vmatpush1.msra.mxu0 0.0
        %1947 = vmatprep.subr.mxu0 0.0
        %1948 = vmatpush1.msra.mxu0 0.0
        %1949 = vmatprep.subr.mxu0 0.0
        %1950 = vmatpush1.msra.mxu0 0.0
        %1951 = vmatprep.subr.mxu0 0.0
        %1952 = vmatpush1.msra.mxu0 0.0
        %1953 = vmatprep.subr.mxu0 0.0
        %1954 = vmatpush1.msra.mxu0 0.0
        %1955 = vmatprep.subr.mxu0 0.0
        %1956 = vmatpush1.msra.mxu0 0.0
        %1957 = vmatprep.subr.mxu0 0.0
        %1958 = vmatpush1.msra.mxu0 0.0
        %1959 = vmatprep.subr.mxu0 0.0
        %1960 = vmatpush1.msra.mxu0 0.0
        %1961 = vmatprep.subr.mxu0 0.0
        %1962 = vmatpush1.msra.mxu0 0.0
        %1963 = vmatprep.subr.mxu0 0.0
        %1964 = vmatpush1.msra.mxu0 0.0
        %1965 = vmatprep.subr.mxu0 0.0
        %1966 = vmatpush1.msra.mxu0 0.0
        %1967 = vmatprep.subr.mxu0 0.0
        %1968 = vmatpush1.msra.mxu0 0.0
        %1969 = vmatprep.subr.mxu0 0.0
        %1970 = vmatpush1.msra.mxu0 0.0
        %1971 = vmatprep.subr.mxu0 0.0
        %1972 = vmatpush1.msra.mxu0 0.0
        %1973 = vmatprep.subr.mxu0 0.0
        %1974 = vmatpush1.msra.mxu0 0.0
        %1975 = vmatprep.subr.mxu0 0.0
        %1976 = vmatpush1.msra.mxu0 0.0
        %1977 = vmatprep.subr.mxu0 0.0
        %1978 = vmatpush1.msra.mxu0 0.0
        %1979 = vmatprep.subr.mxu0 0.0
        %1980 = vmatpush1.msra.mxu0 0.0
        %1981 = vmatprep.subr.mxu0 0.0
        %1982 = vmatpush1.msra.mxu0 0.0
        %1983 = vmatprep.subr.mxu0 0.0
        %1984 = vmatpush1.msra.mxu0 0.0
        %1985 = vmatprep.subr.mxu0 0.0
        %1986 = vmatpush1.msra.mxu0 0.0
        %1987 = vmatprep.subr.mxu0 0.0
        %1988 = vmatpush1.msra.mxu0 0.0
        %1989 = vmatprep.subr.mxu0 0.0
        %1990 = vmatpush1.msra.mxu0 0.0
        %1991 = vmatprep.subr.mxu0 0.0
        %1992 = vmatpush1.msra.mxu0 0.0
        %1993 = vmatprep.subr.mxu0 0.0
        %1994 = vmatpush1.msra.mxu0 0.0
        %1995 = vmatprep.subr.mxu0 0.0
        %1996 = vmatpush1.msra.mxu0 0.0
        %1997 = vmatprep.subr.mxu0 0.0
        %1998 = vmatpush1.msra.mxu0 0.0
        %1999 = vmatprep.subr.mxu0 0.0
        %2000 = vmatpush1.msra.mxu0 0.0
        %2001 = vmatprep.mubr.f32.mxu0 0.0
        %2002 = vmatmul.mubr.f32.gmra.mrb[0].mxu0 %v1932
        %v2003 = vpop.f32.mrb[0].mxu0
        %v2004 = vadd.f32 %v1924, %v2003
        %v2005 = vpop.f32.mrb[0].mxu0
        %2006 = vmatprep.mubr.f32.mxu0 0.0
        %2007 = vmatmul.mubr.f32.gmra.mrb[0].mxu0 %v1935
        %v2008 = vpop.f32.mrb[0].mxu0
        %v2009 = vadd.f32 %v1929, %v2008
        %v2010 = vpop.f32.mrb[0].mxu0
        %2011 = vdwg.mxu0
        %2014 = vrot.lane.b32.xlu0 %v2004, 8
        %v2015 = vpop.permute.xlu0 %2014
        %2016 = vrot.lane.b32.xlu0 %v2009, 8
        %v2017 = vpop.permute.xlu0 %2016
        %v2020 = vadd.f32 %v1622, %v2015
        %v2021 = vadd.f32 %v1623, %v2017
        %2022 = vst.msk [vmem:[#allocation2] sm:$0xff] %vm1220, %v2020
        %2023 = vst.msk [vmem:[#allocation2 + $0x8] sm:$0xff] %vm1220, %v2021
        %v2024 = vld [vmem:[#allocation2] sm:$0xff]
        %v2025 = vld [vmem:[#allocation2 + $0x8] sm:$0xff]
        %s2026 = scalar_lea.vmem %s7, 96
        %v2027 = vld [vmem:[%s2026] sm:$0xff]
        %v2028 = vld [vmem:[%s2026 + $0x8] sm:$0xff]
        %s2029 = scalar_lea.vmem %s7, 112
        %v2030 = vld [vmem:[%s2029] sm:$0xff]
        %v2031 = vld [vmem:[%s2029 + $0x8] sm:$0xff]
        %2034 = vrot.lane.b32.xlu0 %v2024, 124
        %v2035 = vpop.permute.xlu0 %2034
        %2036 = vrot.lane.b32.xlu0 %v2025, 124
        %v2037 = vpop.permute.xlu0 %2036
        %v2041 = vsel %vm1238, %v2030, 0
        %v2044 = vsel %vm1238, %v2031, 0
        %2046 = vmatprep.subr.mxu0 0.0
        %2047 = vmatpush1.msra.mxu0 %v2035
        %2048 = vmatprep.subr.mxu0 0.0
        %2049 = vmatpush1.msra.mxu0 %v2037
        %2050 = vmatprep.subr.mxu0 0.0
        %2051 = vmatpush1.msra.mxu0 0.0
        %2052 = vmatprep.subr.mxu0 0.0
        %2053 = vmatpush1.msra.mxu0 0.0
        %2054 = vmatprep.subr.mxu0 0.0
        %2055 = vmatpush1.msra.mxu0 0.0
        %2056 = vmatprep.subr.mxu0 0.0
        %2057 = vmatpush1.msra.mxu0 0.0
        %2058 = vmatprep.subr.mxu0 0.0
        %2059 = vmatpush1.msra.mxu0 0.0
        %2060 = vmatprep.subr.mxu0 0.0
        %2061 = vmatpush1.msra.mxu0 0.0
        %2062 = vmatprep.subr.mxu0 0.0
        %2063 = vmatpush1.msra.mxu0 0.0
        %2064 = vmatprep.subr.mxu0 0.0
        %2065 = vmatpush1.msra.mxu0 0.0
        %2066 = vmatprep.subr.mxu0 0.0
        %2067 = vmatpush1.msra.mxu0 0.0
        %2068 = vmatprep.subr.mxu0 0.0
        %2069 = vmatpush1.msra.mxu0 0.0
        %2070 = vmatprep.subr.mxu0 0.0
        %2071 = vmatpush1.msra.mxu0 0.0
        %2072 = vmatprep.subr.mxu0 0.0
        %2073 = vmatpush1.msra.mxu0 0.0
        %2074 = vmatprep.subr.mxu0 0.0
        %2075 = vmatpush1.msra.mxu0 0.0
        %2076 = vmatprep.subr.mxu0 0.0
        %2077 = vmatpush1.msra.mxu0 0.0
        %2078 = vmatprep.subr.mxu0 0.0
        %2079 = vmatpush1.msra.mxu0 0.0
        %2080 = vmatprep.subr.mxu0 0.0
        %2081 = vmatpush1.msra.mxu0 0.0
        %2082 = vmatprep.subr.mxu0 0.0
        %2083 = vmatpush1.msra.mxu0 0.0
        %2084 = vmatprep.subr.mxu0 0.0
        %2085 = vmatpush1.msra.mxu0 0.0
        %2086 = vmatprep.subr.mxu0 0.0
        %2087 = vmatpush1.msra.mxu0 0.0
        %2088 = vmatprep.subr.mxu0 0.0
        %2089 = vmatpush1.msra.mxu0 0.0
        %2090 = vmatprep.subr.mxu0 0.0
        %2091 = vmatpush1.msra.mxu0 0.0
        %2092 = vmatprep.subr.mxu0 0.0
        %2093 = vmatpush1.msra.mxu0 0.0
        %2094 = vmatprep.subr.mxu0 0.0
        %2095 = vmatpush1.msra.mxu0 0.0
        %2096 = vmatprep.subr.mxu0 0.0
        %2097 = vmatpush1.msra.mxu0 0.0
        %2098 = vmatprep.subr.mxu0 0.0
        %2099 = vmatpush1.msra.mxu0 0.0
        %2100 = vmatprep.subr.mxu0 0.0
        %2101 = vmatpush1.msra.mxu0 0.0
        %2102 = vmatprep.subr.mxu0 0.0
        %2103 = vmatpush1.msra.mxu0 0.0
        %2104 = vmatprep.subr.mxu0 0.0
        %2105 = vmatpush1.msra.mxu0 0.0
        %2106 = vmatprep.subr.mxu0 0.0
        %2107 = vmatpush1.msra.mxu0 0.0
        %2108 = vmatprep.subr.mxu0 0.0
        %2109 = vmatpush1.msra.mxu0 0.0
        %2110 = vmatprep.mubr.f32.mxu0 0.0
        %2111 = vmatmul.mubr.f32.gmra.mrb[0].mxu0 %v2041
        %v2112 = vpop.f32.mrb[0].mxu0
        %v2113 = vadd.f32 0.0, %v2112
        %v2114 = vpop.f32.mrb[0].mxu0
        %2115 = vmatprep.mubr.f32.mxu0 0.0
        %2116 = vmatmul.mubr.f32.gmra.mrb[0].mxu0 %v2044
        %v2117 = vpop.f32.mrb[0].mxu0
        %v2118 = vadd.f32 0.0, %v2117
        %v2119 = vpop.f32.mrb[0].mxu0
        %2120 = vdwg.mxu0
        %v2122 = vsel %vm1238, %v2027, 0
        %v2125 = vsel %vm1238, %v2028, 0
        %2127 = vmatprep.subr.mxu0 0.0
        %2128 = vmatpush1.msra.mxu0 %v2024
        %2129 = vmatprep.subr.mxu0 0.0
        %2130 = vmatpush1.msra.mxu0 %v2025
        %2131 = vmatprep.subr.mxu0 0.0
        %2132 = vmatpush1.msra.mxu0 0.0
        %2133 = vmatprep.subr.mxu0 0.0
        %2134 = vmatpush1.msra.mxu0 0.0
        %2135 = vmatprep.subr.mxu0 0.0
        %2136 = vmatpush1.msra.mxu0 0.0
        %2137 = vmatprep.subr.mxu0 0.0
        %2138 = vmatpush1.msra.mxu0 0.0
        %2139 = vmatprep.subr.mxu0 0.0
        %2140 = vmatpush1.msra.mxu0 0.0
        %2141 = vmatprep.subr.mxu0 0.0
        %2142 = vmatpush1.msra.mxu0 0.0
        %2143 = vmatprep.subr.mxu0 0.0
        %2144 = vmatpush1.msra.mxu0 0.0
        %2145 = vmatprep.subr.mxu0 0.0
        %2146 = vmatpush1.msra.mxu0 0.0
        %2147 = vmatprep.subr.mxu0 0.0
        %2148 = vmatpush1.msra.mxu0 0.0
        %2149 = vmatprep.subr.mxu0 0.0
        %2150 = vmatpush1.msra.mxu0 0.0
        %2151 = vmatprep.subr.mxu0 0.0
        %2152 = vmatpush1.msra.mxu0 0.0
        %2153 = vmatprep.subr.mxu0 0.0
        %2154 = vmatpush1.msra.mxu0 0.0
        %2155 = vmatprep.subr.mxu0 0.0
        %2156 = vmatpush1.msra.mxu0 0.0
        %2157 = vmatprep.subr.mxu0 0.0
        %2158 = vmatpush1.msra.mxu0 0.0
        %2159 = vmatprep.subr.mxu0 0.0
        %2160 = vmatpush1.msra.mxu0 0.0
        %2161 = vmatprep.subr.mxu0 0.0
        %2162 = vmatpush1.msra.mxu0 0.0
        %2163 = vmatprep.subr.mxu0 0.0
        %2164 = vmatpush1.msra.mxu0 0.0
        %2165 = vmatprep.subr.mxu0 0.0
        %2166 = vmatpush1.msra.mxu0 0.0
        %2167 = vmatprep.subr.mxu0 0.0
        %2168 = vmatpush1.msra.mxu0 0.0
        %2169 = vmatprep.subr.mxu0 0.0
        %2170 = vmatpush1.msra.mxu0 0.0
        %2171 = vmatprep.subr.mxu0 0.0
        %2172 = vmatpush1.msra.mxu0 0.0
        %2173 = vmatprep.subr.mxu0 0.0
        %2174 = vmatpush1.msra.mxu0 0.0
        %2175 = vmatprep.subr.mxu0 0.0
        %2176 = vmatpush1.msra.mxu0 0.0
        %2177 = vmatprep.subr.mxu0 0.0
        %2178 = vmatpush1.msra.mxu0 0.0
        %2179 = vmatprep.subr.mxu0 0.0
        %2180 = vmatpush1.msra.mxu0 0.0
        %2181 = vmatprep.subr.mxu0 0.0
        %2182 = vmatpush1.msra.mxu0 0.0
        %2183 = vmatprep.subr.mxu0 0.0
        %2184 = vmatpush1.msra.mxu0 0.0
        %2185 = vmatprep.subr.mxu0 0.0
        %2186 = vmatpush1.msra.mxu0 0.0
        %2187 = vmatprep.subr.mxu0 0.0
        %2188 = vmatpush1.msra.mxu0 0.0
        %2189 = vmatprep.subr.mxu0 0.0
        %2190 = vmatpush1.msra.mxu0 0.0
        %2191 = vmatprep.mubr.f32.mxu0 0.0
        %2192 = vmatmul.mubr.f32.gmra.mrb[0].mxu0 %v2122
        %v2193 = vpop.f32.mrb[0].mxu0
        %v2194 = vadd.f32 %v2113, %v2193
        %v2195 = vpop.f32.mrb[0].mxu0
        %2196 = vmatprep.mubr.f32.mxu0 0.0
        %2197 = vmatmul.mubr.f32.gmra.mrb[0].mxu0 %v2125
        %v2198 = vpop.f32.mrb[0].mxu0
        %v2199 = vadd.f32 %v2118, %v2198
        %v2200 = vpop.f32.mrb[0].mxu0
        %2201 = vdwg.mxu0
        %s2202 = scalar_lea.vmem %s7, 128
        %v2203 = vld [vmem:[%s2202] sm:$0xff]
        %v2204 = vld [vmem:[%s2202 + $0x8] sm:$0xff]
        %2205 = vrot.lane.b32.xlu0 %v2024, 120
        %v2206 = vpop.permute.xlu0 %2205
        %2207 = vrot.lane.b32.xlu0 %v2025, 120
        %v2208 = vpop.permute.xlu0 %2207
        %v2212 = vsel %vm1238, %v2203, 0
        %v2215 = vsel %vm1238, %v2204, 0
        %2217 = vmatprep.subr.mxu0 0.0
        %2218 = vmatpush1.msra.mxu0 %v2206
        %2219 = vmatprep.subr.mxu0 0.0
        %2220 = vmatpush1.msra.mxu0 %v2208
        %2221 = vmatprep.subr.mxu0 0.0
        %2222 = vmatpush1.msra.mxu0 0.0
        %2223 = vmatprep.subr.mxu0 0.0
        %2224 = vmatpush1.msra.mxu0 0.0
        %2225 = vmatprep.subr.mxu0 0.0
        %2226 = vmatpush1.msra.mxu0 0.0
        %2227 = vmatprep.subr.mxu0 0.0
        %2228 = vmatpush1.msra.mxu0 0.0
        %2229 = vmatprep.subr.mxu0 0.0
        %2230 = vmatpush1.msra.mxu0 0.0
        %2231 = vmatprep.subr.mxu0 0.0
        %2232 = vmatpush1.msra.mxu0 0.0
        %2233 = vmatprep.subr.mxu0 0.0
        %2234 = vmatpush1.msra.mxu0 0.0
        %2235 = vmatprep.subr.mxu0 0.0
        %2236 = vmatpush1.msra.mxu0 0.0
        %2237 = vmatprep.subr.mxu0 0.0
        %2238 = vmatpush1.msra.mxu0 0.0
        %2239 = vmatprep.subr.mxu0 0.0
        %2240 = vmatpush1.msra.mxu0 0.0
        %2241 = vmatprep.subr.mxu0 0.0
        %2242 = vmatpush1.msra.mxu0 0.0
        %2243 = vmatprep.subr.mxu0 0.0
        %2244 = vmatpush1.msra.mxu0 0.0
        %2245 = vmatprep.subr.mxu0 0.0
        %2246 = vmatpush1.msra.mxu0 0.0
        %2247 = vmatprep.subr.mxu0 0.0
        %2248 = vmatpush1.msra.mxu0 0.0
        %2249 = vmatprep.subr.mxu0 0.0
        %2250 = vmatpush1.msra.mxu0 0.0
        %2251 = vmatprep.subr.mxu0 0.0
        %2252 = vmatpush1.msra.mxu0 0.0
        %2253 = vmatprep.subr.mxu0 0.0
        %2254 = vmatpush1.msra.mxu0 0.0
        %2255 = vmatprep.subr.mxu0 0.0
        %2256 = vmatpush1.msra.mxu0 0.0
        %2257 = vmatprep.subr.mxu0 0.0
        %2258 = vmatpush1.msra.mxu0 0.0
        %2259 = vmatprep.subr.mxu0 0.0
        %2260 = vmatpush1.msra.mxu0 0.0
        %2261 = vmatprep.subr.mxu0 0.0
        %2262 = vmatpush1.msra.mxu0 0.0
        %2263 = vmatprep.subr.mxu0 0.0
        %2264 = vmatpush1.msra.mxu0 0.0
        %2265 = vmatprep.subr.mxu0 0.0
        %2266 = vmatpush1.msra.mxu0 0.0
        %2267 = vmatprep.subr.mxu0 0.0
        %2268 = vmatpush1.msra.mxu0 0.0
        %2269 = vmatprep.subr.mxu0 0.0
        %2270 = vmatpush1.msra.mxu0 0.0
        %2271 = vmatprep.subr.mxu0 0.0
        %2272 = vmatpush1.msra.mxu0 0.0
        %2273 = vmatprep.subr.mxu0 0.0
        %2274 = vmatpush1.msra.mxu0 0.0
        %2275 = vmatprep.subr.mxu0 0.0
        %2276 = vmatpush1.msra.mxu0 0.0
        %2277 = vmatprep.subr.mxu0 0.0
        %2278 = vmatpush1.msra.mxu0 0.0
        %2279 = vmatprep.subr.mxu0 0.0
        %2280 = vmatpush1.msra.mxu0 0.0
        %2281 = vmatprep.mubr.f32.mxu0 0.0
        %2282 = vmatmul.mubr.f32.gmra.mrb[0].mxu0 %v2212
        %v2283 = vpop.f32.mrb[0].mxu0
        %v2284 = vadd.f32 0.0, %v2283
        %v2285 = vpop.f32.mrb[0].mxu0
        %2286 = vmatprep.mubr.f32.mxu0 0.0
        %2287 = vmatmul.mubr.f32.gmra.mrb[0].mxu0 %v2215
        %v2288 = vpop.f32.mrb[0].mxu0
        %v2289 = vadd.f32 0.0, %v2288
        %v2290 = vpop.f32.mrb[0].mxu0
        %2291 = vdwg.mxu0
        %v2292 = vadd.f32 %v2194, %v2284
        %v2293 = vadd.f32 %v2199, %v2289
        %s2294 = scalar_lea.vmem %s9, 32
        %v2295 = vld [vmem:[%s2294] sm:$0xff]
        %v2296 = vld [vmem:[%s2294 + $0x8] sm:$0xff]
        %2298 = vset.pattern.permute.xlu0 0
        %2299 = vperm.xlu0 %2298, %v2295
        %v2300 = vpop.permute.xlu0 %2299
        %2303 = vset.pattern.permute.xlu0 0
        %2304 = vperm.xlu0 %2303, %v2296
        %v2305 = vpop.permute.xlu0 %2304
        %v2307 = vadd.f32 %v2292, %v2300
        %v2308 = vadd.f32 %v2293, %v2305
        %v2309 = vmax.f32 %v2307, 0.0
        %v2310 = vmax.f32 %v2308, 0.0
        %s2311 = scalar_lea.vmem %s11, 32
        %v2312 = vld [vmem:[%s2311] sm:$0xff]
        %v2313 = vld [vmem:[%s2311 + $0x8] sm:$0xff]
        %s2314 = scalar_lea.vmem %s13, 32
        %v2315 = vld [vmem:[%s2314] sm:$0xff]
        %v2316 = vld [vmem:[%s2314 + $0x8] sm:$0xff]
        %2318 = vset.pattern.permute.xlu0 0
        %2319 = vperm.xlu0 %2318, %v2315
        %v2320 = vpop.permute.xlu0 %2319
        %2323 = vset.pattern.permute.xlu0 0
        %2324 = vperm.xlu0 %2323, %v2316
        %v2325 = vpop.permute.xlu0 %2324
        %v2328 = vsel %vm1238, %v2312, 0
        %v2331 = vsel %vm1238, %v2313, 0
        %2333 = vmatprep.subr.mxu0 0.0
        %2334 = vmatpush1.msra.mxu0 %v2309
        %2335 = vmatprep.subr.mxu0 0.0
        %2336 = vmatpush1.msra.mxu0 %v2310
        %2337 = vmatprep.subr.mxu0 0.0
        %2338 = vmatpush1.msra.mxu0 0.0
        %2339 = vmatprep.subr.mxu0 0.0
        %2340 = vmatpush1.msra.mxu0 0.0
        %2341 = vmatprep.subr.mxu0 0.0
        %2342 = vmatpush1.msra.mxu0 0.0
        %2343 = vmatprep.subr.mxu0 0.0
        %2344 = vmatpush1.msra.mxu0 0.0
        %2345 = vmatprep.subr.mxu0 0.0
        %2346 = vmatpush1.msra.mxu0 0.0
        %2347 = vmatprep.subr.mxu0 0.0
        %2348 = vmatpush1.msra.mxu0 0.0
        %2349 = vmatprep.subr.mxu0 0.0
        %2350 = vmatpush1.msra.mxu0 0.0
        %2351 = vmatprep.subr.mxu0 0.0
        %2352 = vmatpush1.msra.mxu0 0.0
        %2353 = vmatprep.subr.mxu0 0.0
        %2354 = vmatpush1.msra.mxu0 0.0
        %2355 = vmatprep.subr.mxu0 0.0
        %2356 = vmatpush1.msra.mxu0 0.0
        %2357 = vmatprep.subr.mxu0 0.0
        %2358 = vmatpush1.msra.mxu0 0.0
        %2359 = vmatprep.subr.mxu0 0.0
        %2360 = vmatpush1.msra.mxu0 0.0
        %2361 = vmatprep.subr.mxu0 0.0
        %2362 = vmatpush1.msra.mxu0 0.0
        %2363 = vmatprep.subr.mxu0 0.0
        %2364 = vmatpush1.msra.mxu0 0.0
        %2365 = vmatprep.subr.mxu0 0.0
        %2366 = vmatpush1.msra.mxu0 0.0
        %2367 = vmatprep.subr.mxu0 0.0
        %2368 = vmatpush1.msra.mxu0 0.0
        %2369 = vmatprep.subr.mxu0 0.0
        %2370 = vmatpush1.msra.mxu0 0.0
        %2371 = vmatprep.subr.mxu0 0.0
        %2372 = vmatpush1.msra.mxu0 0.0
        %2373 = vmatprep.subr.mxu0 0.0
        %2374 = vmatpush1.msra.mxu0 0.0
        %2375 = vmatprep.subr.mxu0 0.0
        %2376 = vmatpush1.msra.mxu0 0.0
        %2377 = vmatprep.subr.mxu0 0.0
        %2378 = vmatpush1.msra.mxu0 0.0
        %2379 = vmatprep.subr.mxu0 0.0
        %2380 = vmatpush1.msra.mxu0 0.0
        %2381 = vmatprep.subr.mxu0 0.0
        %2382 = vmatpush1.msra.mxu0 0.0
        %2383 = vmatprep.subr.mxu0 0.0
        %2384 = vmatpush1.msra.mxu0 0.0
        %2385 = vmatprep.subr.mxu0 0.0
        %2386 = vmatpush1.msra.mxu0 0.0
        %2387 = vmatprep.subr.mxu0 0.0
        %2388 = vmatpush1.msra.mxu0 0.0
        %2389 = vmatprep.subr.mxu0 0.0
        %2390 = vmatpush1.msra.mxu0 0.0
        %2391 = vmatprep.subr.mxu0 0.0
        %2392 = vmatpush1.msra.mxu0 0.0
        %2393 = vmatprep.subr.mxu0 0.0
        %2394 = vmatpush1.msra.mxu0 0.0
        %2395 = vmatprep.subr.mxu0 0.0
        %2396 = vmatpush1.msra.mxu0 0.0
        %2397 = vmatprep.mubr.f32.mxu0 0.0
        %2398 = vmatmul.mubr.f32.gmra.mrb[0].mxu0 %v2328
        %v2399 = vpop.f32.mrb[0].mxu0
        %v2400 = vadd.f32 %v2320, %v2399
        %v2401 = vpop.f32.mrb[0].mxu0
        %2402 = vmatprep.mubr.f32.mxu0 0.0
        %2403 = vmatmul.mubr.f32.gmra.mrb[0].mxu0 %v2331
        %v2404 = vpop.f32.mrb[0].mxu0
        %v2405 = vadd.f32 %v2325, %v2404
        %v2406 = vpop.f32.mrb[0].mxu0
        %2407 = vdwg.mxu0
        %2410 = vrot.lane.b32.xlu0 %v2400, 8
        %v2411 = vpop.permute.xlu0 %2410
        %2412 = vrot.lane.b32.xlu0 %v2405, 8
        %v2413 = vpop.permute.xlu0 %2412
        %v2416 = vadd.f32 %v2024, %v2411
        %v2417 = vadd.f32 %v2025, %v2413
        %2418 = vst.msk [vmem:[#allocation2] sm:$0xff] %vm1220, %v2416
        %2419 = vst.msk [vmem:[#allocation2 + $0x8] sm:$0xff] %vm1220, %v2417
        %v2420 = vld [vmem:[#allocation2] sm:$0xff]
        %v2421 = vld [vmem:[#allocation2 + $0x8] sm:$0xff]
        %v2422 = vld [vmem:[#allocation6] sm:$0xff]
        %v2423 = vld [vmem:[%s17] sm:$0xff]
        %2425 = vset.pattern.permute.xlu0 0
        %2426 = vperm.xlu0 %2425, %v2423
        %v2427 = vpop.permute.xlu0 %2426
        %2431 = vrot.lane.b32.xlu0 %v2420, 120
        %v2432 = vpop.permute.xlu0 %2431
        %2433 = vrot.lane.b32.xlu0 %v2421, 120
        %v2434 = vpop.permute.xlu0 %2433
        %v2438 = vsel %vm1238, %v2422, 0
        %2440 = vmatprep.subr.mxu0 0.0
        %2441 = vmatpush1.msra.mxu0 %v2432
        %2442 = vmatprep.subr.mxu0 0.0
        %2443 = vmatpush1.msra.mxu0 %v2434
        %2444 = vmatprep.subr.mxu0 0.0
        %2445 = vmatpush1.msra.mxu0 0.0
        %2446 = vmatprep.subr.mxu0 0.0
        %2447 = vmatpush1.msra.mxu0 0.0
        %2448 = vmatprep.subr.mxu0 0.0
        %2449 = vmatpush1.msra.mxu0 0.0
        %2450 = vmatprep.subr.mxu0 0.0
        %2451 = vmatpush1.msra.mxu0 0.0
        %2452 = vmatprep.subr.mxu0 0.0
        %2453 = vmatpush1.msra.mxu0 0.0
        %2454 = vmatprep.subr.mxu0 0.0
        %2455 = vmatpush1.msra.mxu0 0.0
        %2456 = vmatprep.subr.mxu0 0.0
        %2457 = vmatpush1.msra.mxu0 0.0
        %2458 = vmatprep.subr.mxu0 0.0
        %2459 = vmatpush1.msra.mxu0 0.0
        %2460 = vmatprep.subr.mxu0 0.0
        %2461 = vmatpush1.msra.mxu0 0.0
        %2462 = vmatprep.subr.mxu0 0.0
        %2463 = vmatpush1.msra.mxu0 0.0
        %2464 = vmatprep.subr.mxu0 0.0
        %2465 = vmatpush1.msra.mxu0 0.0
        %2466 = vmatprep.subr.mxu0 0.0
        %2467 = vmatpush1.msra.mxu0 0.0
        %2468 = vmatprep.subr.mxu0 0.0
        %2469 = vmatpush1.msra.mxu0 0.0
        %2470 = vmatprep.subr.mxu0 0.0
        %2471 = vmatpush1.msra.mxu0 0.0
        %2472 = vmatprep.subr.mxu0 0.0
        %2473 = vmatpush1.msra.mxu0 0.0
        %2474 = vmatprep.subr.mxu0 0.0
        %2475 = vmatpush1.msra.mxu0 0.0
        %2476 = vmatprep.subr.mxu0 0.0
        %2477 = vmatpush1.msra.mxu0 0.0
        %2478 = vmatprep.subr.mxu0 0.0
        %2479 = vmatpush1.msra.mxu0 0.0
        %2480 = vmatprep.subr.mxu0 0.0
        %2481 = vmatpush1.msra.mxu0 0.0
        %2482 = vmatprep.subr.mxu0 0.0
        %2483 = vmatpush1.msra.mxu0 0.0
        %2484 = vmatprep.subr.mxu0 0.0
        %2485 = vmatpush1.msra.mxu0 0.0
        %2486 = vmatprep.subr.mxu0 0.0
        %2487 = vmatpush1.msra.mxu0 0.0
        %2488 = vmatprep.subr.mxu0 0.0
        %2489 = vmatpush1.msra.mxu0 0.0
        %2490 = vmatprep.subr.mxu0 0.0
        %2491 = vmatpush1.msra.mxu0 0.0
        %2492 = vmatprep.subr.mxu0 0.0
        %2493 = vmatpush1.msra.mxu0 0.0
        %2494 = vmatprep.subr.mxu0 0.0
        %2495 = vmatpush1.msra.mxu0 0.0
        %2496 = vmatprep.subr.mxu0 0.0
        %2497 = vmatpush1.msra.mxu0 0.0
        %2498 = vmatprep.subr.mxu0 0.0
        %2499 = vmatpush1.msra.mxu0 0.0
        %2500 = vmatprep.subr.mxu0 0.0
        %2501 = vmatpush1.msra.mxu0 0.0
        %2502 = vmatprep.subr.mxu0 0.0
        %2503 = vmatpush1.msra.mxu0 0.0
        %2504 = vmatprep.mubr.f32.mxu0 0.0
        %2505 = vmatmul.mubr.f32.gmra.mrb[0].mxu0 %v2438
        %v2506 = vpop.f32.mrb[0].mxu0
        %v2507 = vadd.f32 %v2427, %v2506
        %v2508 = vpop.f32.mrb[0].mxu0
        %2509 = vdwg.mxu0
        %vm2510 = vcmask 261120
        %2511 = vst.msk [vmem:[%s1050] sm:$0xff] %vm2510, %v2432
        %2512 = vst.msk [vmem:[%s1050 + $0x8] sm:$0xff] %vm2510, %v2434
        %2513 = vst.msk [vmem:[%s1057] sm:$0xff] %vm2510, %v2507
        %v2514 = vld [vmem:[%s19] sm:$0xff]
        %v2515 = vld [vmem:[%s19 + $0x8] sm:$0xff]
        %v2516 = vld [vmem:[%s21] sm:$0xff]
        %v2517 = vld [vmem:[%s21 + $0x8] sm:$0xff]
        %2519 = vset.pattern.permute.xlu0 0
        %2520 = vperm.xlu0 %2519, %v2516
        %v2521 = vpop.permute.xlu0 %2520
        %2524 = vset.pattern.permute.xlu0 0
        %2525 = vperm.xlu0 %2524, %v2517
        %v2526 = vpop.permute.xlu0 %2525
        %v2529 = vsel %vm1107, %v2514, 0
        %v2532 = vsel %vm1107, %v2515, 0
        %2534 = vmatprep.subr.mxu0 0.0
        %2535 = vmatpush1.msra.mxu0 %v2507
        %2536 = vmatprep.subr.mxu0 0.0
        %2537 = vmatpush1.msra.mxu0 0.0
        %2538 = vmatprep.subr.mxu0 0.0
        %2539 = vmatpush1.msra.mxu0 0.0
        %2540 = vmatprep.subr.mxu0 0.0
        %2541 = vmatpush1.msra.mxu0 0.0
        %2542 = vmatprep.subr.mxu0 0.0
        %2543 = vmatpush1.msra.mxu0 0.0
        %2544 = vmatprep.subr.mxu0 0.0
        %2545 = vmatpush1.msra.mxu0 0.0
        %2546 = vmatprep.subr.mxu0 0.0
        %2547 = vmatpush1.msra.mxu0 0.0
        %2548 = vmatprep.subr.mxu0 0.0
        %2549 = vmatpush1.msra.mxu0 0.0
        %2550 = vmatprep.subr.mxu0 0.0
        %2551 = vmatpush1.msra.mxu0 0.0
        %2552 = vmatprep.subr.mxu0 0.0
        %2553 = vmatpush1.msra.mxu0 0.0
        %2554 = vmatprep.subr.mxu0 0.0
        %2555 = vmatpush1.msra.mxu0 0.0
        %2556 = vmatprep.subr.mxu0 0.0
        %2557 = vmatpush1.msra.mxu0 0.0
        %2558 = vmatprep.subr.mxu0 0.0
        %2559 = vmatpush1.msra.mxu0 0.0
        %2560 = vmatprep.subr.mxu0 0.0
        %2561 = vmatpush1.msra.mxu0 0.0
        %2562 = vmatprep.subr.mxu0 0.0
        %2563 = vmatpush1.msra.mxu0 0.0
        %2564 = vmatprep.subr.mxu0 0.0
        %2565 = vmatpush1.msra.mxu0 0.0
        %2566 = vmatprep.subr.mxu0 0.0
        %2567 = vmatpush1.msra.mxu0 0.0
        %2568 = vmatprep.subr.mxu0 0.0
        %2569 = vmatpush1.msra.mxu0 0.0
        %2570 = vmatprep.subr.mxu0 0.0
        %2571 = vmatpush1.msra.mxu0 0.0
        %2572 = vmatprep.subr.mxu0 0.0
        %2573 = vmatpush1.msra.mxu0 0.0
        %2574 = vmatprep.subr.mxu0 0.0
        %2575 = vmatpush1.msra.mxu0 0.0
        %2576 = vmatprep.subr.mxu0 0.0
        %2577 = vmatpush1.msra.mxu0 0.0
        %2578 = vmatprep.subr.mxu0 0.0
        %2579 = vmatpush1.msra.mxu0 0.0
        %2580 = vmatprep.subr.mxu0 0.0
        %2581 = vmatpush1.msra.mxu0 0.0
        %2582 = vmatprep.subr.mxu0 0.0
        %2583 = vmatpush1.msra.mxu0 0.0
        %2584 = vmatprep.subr.mxu0 0.0
        %2585 = vmatpush1.msra.mxu0 0.0
        %2586 = vmatprep.subr.mxu0 0.0
        %2587 = vmatpush1.msra.mxu0 0.0
        %2588 = vmatprep.subr.mxu0 0.0
        %2589 = vmatpush1.msra.mxu0 0.0
        %2590 = vmatprep.subr.mxu0 0.0
        %2591 = vmatpush1.msra.mxu0 0.0
        %2592 = vmatprep.subr.mxu0 0.0
        %2593 = vmatpush1.msra.mxu0 0.0
        %2594 = vmatprep.subr.mxu0 0.0
        %2595 = vmatpush1.msra.mxu0 0.0
        %2596 = vmatprep.subr.mxu0 0.0
        %2597 = vmatpush1.msra.mxu0 0.0
        %2598 = vmatprep.mubr.f32.mxu0 0.0
        %2599 = vmatmul.mubr.f32.gmra.mrb[0].mxu0 %v2529
        %v2600 = vpop.f32.mrb[0].mxu0
        %v2601 = vadd.f32 %v2521, %v2600
        %v2602 = vpop.f32.mrb[0].mxu0
        %2603 = vmatprep.mubr.f32.mxu0 0.0
        %2604 = vmatmul.mubr.f32.gmra.mrb[0].mxu0 %v2532
        %v2605 = vpop.f32.mrb[0].mxu0
        %v2606 = vadd.f32 %v2526, %v2605
        %v2607 = vpop.f32.mrb[0].mxu0
        %2608 = vdwg.mxu0
        %2611 = vrot.lane.b32.xlu0 %v2601, 8
        %v2612 = vpop.permute.xlu0 %2611
        %2613 = vrot.lane.b32.xlu0 %v2606, 8
        %v2614 = vpop.permute.xlu0 %2613
        %2617 = vst.msk [vmem:[#allocation2] sm:$0xff] %vm1220, %v2612
        %2618 = vst.msk [vmem:[#allocation2 + $0x8] sm:$0xff] %vm1220, %v2614
        %v2619 = vld [vmem:[#allocation2] sm:$0xff]
        %v2620 = vld [vmem:[#allocation2 + $0x8] sm:$0xff]
        %v2621 = vld [vmem:[%s23] sm:$0xff]
        %v2622 = vld [vmem:[%s23 + $0x8] sm:$0xff]
        %s2623 = scalar_lea.vmem %s23, 16
        %v2624 = vld [vmem:[%s2623] sm:$0xff]
        %v2625 = vld [vmem:[%s2623 + $0x8] sm:$0xff]
        %2628 = vrot.lane.b32.xlu0 %v2619, 121
        %v2629 = vpop.permute.xlu0 %2628
        %2630 = vrot.lane.b32.xlu0 %v2620, 121
        %v2631 = vpop.permute.xlu0 %2630
        %v2635 = vsel %vm1238, %v2624, 0
        %v2638 = vsel %vm1238, %v2625, 0
        %2640 = vmatprep.subr.mxu0 0.0
        %2641 = vmatpush1.msra.mxu0 %v2629
        %2642 = vmatprep.subr.mxu0 0.0
        %2643 = vmatpush1.msra.mxu0 %v2631
        %2644 = vmatprep.subr.mxu0 0.0
        %2645 = vmatpush1.msra.mxu0 0.0
        %2646 = vmatprep.subr.mxu0 0.0
        %2647 = vmatpush1.msra.mxu0 0.0
        %2648 = vmatprep.subr.mxu0 0.0
        %2649 = vmatpush1.msra.mxu0 0.0
        %2650 = vmatprep.subr.mxu0 0.0
        %2651 = vmatpush1.msra.mxu0 0.0
        %2652 = vmatprep.subr.mxu0 0.0
        %2653 = vmatpush1.msra.mxu0 0.0
        %2654 = vmatprep.subr.mxu0 0.0
        %2655 = vmatpush1.msra.mxu0 0.0
        %2656 = vmatprep.subr.mxu0 0.0
        %2657 = vmatpush1.msra.mxu0 0.0
        %2658 = vmatprep.subr.mxu0 0.0
        %2659 = vmatpush1.msra.mxu0 0.0
        %2660 = vmatprep.subr.mxu0 0.0
        %2661 = vmatpush1.msra.mxu0 0.0
        %2662 = vmatprep.subr.mxu0 0.0
        %2663 = vmatpush1.msra.mxu0 0.0
        %2664 = vmatprep.subr.mxu0 0.0
        %2665 = vmatpush1.msra.mxu0 0.0
        %2666 = vmatprep.subr.mxu0 0.0
        %2667 = vmatpush1.msra.mxu0 0.0
        %2668 = vmatprep.subr.mxu0 0.0
        %2669 = vmatpush1.msra.mxu0 0.0
        %2670 = vmatprep.subr.mxu0 0.0
        %2671 = vmatpush1.msra.mxu0 0.0
        %2672 = vmatprep.subr.mxu0 0.0
        %2673 = vmatpush1.msra.mxu0 0.0
        %2674 = vmatprep.subr.mxu0 0.0
        %2675 = vmatpush1.msra.mxu0 0.0
        %2676 = vmatprep.subr.mxu0 0.0
        %2677 = vmatpush1.msra.mxu0 0.0
        %2678 = vmatprep.subr.mxu0 0.0
        %2679 = vmatpush1.msra.mxu0 0.0
        %2680 = vmatprep.subr.mxu0 0.0
        %2681 = vmatpush1.msra.mxu0 0.0
        %2682 = vmatprep.subr.mxu0 0.0
        %2683 = vmatpush1.msra.mxu0 0.0
        %2684 = vmatprep.subr.mxu0 0.0
        %2685 = vmatpush1.msra.mxu0 0.0
        %2686 = vmatprep.subr.mxu0 0.0
        %2687 = vmatpush1.msra.mxu0 0.0
        %2688 = vmatprep.subr.mxu0 0.0
        %2689 = vmatpush1.msra.mxu0 0.0
        %2690 = vmatprep.subr.mxu0 0.0
        %2691 = vmatpush1.msra.mxu0 0.0
        %2692 = vmatprep.subr.mxu0 0.0
        %2693 = vmatpush1.msra.mxu0 0.0
        %2694 = vmatprep.subr.mxu0 0.0
        %2695 = vmatpush1.msra.mxu0 0.0
        %2696 = vmatprep.subr.mxu0 0.0
        %2697 = vmatpush1.msra.mxu0 0.0
        %2698 = vmatprep.subr.mxu0 0.0
        %2699 = vmatpush1.msra.mxu0 0.0
        %2700 = vmatprep.subr.mxu0 0.0
        %2701 = vmatpush1.msra.mxu0 0.0
        %2702 = vmatprep.subr.mxu0 0.0
        %2703 = vmatpush1.msra.mxu0 0.0
        %2704 = vmatprep.mubr.f32.mxu0 0.0
        %2705 = vmatmul.mubr.f32.gmra.mrb[0].mxu0 %v2635
        %v2706 = vpop.f32.mrb[0].mxu0
        %v2707 = vadd.f32 0.0, %v2706
        %v2708 = vpop.f32.mrb[0].mxu0
        %2709 = vmatprep.mubr.f32.mxu0 0.0
        %2710 = vmatmul.mubr.f32.gmra.mrb[0].mxu0 %v2638
        %v2711 = vpop.f32.mrb[0].mxu0
        %v2712 = vadd.f32 0.0, %v2711
        %v2713 = vpop.f32.mrb[0].mxu0
        %2714 = vdwg.mxu0
        %2715 = vrot.lane.b32.xlu0 %v2619, 122
        %v2716 = vpop.permute.xlu0 %2715
        %2717 = vrot.lane.b32.xlu0 %v2620, 122
        %v2718 = vpop.permute.xlu0 %2717
        %v2722 = vsel %vm1238, %v2621, 0
        %v2725 = vsel %vm1238, %v2622, 0
        %2727 = vmatprep.subr.mxu0 0.0
        %2728 = vmatpush1.msra.mxu0 %v2716
        %2729 = vmatprep.subr.mxu0 0.0
        %2730 = vmatpush1.msra.mxu0 %v2718
        %2731 = vmatprep.subr.mxu0 0.0
        %2732 = vmatpush1.msra.mxu0 0.0
        %2733 = vmatprep.subr.mxu0 0.0
        %2734 = vmatpush1.msra.mxu0 0.0
        %2735 = vmatprep.subr.mxu0 0.0
        %2736 = vmatpush1.msra.mxu0 0.0
        %2737 = vmatprep.subr.mxu0 0.0
        %2738 = vmatpush1.msra.mxu0 0.0
        %2739 = vmatprep.subr.mxu0 0.0
        %2740 = vmatpush1.msra.mxu0 0.0
        %2741 = vmatprep.subr.mxu0 0.0
        %2742 = vmatpush1.msra.mxu0 0.0
        %2743 = vmatprep.subr.mxu0 0.0
        %2744 = vmatpush1.msra.mxu0 0.0
        %2745 = vmatprep.subr.mxu0 0.0
        %2746 = vmatpush1.msra.mxu0 0.0
        %2747 = vmatprep.subr.mxu0 0.0
        %2748 = vmatpush1.msra.mxu0 0.0
        %2749 = vmatprep.subr.mxu0 0.0
        %2750 = vmatpush1.msra.mxu0 0.0
        %2751 = vmatprep.subr.mxu0 0.0
        %2752 = vmatpush1.msra.mxu0 0.0
        %2753 = vmatprep.subr.mxu0 0.0
        %2754 = vmatpush1.msra.mxu0 0.0
        %2755 = vmatprep.subr.mxu0 0.0
        %2756 = vmatpush1.msra.mxu0 0.0
        %2757 = vmatprep.subr.mxu0 0.0
        %2758 = vmatpush1.msra.mxu0 0.0
        %2759 = vmatprep.subr.mxu0 0.0
        %2760 = vmatpush1.msra.mxu0 0.0
        %2761 = vmatprep.subr.mxu0 0.0
        %2762 = vmatpush1.msra.mxu0 0.0
        %2763 = vmatprep.subr.mxu0 0.0
        %2764 = vmatpush1.msra.mxu0 0.0
        %2765 = vmatprep.subr.mxu0 0.0
        %2766 = vmatpush1.msra.mxu0 0.0
        %2767 = vmatprep.subr.mxu0 0.0
        %2768 = vmatpush1.msra.mxu0 0.0
        %2769 = vmatprep.subr.mxu0 0.0
        %2770 = vmatpush1.msra.mxu0 0.0
        %2771 = vmatprep.subr.mxu0 0.0
        %2772 = vmatpush1.msra.mxu0 0.0
        %2773 = vmatprep.subr.mxu0 0.0
        %2774 = vmatpush1.msra.mxu0 0.0
        %2775 = vmatprep.subr.mxu0 0.0
        %2776 = vmatpush1.msra.mxu0 0.0
        %2777 = vmatprep.subr.mxu0 0.0
        %2778 = vmatpush1.msra.mxu0 0.0
        %2779 = vmatprep.subr.mxu0 0.0
        %2780 = vmatpush1.msra.mxu0 0.0
        %2781 = vmatprep.subr.mxu0 0.0
        %2782 = vmatpush1.msra.mxu0 0.0
        %2783 = vmatprep.subr.mxu0 0.0
        %2784 = vmatpush1.msra.mxu0 0.0
        %2785 = vmatprep.subr.mxu0 0.0
        %2786 = vmatpush1.msra.mxu0 0.0
        %2787 = vmatprep.subr.mxu0 0.0
        %2788 = vmatpush1.msra.mxu0 0.0
        %2789 = vmatprep.subr.mxu0 0.0
        %2790 = vmatpush1.msra.mxu0 0.0
        %2791 = vmatprep.mubr.f32.mxu0 0.0
        %2792 = vmatmul.mubr.f32.gmra.mrb[0].mxu0 %v2722
        %v2793 = vpop.f32.mrb[0].mxu0
        %v2794 = vadd.f32 %v2707, %v2793
        %v2795 = vpop.f32.mrb[0].mxu0
        %2796 = vmatprep.mubr.f32.mxu0 0.0
        %2797 = vmatmul.mubr.f32.gmra.mrb[0].mxu0 %v2725
        %v2798 = vpop.f32.mrb[0].mxu0
        %v2799 = vadd.f32 %v2712, %v2798
        %v2800 = vpop.f32.mrb[0].mxu0
        %2801 = vdwg.mxu0
        %s2802 = scalar_lea.vmem %s23, 32
        %v2803 = vld [vmem:[%s2802] sm:$0xff]
        %v2804 = vld [vmem:[%s2802 + $0x8] sm:$0xff]
        %2805 = vrot.lane.b32.xlu0 %v2619, 120
        %v2806 = vpop.permute.xlu0 %2805
        %2807 = vrot.lane.b32.xlu0 %v2620, 120
        %v2808 = vpop.permute.xlu0 %2807
        %v2812 = vsel %vm1238, %v2803, 0
        %v2815 = vsel %vm1238, %v2804, 0
        %2817 = vmatprep.subr.mxu0 0.0
        %2818 = vmatpush1.msra.mxu0 %v2806
        %2819 = vmatprep.subr.mxu0 0.0
        %2820 = vmatpush1.msra.mxu0 %v2808
        %2821 = vmatprep.subr.mxu0 0.0
        %2822 = vmatpush1.msra.mxu0 0.0
        %2823 = vmatprep.subr.mxu0 0.0
        %2824 = vmatpush1.msra.mxu0 0.0
        %2825 = vmatprep.subr.mxu0 0.0
        %2826 = vmatpush1.msra.mxu0 0.0
        %2827 = vmatprep.subr.mxu0 0.0
        %2828 = vmatpush1.msra.mxu0 0.0
        %2829 = vmatprep.subr.mxu0 0.0
        %2830 = vmatpush1.msra.mxu0 0.0
        %2831 = vmatprep.subr.mxu0 0.0
        %2832 = vmatpush1.msra.mxu0 0.0
        %2833 = vmatprep.subr.mxu0 0.0
        %2834 = vmatpush1.msra.mxu0 0.0
        %2835 = vmatprep.subr.mxu0 0.0
        %2836 = vmatpush1.msra.mxu0 0.0
        %2837 = vmatprep.subr.mxu0 0.0
        %2838 = vmatpush1.msra.mxu0 0.0
        %2839 = vmatprep.subr.mxu0 0.0
        %2840 = vmatpush1.msra.mxu0 0.0
        %2841 = vmatprep.subr.mxu0 0.0
        %2842 = vmatpush1.msra.mxu0 0.0
        %2843 = vmatprep.subr.mxu0 0.0
        %2844 = vmatpush1.msra.mxu0 0.0
        %2845 = vmatprep.subr.mxu0 0.0
        %2846 = vmatpush1.msra.mxu0 0.0
        %2847 = vmatprep.subr.mxu0 0.0
        %2848 = vmatpush1.msra.mxu0 0.0
        %2849 = vmatprep.subr.mxu0 0.0
        %2850 = vmatpush1.msra.mxu0 0.0
        %2851 = vmatprep.subr.mxu0 0.0
        %2852 = vmatpush1.msra.mxu0 0.0
        %2853 = vmatprep.subr.mxu0 0.0
        %2854 = vmatpush1.msra.mxu0 0.0
        %2855 = vmatprep.subr.mxu0 0.0
        %2856 = vmatpush1.msra.mxu0 0.0
        %2857 = vmatprep.subr.mxu0 0.0
        %2858 = vmatpush1.msra.mxu0 0.0
        %2859 = vmatprep.subr.mxu0 0.0
        %2860 = vmatpush1.msra.mxu0 0.0
        %2861 = vmatprep.subr.mxu0 0.0
        %2862 = vmatpush1.msra.mxu0 0.0
        %2863 = vmatprep.subr.mxu0 0.0
        %2864 = vmatpush1.msra.mxu0 0.0
        %2865 = vmatprep.subr.mxu0 0.0
        %2866 = vmatpush1.msra.mxu0 0.0
        %2867 = vmatprep.subr.mxu0 0.0
        %2868 = vmatpush1.msra.mxu0 0.0
        %2869 = vmatprep.subr.mxu0 0.0
        %2870 = vmatpush1.msra.mxu0 0.0
        %2871 = vmatprep.subr.mxu0 0.0
        %2872 = vmatpush1.msra.mxu0 0.0
        %2873 = vmatprep.subr.mxu0 0.0
        %2874 = vmatpush1.msra.mxu0 0.0
        %2875 = vmatprep.subr.mxu0 0.0
        %2876 = vmatpush1.msra.mxu0 0.0
        %2877 = vmatprep.subr.mxu0 0.0
        %2878 = vmatpush1.msra.mxu0 0.0
        %2879 = vmatprep.subr.mxu0 0.0
        %2880 = vmatpush1.msra.mxu0 0.0
        %2881 = vmatprep.mubr.f32.mxu0 0.0
        %2882 = vmatmul.mubr.f32.gmra.mrb[0].mxu0 %v2812
        %v2883 = vpop.f32.mrb[0].mxu0
        %v2884 = vadd.f32 0.0, %v2883
        %v2885 = vpop.f32.mrb[0].mxu0
        %2886 = vmatprep.mubr.f32.mxu0 0.0
        %2887 = vmatmul.mubr.f32.gmra.mrb[0].mxu0 %v2815
        %v2888 = vpop.f32.mrb[0].mxu0
        %v2889 = vadd.f32 0.0, %v2888
        %v2890 = vpop.f32.mrb[0].mxu0
        %2891 = vdwg.mxu0
        %v2892 = vadd.f32 %v2794, %v2884
        %v2893 = vadd.f32 %v2799, %v2889
        %v2894 = vld [vmem:[%s25] sm:$0xff]
        %v2895 = vld [vmem:[%s25 + $0x8] sm:$0xff]
        %2897 = vset.pattern.permute.xlu0 0
        %2898 = vperm.xlu0 %2897, %v2894
        %v2899 = vpop.permute.xlu0 %2898
        %2902 = vset.pattern.permute.xlu0 0
        %2903 = vperm.xlu0 %2902, %v2895
        %v2904 = vpop.permute.xlu0 %2903
        %v2906 = vadd.f32 %v2892, %v2899
        %v2907 = vadd.f32 %v2893, %v2904
        %v2908 = vmax.f32 %v2906, 0.0
        %v2909 = vmax.f32 %v2907, 0.0
        %v2910 = vld [vmem:[%s27] sm:$0xff]
        %v2911 = vld [vmem:[%s27 + $0x8] sm:$0xff]
        %v2912 = vld [vmem:[%s29] sm:$0xff]
        %v2913 = vld [vmem:[%s29 + $0x8] sm:$0xff]
        %2915 = vset.pattern.permute.xlu0 0
        %2916 = vperm.xlu0 %2915, %v2912
        %v2917 = vpop.permute.xlu0 %2916
        %2920 = vset.pattern.permute.xlu0 0
        %2921 = vperm.xlu0 %2920, %v2913
        %v2922 = vpop.permute.xlu0 %2921
        %v2925 = vsel %vm1238, %v2910, 0
        %v2928 = vsel %vm1238, %v2911, 0
        %2930 = vmatprep.subr.mxu0 0.0
        %2931 = vmatpush1.msra.mxu0 %v2908
        %2932 = vmatprep.subr.mxu0 0.0
        %2933 = vmatpush1.msra.mxu0 %v2909
        %2934 = vmatprep.subr.mxu0 0.0
        %2935 = vmatpush1.msra.mxu0 0.0
        %2936 = vmatprep.subr.mxu0 0.0
        %2937 = vmatpush1.msra.mxu0 0.0
        %2938 = vmatprep.subr.mxu0 0.0
        %2939 = vmatpush1.msra.mxu0 0.0
        %2940 = vmatprep.subr.mxu0 0.0
        %2941 = vmatpush1.msra.mxu0 0.0
        %2942 = vmatprep.subr.mxu0 0.0
        %2943 = vmatpush1.msra.mxu0 0.0
        %2944 = vmatprep.subr.mxu0 0.0
        %2945 = vmatpush1.msra.mxu0 0.0
        %2946 = vmatprep.subr.mxu0 0.0
        %2947 = vmatpush1.msra.mxu0 0.0
        %2948 = vmatprep.subr.mxu0 0.0
        %2949 = vmatpush1.msra.mxu0 0.0
        %2950 = vmatprep.subr.mxu0 0.0
        %2951 = vmatpush1.msra.mxu0 0.0
        %2952 = vmatprep.subr.mxu0 0.0
        %2953 = vmatpush1.msra.mxu0 0.0
        %2954 = vmatprep.subr.mxu0 0.0
        %2955 = vmatpush1.msra.mxu0 0.0
        %2956 = vmatprep.subr.mxu0 0.0
        %2957 = vmatpush1.msra.mxu0 0.0
        %2958 = vmatprep.subr.mxu0 0.0
        %2959 = vmatpush1.msra.mxu0 0.0
        %2960 = vmatprep.subr.mxu0 0.0
        %2961 = vmatpush1.msra.mxu0 0.0
        %2962 = vmatprep.subr.mxu0 0.0
        %2963 = vmatpush1.msra.mxu0 0.0
        %2964 = vmatprep.subr.mxu0 0.0
        %2965 = vmatpush1.msra.mxu0 0.0
        %2966 = vmatprep.subr.mxu0 0.0
        %2967 = vmatpush1.msra.mxu0 0.0
        %2968 = vmatprep.subr.mxu0 0.0
        %2969 = vmatpush1.msra.mxu0 0.0
        %2970 = vmatprep.subr.mxu0 0.0
        %2971 = vmatpush1.msra.mxu0 0.0
        %2972 = vmatprep.subr.mxu0 0.0
        %2973 = vmatpush1.msra.mxu0 0.0
        %2974 = vmatprep.subr.mxu0 0.0
        %2975 = vmatpush1.msra.mxu0 0.0
        %2976 = vmatprep.subr.mxu0 0.0
        %2977 = vmatpush1.msra.mxu0 0.0
        %2978 = vmatprep.subr.mxu0 0.0
        %2979 = vmatpush1.msra.mxu0 0.0
        %2980 = vmatprep.subr.mxu0 0.0
        %2981 = vmatpush1.msra.mxu0 0.0
        %2982 = vmatprep.subr.mxu0 0.0
        %2983 = vmatpush1.msra.mxu0 0.0
        %2984 = vmatprep.subr.mxu0 0.0
        %2985 = vmatpush1.msra.mxu0 0.0
        %2986 = vmatprep.subr.mxu0 0.0
        %2987 = vmatpush1.msra.mxu0 0.0
        %2988 = vmatprep.subr.mxu0 0.0
        %2989 = vmatpush1.msra.mxu0 0.0
        %2990 = vmatprep.subr.mxu0 0.0
        %2991 = vmatpush1.msra.mxu0 0.0
        %2992 = vmatprep.subr.mxu0 0.0
        %2993 = vmatpush1.msra.mxu0 0.0
        %2994 = vmatprep.mubr.f32.mxu0 0.0
        %2995 = vmatmul.mubr.f32.gmra.mrb[0].mxu0 %v2925
        %v2996 = vpop.f32.mrb[0].mxu0
        %v2997 = vadd.f32 %v2917, %v2996
        %v2998 = vpop.f32.mrb[0].mxu0
        %2999 = vmatprep.mubr.f32.mxu0 0.0
        %3000 = vmatmul.mubr.f32.gmra.mrb[0].mxu0 %v2928
        %v3001 = vpop.f32.mrb[0].mxu0
        %v3002 = vadd.f32 %v2922, %v3001
        %v3003 = vpop.f32.mrb[0].mxu0
        %3004 = vdwg.mxu0
        %3007 = vrot.lane.b32.xlu0 %v2997, 8
        %v3008 = vpop.permute.xlu0 %3007
        %3009 = vrot.lane.b32.xlu0 %v3002, 8
        %v3010 = vpop.permute.xlu0 %3009
        %v3013 = vadd.f32 %v2619, %v3008
        %v3014 = vadd.f32 %v2620, %v3010
        %3015 = vst.msk [vmem:[#allocation2] sm:$0xff] %vm1220, %v3013
        %3016 = vst.msk [vmem:[#allocation2 + $0x8] sm:$0xff] %vm1220, %v3014
        %v3017 = vld [vmem:[#allocation2] sm:$0xff]
        %v3018 = vld [vmem:[#allocation2 + $0x8] sm:$0xff]
        %s3019 = scalar_lea.vmem %s23, 48
        %v3020 = vld [vmem:[%s3019] sm:$0xff]
        %v3021 = vld [vmem:[%s3019 + $0x8] sm:$0xff]
        %s3022 = scalar_lea.vmem %s23, 64
        %v3023 = vld [vmem:[%s3022] sm:$0xff]
        %v3024 = vld [vmem:[%s3022 + $0x8] sm:$0xff]
        %3027 = vrot.lane.b32.xlu0 %v3017, 122
        %v3028 = vpop.permute.xlu0 %3027
        %3029 = vrot.lane.b32.xlu0 %v3018, 122
        %v3030 = vpop.permute.xlu0 %3029
        %v3034 = vsel %vm1238, %v3023, 0
        %v3037 = vsel %vm1238, %v3024, 0
        %3039 = vmatprep.subr.mxu0 0.0
        %3040 = vmatpush1.msra.mxu0 %v3028
        %3041 = vmatprep.subr.mxu0 0.0
        %3042 = vmatpush1.msra.mxu0 %v3030
        %3043 = vmatprep.subr.mxu0 0.0
        %3044 = vmatpush1.msra.mxu0 0.0
        %3045 = vmatprep.subr.mxu0 0.0
        %3046 = vmatpush1.msra.mxu0 0.0
        %3047 = vmatprep.subr.mxu0 0.0
        %3048 = vmatpush1.msra.mxu0 0.0
        %3049 = vmatprep.subr.mxu0 0.0
        %3050 = vmatpush1.msra.mxu0 0.0
        %3051 = vmatprep.subr.mxu0 0.0
        %3052 = vmatpush1.msra.mxu0 0.0
        %3053 = vmatprep.subr.mxu0 0.0
        %3054 = vmatpush1.msra.mxu0 0.0
        %3055 = vmatprep.subr.mxu0 0.0
        %3056 = vmatpush1.msra.mxu0 0.0
        %3057 = vmatprep.subr.mxu0 0.0
        %3058 = vmatpush1.msra.mxu0 0.0
        %3059 = vmatprep.subr.mxu0 0.0
        %3060 = vmatpush1.msra.mxu0 0.0
        %3061 = vmatprep.subr.mxu0 0.0
        %3062 = vmatpush1.msra.mxu0 0.0
        %3063 = vmatprep.subr.mxu0 0.0
        %3064 = vmatpush1.msra.mxu0 0.0
        %3065 = vmatprep.subr.mxu0 0.0
        %3066 = vmatpush1.msra.mxu0 0.0
        %3067 = vmatprep.subr.mxu0 0.0
        %3068 = vmatpush1.msra.mxu0 0.0
        %3069 = vmatprep.subr.mxu0 0.0
        %3070 = vmatpush1.msra.mxu0 0.0
        %3071 = vmatprep.subr.mxu0 0.0
        %3072 = vmatpush1.msra.mxu0 0.0
        %3073 = vmatprep.subr.mxu0 0.0
        %3074 = vmatpush1.msra.mxu0 0.0
        %3075 = vmatprep.subr.mxu0 0.0
        %3076 = vmatpush1.msra.mxu0 0.0
        %3077 = vmatprep.subr.mxu0 0.0
        %3078 = vmatpush1.msra.mxu0 0.0
        %3079 = vmatprep.subr.mxu0 0.0
        %3080 = vmatpush1.msra.mxu0 0.0
        %3081 = vmatprep.subr.mxu0 0.0
        %3082 = vmatpush1.msra.mxu0 0.0
        %3083 = vmatprep.subr.mxu0 0.0
        %3084 = vmatpush1.msra.mxu0 0.0
        %3085 = vmatprep.subr.mxu0 0.0
        %3086 = vmatpush1.msra.mxu0 0.0
        %3087 = vmatprep.subr.mxu0 0.0
        %3088 = vmatpush1.msra.mxu0 0.0
        %3089 = vmatprep.subr.mxu0 0.0
        %3090 = vmatpush1.msra.mxu0 0.0
        %3091 = vmatprep.subr.mxu0 0.0
        %3092 = vmatpush1.msra.mxu0 0.0
        %3093 = vmatprep.subr.mxu0 0.0
        %3094 = vmatpush1.msra.mxu0 0.0
        %3095 = vmatprep.subr.mxu0 0.0
        %3096 = vmatpush1.msra.mxu0 0.0
        %3097 = vmatprep.subr.mxu0 0.0
        %3098 = vmatpush1.msra.mxu0 0.0
        %3099 = vmatprep.subr.mxu0 0.0
        %3100 = vmatpush1.msra.mxu0 0.0
        %3101 = vmatprep.subr.mxu0 0.0
        %3102 = vmatpush1.msra.mxu0 0.0
        %3103 = vmatprep.mubr.f32.mxu0 0.0
        %3104 = vmatmul.mubr.f32.gmra.mrb[0].mxu0 %v3034
        %v3105 = vpop.f32.mrb[0].mxu0
        %v3106 = vadd.f32 0.0, %v3105
        %v3107 = vpop.f32.mrb[0].mxu0
        %3108 = vmatprep.mubr.f32.mxu0 0.0
        %3109 = vmatmul.mubr.f32.gmra.mrb[0].mxu0 %v3037
        %v3110 = vpop.f32.mrb[0].mxu0
        %v3111 = vadd.f32 0.0, %v3110
        %v3112 = vpop.f32.mrb[0].mxu0
        %3113 = vdwg.mxu0
        %3114 = vrot.lane.b32.xlu0 %v3017, 124
        %v3115 = vpop.permute.xlu0 %3114
        %3116 = vrot.lane.b32.xlu0 %v3018, 124
        %v3117 = vpop.permute.xlu0 %3116
        %v3121 = vsel %vm1238, %v3020, 0
        %v3124 = vsel %vm1238, %v3021, 0
        %3126 = vmatprep.subr.mxu0 0.0
        %3127 = vmatpush1.msra.mxu0 %v3115
        %3128 = vmatprep.subr.mxu0 0.0
        %3129 = vmatpush1.msra.mxu0 %v3117
        %3130 = vmatprep.subr.mxu0 0.0
        %3131 = vmatpush1.msra.mxu0 0.0
        %3132 = vmatprep.subr.mxu0 0.0
        %3133 = vmatpush1.msra.mxu0 0.0
        %3134 = vmatprep.subr.mxu0 0.0
        %3135 = vmatpush1.msra.mxu0 0.0
        %3136 = vmatprep.subr.mxu0 0.0
        %3137 = vmatpush1.msra.mxu0 0.0
        %3138 = vmatprep.subr.mxu0 0.0
        %3139 = vmatpush1.msra.mxu0 0.0
        %3140 = vmatprep.subr.mxu0 0.0
        %3141 = vmatpush1.msra.mxu0 0.0
        %3142 = vmatprep.subr.mxu0 0.0
        %3143 = vmatpush1.msra.mxu0 0.0
        %3144 = vmatprep.subr.mxu0 0.0
        %3145 = vmatpush1.msra.mxu0 0.0
        %3146 = vmatprep.subr.mxu0 0.0
        %3147 = vmatpush1.msra.mxu0 0.0
        %3148 = vmatprep.subr.mxu0 0.0
        %3149 = vmatpush1.msra.mxu0 0.0
        %3150 = vmatprep.subr.mxu0 0.0
        %3151 = vmatpush1.msra.mxu0 0.0
        %3152 = vmatprep.subr.mxu0 0.0
        %3153 = vmatpush1.msra.mxu0 0.0
        %3154 = vmatprep.subr.mxu0 0.0
        %3155 = vmatpush1.msra.mxu0 0.0
        %3156 = vmatprep.subr.mxu0 0.0
        %3157 = vmatpush1.msra.mxu0 0.0
        %3158 = vmatprep.subr.mxu0 0.0
        %3159 = vmatpush1.msra.mxu0 0.0
        %3160 = vmatprep.subr.mxu0 0.0
        %3161 = vmatpush1.msra.mxu0 0.0
        %3162 = vmatprep.subr.mxu0 0.0
        %3163 = vmatpush1.msra.mxu0 0.0
        %3164 = vmatprep.subr.mxu0 0.0
        %3165 = vmatpush1.msra.mxu0 0.0
        %3166 = vmatprep.subr.mxu0 0.0
        %3167 = vmatpush1.msra.mxu0 0.0
        %3168 = vmatprep.subr.mxu0 0.0
        %3169 = vmatpush1.msra.mxu0 0.0
        %3170 = vmatprep.subr.mxu0 0.0
        %3171 = vmatpush1.msra.mxu0 0.0
        %3172 = vmatprep.subr.mxu0 0.0
        %3173 = vmatpush1.msra.mxu0 0.0
        %3174 = vmatprep.subr.mxu0 0.0
        %3175 = vmatpush1.msra.mxu0 0.0
        %3176 = vmatprep.subr.mxu0 0.0
        %3177 = vmatpush1.msra.mxu0 0.0
        %3178 = vmatprep.subr.mxu0 0.0
        %3179 = vmatpush1.msra.mxu0 0.0
        %3180 = vmatprep.subr.mxu0 0.0
        %3181 = vmatpush1.msra.mxu0 0.0
        %3182 = vmatprep.subr.mxu0 0.0
        %3183 = vmatpush1.msra.mxu0 0.0
        %3184 = vmatprep.subr.mxu0 0.0
        %3185 = vmatpush1.msra.mxu0 0.0
        %3186 = vmatprep.subr.mxu0 0.0
        %3187 = vmatpush1.msra.mxu0 0.0
        %3188 = vmatprep.subr.mxu0 0.0
        %3189 = vmatpush1.msra.mxu0 0.0
        %3190 = vmatprep.mubr.f32.mxu0 0.0
        %3191 = vmatmul.mubr.f32.gmra.mrb[0].mxu0 %v3121
        %v3192 = vpop.f32.mrb[0].mxu0
        %v3193 = vadd.f32 %v3106, %v3192
        %v3194 = vpop.f32.mrb[0].mxu0
        %3195 = vmatprep.mubr.f32.mxu0 0.0
        %3196 = vmatmul.mubr.f32.gmra.mrb[0].mxu0 %v3124
        %v3197 = vpop.f32.mrb[0].mxu0
        %v3198 = vadd.f32 %v3111, %v3197
        %v3199 = vpop.f32.mrb[0].mxu0
        %3200 = vdwg.mxu0
        %s3201 = scalar_lea.vmem %s23, 80
        %v3202 = vld [vmem:[%s3201] sm:$0xff]
        %v3203 = vld [vmem:[%s3201 + $0x8] sm:$0xff]
        %3204 = vrot.lane.b32.xlu0 %v3017, 120
        %v3205 = vpop.permute.xlu0 %3204
        %3206 = vrot.lane.b32.xlu0 %v3018, 120
        %v3207 = vpop.permute.xlu0 %3206
        %v3211 = vsel %vm1238, %v3202, 0
        %v3214 = vsel %vm1238, %v3203, 0
        %3216 = vmatprep.subr.mxu0 0.0
        %3217 = vmatpush1.msra.mxu0 %v3205
        %3218 = vmatprep.subr.mxu0 0.0
        %3219 = vmatpush1.msra.mxu0 %v3207
        %3220 = vmatprep.subr.mxu0 0.0
        %3221 = vmatpush1.msra.mxu0 0.0
        %3222 = vmatprep.subr.mxu0 0.0
        %3223 = vmatpush1.msra.mxu0 0.0
        %3224 = vmatprep.subr.mxu0 0.0
        %3225 = vmatpush1.msra.mxu0 0.0
        %3226 = vmatprep.subr.mxu0 0.0
        %3227 = vmatpush1.msra.mxu0 0.0
        %3228 = vmatprep.subr.mxu0 0.0
        %3229 = vmatpush1.msra.mxu0 0.0
        %3230 = vmatprep.subr.mxu0 0.0
        %3231 = vmatpush1.msra.mxu0 0.0
        %3232 = vmatprep.subr.mxu0 0.0
        %3233 = vmatpush1.msra.mxu0 0.0
        %3234 = vmatprep.subr.mxu0 0.0
        %3235 = vmatpush1.msra.mxu0 0.0
        %3236 = vmatprep.subr.mxu0 0.0
        %3237 = vmatpush1.msra.mxu0 0.0
        %3238 = vmatprep.subr.mxu0 0.0
        %3239 = vmatpush1.msra.mxu0 0.0
        %3240 = vmatprep.subr.mxu0 0.0
        %3241 = vmatpush1.msra.mxu0 0.0
        %3242 = vmatprep.subr.mxu0 0.0
        %3243 = vmatpush1.msra.mxu0 0.0
        %3244 = vmatprep.subr.mxu0 0.0
        %3245 = vmatpush1.msra.mxu0 0.0
        %3246 = vmatprep.subr.mxu0 0.0
        %3247 = vmatpush1.msra.mxu0 0.0
        %3248 = vmatprep.subr.mxu0 0.0
        %3249 = vmatpush1.msra.mxu0 0.0
        %3250 = vmatprep.subr.mxu0 0.0
        %3251 = vmatpush1.msra.mxu0 0.0
        %3252 = vmatprep.subr.mxu0 0.0
        %3253 = vmatpush1.msra.mxu0 0.0
        %3254 = vmatprep.subr.mxu0 0.0
        %3255 = vmatpush1.msra.mxu0 0.0
        %3256 = vmatprep.subr.mxu0 0.0
        %3257 = vmatpush1.msra.mxu0 0.0
        %3258 = vmatprep.subr.mxu0 0.0
        %3259 = vmatpush1.msra.mxu0 0.0
        %3260 = vmatprep.subr.mxu0 0.0
        %3261 = vmatpush1.msra.mxu0 0.0
        %3262 = vmatprep.subr.mxu0 0.0
        %3263 = vmatpush1.msra.mxu0 0.0
        %3264 = vmatprep.subr.mxu0 0.0
        %3265 = vmatpush1.msra.mxu0 0.0
        %3266 = vmatprep.subr.mxu0 0.0
        %3267 = vmatpush1.msra.mxu0 0.0
        %3268 = vmatprep.subr.mxu0 0.0
        %3269 = vmatpush1.msra.mxu0 0.0
        %3270 = vmatprep.subr.mxu0 0.0
        %3271 = vmatpush1.msra.mxu0 0.0
        %3272 = vmatprep.subr.mxu0 0.0
        %3273 = vmatpush1.msra.mxu0 0.0
        %3274 = vmatprep.subr.mxu0 0.0
        %3275 = vmatpush1.msra.mxu0 0.0
        %3276 = vmatprep.subr.mxu0 0.0
        %3277 = vmatpush1.msra.mxu0 0.0
        %3278 = vmatprep.subr.mxu0 0.0
        %3279 = vmatpush1.msra.mxu0 0.0
        %3280 = vmatprep.mubr.f32.mxu0 0.0
        %3281 = vmatmul.mubr.f32.gmra.mrb[0].mxu0 %v3211
        %v3282 = vpop.f32.mrb[0].mxu0
        %v3283 = vadd.f32 0.0, %v3282
        %v3284 = vpop.f32.mrb[0].mxu0
        %3285 = vmatprep.mubr.f32.mxu0 0.0
        %3286 = vmatmul.mubr.f32.gmra.mrb[0].mxu0 %v3214
        %v3287 = vpop.f32.mrb[0].mxu0
        %v3288 = vadd.f32 0.0, %v3287
        %v3289 = vpop.f32.mrb[0].mxu0
        %3290 = vdwg.mxu0
        %v3291 = vadd.f32 %v3193, %v3283
        %v3292 = vadd.f32 %v3198, %v3288
        %s3293 = scalar_lea.vmem %s25, 16
        %v3294 = vld [vmem:[%s3293] sm:$0xff]
        %v3295 = vld [vmem:[%s3293 + $0x8] sm:$0xff]
        %3297 = vset.pattern.permute.xlu0 0
        %3298 = vperm.xlu0 %3297, %v3294
        %v3299 = vpop.permute.xlu0 %3298
        %3302 = vset.pattern.permute.xlu0 0
        %3303 = vperm.xlu0 %3302, %v3295
        %v3304 = vpop.permute.xlu0 %3303
        %v3306 = vadd.f32 %v3291, %v3299
        %v3307 = vadd.f32 %v3292, %v3304
        %v3308 = vmax.f32 %v3306, 0.0
        %v3309 = vmax.f32 %v3307, 0.0
        %s3310 = scalar_lea.vmem %s27, 16
        %v3311 = vld [vmem:[%s3310] sm:$0xff]
        %v3312 = vld [vmem:[%s3310 + $0x8] sm:$0xff]
        %s3313 = scalar_lea.vmem %s29, 16
        %v3314 = vld [vmem:[%s3313] sm:$0xff]
        %v3315 = vld [vmem:[%s3313 + $0x8] sm:$0xff]
        %3317 = vset.pattern.permute.xlu0 0
        %3318 = vperm.xlu0 %3317, %v3314
        %v3319 = vpop.permute.xlu0 %3318
        %3322 = vset.pattern.permute.xlu0 0
        %3323 = vperm.xlu0 %3322, %v3315
        %v3324 = vpop.permute.xlu0 %3323
        %v3327 = vsel %vm1238, %v3311, 0
        %v3330 = vsel %vm1238, %v3312, 0
        %3332 = vmatprep.subr.mxu0 0.0
        %3333 = vmatpush1.msra.mxu0 %v3308
        %3334 = vmatprep.subr.mxu0 0.0
        %3335 = vmatpush1.msra.mxu0 %v3309
        %3336 = vmatprep.subr.mxu0 0.0
        %3337 = vmatpush1.msra.mxu0 0.0
        %3338 = vmatprep.subr.mxu0 0.0
        %3339 = vmatpush1.msra.mxu0 0.0
        %3340 = vmatprep.subr.mxu0 0.0
        %3341 = vmatpush1.msra.mxu0 0.0
        %3342 = vmatprep.subr.mxu0 0.0
        %3343 = vmatpush1.msra.mxu0 0.0
        %3344 = vmatprep.subr.mxu0 0.0
        %3345 = vmatpush1.msra.mxu0 0.0
        %3346 = vmatprep.subr.mxu0 0.0
        %3347 = vmatpush1.msra.mxu0 0.0
        %3348 = vmatprep.subr.mxu0 0.0
        %3349 = vmatpush1.msra.mxu0 0.0
        %3350 = vmatprep.subr.mxu0 0.0
        %3351 = vmatpush1.msra.mxu0 0.0
        %3352 = vmatprep.subr.mxu0 0.0
        %3353 = vmatpush1.msra.mxu0 0.0
        %3354 = vmatprep.subr.mxu0 0.0
        %3355 = vmatpush1.msra.mxu0 0.0
        %3356 = vmatprep.subr.mxu0 0.0
        %3357 = vmatpush1.msra.mxu0 0.0
        %3358 = vmatprep.subr.mxu0 0.0
        %3359 = vmatpush1.msra.mxu0 0.0
        %3360 = vmatprep.subr.mxu0 0.0
        %3361 = vmatpush1.msra.mxu0 0.0
        %3362 = vmatprep.subr.mxu0 0.0
        %3363 = vmatpush1.msra.mxu0 0.0
        %3364 = vmatprep.subr.mxu0 0.0
        %3365 = vmatpush1.msra.mxu0 0.0
        %3366 = vmatprep.subr.mxu0 0.0
        %3367 = vmatpush1.msra.mxu0 0.0
        %3368 = vmatprep.subr.mxu0 0.0
        %3369 = vmatpush1.msra.mxu0 0.0
        %3370 = vmatprep.subr.mxu0 0.0
        %3371 = vmatpush1.msra.mxu0 0.0
        %3372 = vmatprep.subr.mxu0 0.0
        %3373 = vmatpush1.msra.mxu0 0.0
        %3374 = vmatprep.subr.mxu0 0.0
        %3375 = vmatpush1.msra.mxu0 0.0
        %3376 = vmatprep.subr.mxu0 0.0
        %3377 = vmatpush1.msra.mxu0 0.0
        %3378 = vmatprep.subr.mxu0 0.0
        %3379 = vmatpush1.msra.mxu0 0.0
        %3380 = vmatprep.subr.mxu0 0.0
        %3381 = vmatpush1.msra.mxu0 0.0
        %3382 = vmatprep.subr.mxu0 0.0
        %3383 = vmatpush1.msra.mxu0 0.0
        %3384 = vmatprep.subr.mxu0 0.0
        %3385 = vmatpush1.msra.mxu0 0.0
        %3386 = vmatprep.subr.mxu0 0.0
        %3387 = vmatpush1.msra.mxu0 0.0
        %3388 = vmatprep.subr.mxu0 0.0
        %3389 = vmatpush1.msra.mxu0 0.0
        %3390 = vmatprep.subr.mxu0 0.0
        %3391 = vmatpush1.msra.mxu0 0.0
        %3392 = vmatprep.subr.mxu0 0.0
        %3393 = vmatpush1.msra.mxu0 0.0
        %3394 = vmatprep.subr.mxu0 0.0
        %3395 = vmatpush1.msra.mxu0 0.0
        %3396 = vmatprep.mubr.f32.mxu0 0.0
        %3397 = vmatmul.mubr.f32.gmra.mrb[0].mxu0 %v3327
        %v3398 = vpop.f32.mrb[0].mxu0
        %v3399 = vadd.f32 %v3319, %v3398
        %v3400 = vpop.f32.mrb[0].mxu0
        %3401 = vmatprep.mubr.f32.mxu0 0.0
        %3402 = vmatmul.mubr.f32.gmra.mrb[0].mxu0 %v3330
        %v3403 = vpop.f32.mrb[0].mxu0
        %v3404 = vadd.f32 %v3324, %v3403
        %v3405 = vpop.f32.mrb[0].mxu0
        %3406 = vdwg.mxu0
        %3409 = vrot.lane.b32.xlu0 %v3399, 8
        %v3410 = vpop.permute.xlu0 %3409
        %3411 = vrot.lane.b32.xlu0 %v3404, 8
        %v3412 = vpop.permute.xlu0 %3411
        %v3415 = vadd.f32 %v3017, %v3410
        %v3416 = vadd.f32 %v3018, %v3412
        %3417 = vst.msk [vmem:[#allocation2] sm:$0xff] %vm1220, %v3415
        %3418 = vst.msk [vmem:[#allocation2 + $0x8] sm:$0xff] %vm1220, %v3416
        %v3419 = vld [vmem:[#allocation2] sm:$0xff]
        %v3420 = vld [vmem:[#allocation2 + $0x8] sm:$0xff]
        %v3421 = vld [vmem:[%s35] sm:$0xff]
        %v3422 = vld [vmem:[%s35 + $0x8] sm:$0xff]
        %v3423 = vld [vmem:[%s35 + $0x10] sm:$0xff]
        %v3424 = vld [vmem:[%s35 + $0x18] sm:$0xff]
        %3427 = vrot.lane.b32.xlu0 %v3419, 120
        %v3428 = vpop.permute.xlu0 %3427
        %3429 = vrot.lane.b32.xlu0 %v3420, 120
        %v3430 = vpop.permute.xlu0 %3429
        %v3431 = vsel %vm2510, %v3428, 0
        %v3433 = vsel %vm2510, %v3430, 0
        %3435 = vmatprep.subr.mxu0 0.0
        %3436 = vmatpush1.msra.mxu0 %v3421
        %3437 = vmatprep.subr.mxu0 0.0
        %3438 = vmatpush1.msra.mxu0 %v3422
        %3439 = vmatprep.subr.mxu0 0.0
        %3440 = vmatpush1.msra.mxu0 %v3423
        %3441 = vmatprep.subr.mxu0 0.0
        %3442 = vmatpush1.msra.mxu0 %v3424
        %3443 = vmatprep.subr.mxu0 0.0
        %3444 = vmatpush1.msra.mxu0 0.0
        %3445 = vmatprep.subr.mxu0 0.0
        %3446 = vmatpush1.msra.mxu0 0.0
        %3447 = vmatprep.subr.mxu0 0.0
        %3448 = vmatpush1.msra.mxu0 0.0
        %3449 = vmatprep.subr.mxu0 0.0
        %3450 = vmatpush1.msra.mxu0 0.0
        %3451 = vmatprep.subr.mxu0 0.0
        %3452 = vmatpush1.msra.mxu0 0.0
        %3453 = vmatprep.subr.mxu0 0.0
        %3454 = vmatpush1.msra.mxu0 0.0
        %3455 = vmatprep.subr.mxu0 0.0
        %3456 = vmatpush1.msra.mxu0 0.0
        %3457 = vmatprep.subr.mxu0 0.0
        %3458 = vmatpush1.msra.mxu0 0.0
        %3459 = vmatprep.subr.mxu0 0.0
        %3460 = vmatpush1.msra.mxu0 0.0
        %3461 = vmatprep.subr.mxu0 0.0
        %3462 = vmatpush1.msra.mxu0 0.0
        %3463 = vmatprep.subr.mxu0 0.0
        %3464 = vmatpush1.msra.mxu0 0.0
        %3465 = vmatprep.subr.mxu0 0.0
        %3466 = vmatpush1.msra.mxu0 0.0
        %3467 = vmatprep.subr.mxu0 0.0
        %3468 = vmatpush1.msra.mxu0 0.0
        %3469 = vmatprep.subr.mxu0 0.0
        %3470 = vmatpush1.msra.mxu0 0.0
        %3471 = vmatprep.subr.mxu0 0.0
        %3472 = vmatpush1.msra.mxu0 0.0
        %3473 = vmatprep.subr.mxu0 0.0
        %3474 = vmatpush1.msra.mxu0 0.0
        %3475 = vmatprep.subr.mxu0 0.0
        %3476 = vmatpush1.msra.mxu0 0.0
        %3477 = vmatprep.subr.mxu0 0.0
        %3478 = vmatpush1.msra.mxu0 0.0
        %3479 = vmatprep.subr.mxu0 0.0
        %3480 = vmatpush1.msra.mxu0 0.0
        %3481 = vmatprep.subr.mxu0 0.0
        %3482 = vmatpush1.msra.mxu0 0.0
        %3483 = vmatprep.subr.mxu0 0.0
        %3484 = vmatpush1.msra.mxu0 0.0
        %3485 = vmatprep.subr.mxu0 0.0
        %3486 = vmatpush1.msra.mxu0 0.0
        %3487 = vmatprep.subr.mxu0 0.0
        %3488 = vmatpush1.msra.mxu0 0.0
        %3489 = vmatprep.subr.mxu0 0.0
        %3490 = vmatpush1.msra.mxu0 0.0
        %3491 = vmatprep.subr.mxu0 0.0
        %3492 = vmatpush1.msra.mxu0 0.0
        %3493 = vmatprep.subr.mxu0 0.0
        %3494 = vmatpush1.msra.mxu0 0.0
        %3495 = vmatprep.subr.mxu0 0.0
        %3496 = vmatpush1.msra.mxu0 0.0
        %3497 = vmatprep.subr.mxu0 0.0
        %3498 = vmatpush1.msra.mxu0 0.0
        %3499 = vmatprep.mubr.f32.mxu0 0.0
        %3500 = vmatmul.mubr.f32.gmra.mrb[0].mxu0 %v3431
        %v3501 = vpop.f32.mrb[0].mxu0
        %v3502 = vadd.f32 0.0, %v3501
        %v3503 = vpop.f32.mrb[0].mxu0
        %3504 = vmatprep.mubr.f32.mxu0 0.0
        %3505 = vmatmul.mubr.f32.gmra.mrb[0].mxu0 %v3433
        %v3506 = vpop.f32.mrb[0].mxu0
        %v3507 = vadd.f32 0.0, %v3506
        %v3508 = vpop.f32.mrb[0].mxu0
        %3509 = vdwg.mxu0
        %v3510 = vld [vmem:[#allocation8] sm:$0xff]
        %v3511 = vld [vmem:[%s33] sm:$0xff]
        %3513 = vset.pattern.permute.xlu0 0
        %3514 = vperm.xlu0 %3513, %v3511
        %v3515 = vpop.permute.xlu0 %3514
        %v3518 = vsel %vm1238, %v3510, 0
        %3520 = vmatprep.subr.mxu0 0.0
        %3521 = vmatpush1.msra.mxu0 %v3502
        %3522 = vmatprep.subr.mxu0 0.0
        %3523 = vmatpush1.msra.mxu0 %v3507
        %3524 = vmatprep.subr.mxu0 0.0
        %3525 = vmatpush1.msra.mxu0 0.0
        %3526 = vmatprep.subr.mxu0 0.0
        %3527 = vmatpush1.msra.mxu0 0.0
        %3528 = vmatprep.subr.mxu0 0.0
        %3529 = vmatpush1.msra.mxu0 0.0
        %3530 = vmatprep.subr.mxu0 0.0
        %3531 = vmatpush1.msra.mxu0 0.0
        %3532 = vmatprep.subr.mxu0 0.0
        %3533 = vmatpush1.msra.mxu0 0.0
        %3534 = vmatprep.subr.mxu0 0.0
        %3535 = vmatpush1.msra.mxu0 0.0
        %3536 = vmatprep.subr.mxu0 0.0
        %3537 = vmatpush1.msra.mxu0 0.0
        %3538 = vmatprep.subr.mxu0 0.0
        %3539 = vmatpush1.msra.mxu0 0.0
        %3540 = vmatprep.subr.mxu0 0.0
        %3541 = vmatpush1.msra.mxu0 0.0
        %3542 = vmatprep.subr.mxu0 0.0
        %3543 = vmatpush1.msra.mxu0 0.0
        %3544 = vmatprep.subr.mxu0 0.0
        %3545 = vmatpush1.msra.mxu0 0.0
        %3546 = vmatprep.subr.mxu0 0.0
        %3547 = vmatpush1.msra.mxu0 0.0
        %3548 = vmatprep.subr.mxu0 0.0
        %3549 = vmatpush1.msra.mxu0 0.0
        %3550 = vmatprep.subr.mxu0 0.0
        %3551 = vmatpush1.msra.mxu0 0.0
        %3552 = vmatprep.subr.mxu0 0.0
        %3553 = vmatpush1.msra.mxu0 0.0
        %3554 = vmatprep.subr.mxu0 0.0
        %3555 = vmatpush1.msra.mxu0 0.0
        %3556 = vmatprep.subr.mxu0 0.0
        %3557 = vmatpush1.msra.mxu0 0.0
        %3558 = vmatprep.subr.mxu0 0.0
        %3559 = vmatpush1.msra.mxu0 0.0
        %3560 = vmatprep.subr.mxu0 0.0
        %3561 = vmatpush1.msra.mxu0 0.0
        %3562 = vmatprep.subr.mxu0 0.0
        %3563 = vmatpush1.msra.mxu0 0.0
        %3564 = vmatprep.subr.mxu0 0.0
        %3565 = vmatpush1.msra.mxu0 0.0
        %3566 = vmatprep.subr.mxu0 0.0
        %3567 = vmatpush1.msra.mxu0 0.0
        %3568 = vmatprep.subr.mxu0 0.0
        %3569 = vmatpush1.msra.mxu0 0.0
        %3570 = vmatprep.subr.mxu0 0.0
        %3571 = vmatpush1.msra.mxu0 0.0
        %3572 = vmatprep.subr.mxu0 0.0
        %3573 = vmatpush1.msra.mxu0 0.0
        %3574 = vmatprep.subr.mxu0 0.0
        %3575 = vmatpush1.msra.mxu0 0.0
        %3576 = vmatprep.subr.mxu0 0.0
        %3577 = vmatpush1.msra.mxu0 0.0
        %3578 = vmatprep.subr.mxu0 0.0
        %3579 = vmatpush1.msra.mxu0 0.0
        %3580 = vmatprep.subr.mxu0 0.0
        %3581 = vmatpush1.msra.mxu0 0.0
        %3582 = vmatprep.subr.mxu0 0.0
        %3583 = vmatpush1.msra.mxu0 0.0
        %3584 = vmatprep.mubr.f32.mxu0 0.0
        %3585 = vmatmul.mubr.f32.gmra.mrb[0].mxu0 %v3518
        %v3586 = vpop.f32.mrb[0].mxu0
        %v3587 = vadd.f32 %v3515, %v3586
        %v3588 = vpop.f32.mrb[0].mxu0
        %3589 = vdwg.mxu0
        %vm3590 = vcmask 72704
        %3591 = vst.msk [vmem:[%s1093] sm:$0xff] %vm3590, %v3502
        %3592 = vst.msk [vmem:[%s1093 + $0x8] sm:$0xff] %vm3590, %v3507
        %3593 = vst.msk [vmem:[%s1097] sm:$0xff] %vm3590, %v3587
        %v3594 = vld [vmem:[%s37] sm:$0xff]
        %v3595 = vld [vmem:[%s37 + $0x8] sm:$0xff]
        %v3596 = vld [vmem:[%s39] sm:$0xff]
        %v3597 = vld [vmem:[%s39 + $0x8] sm:$0xff]
        %3599 = vset.pattern.permute.xlu0 0
        %3600 = vperm.xlu0 %3599, %v3596
        %v3601 = vpop.permute.xlu0 %3600
        %3604 = vset.pattern.permute.xlu0 0
        %3605 = vperm.xlu0 %3604, %v3597
        %v3606 = vpop.permute.xlu0 %3605
        %v3609 = vsel %vm1107, %v3594, 0
        %v3612 = vsel %vm1107, %v3595, 0
        %3614 = vmatprep.subr.mxu0 0.0
        %3615 = vmatpush1.msra.mxu0 %v3587
        %3616 = vmatprep.subr.mxu0 0.0
        %3617 = vmatpush1.msra.mxu0 0.0
        %3618 = vmatprep.subr.mxu0 0.0
        %3619 = vmatpush1.msra.mxu0 0.0
        %3620 = vmatprep.subr.mxu0 0.0
        %3621 = vmatpush1.msra.mxu0 0.0
        %3622 = vmatprep.subr.mxu0 0.0
        %3623 = vmatpush1.msra.mxu0 0.0
        %3624 = vmatprep.subr.mxu0 0.0
        %3625 = vmatpush1.msra.mxu0 0.0
        %3626 = vmatprep.subr.mxu0 0.0
        %3627 = vmatpush1.msra.mxu0 0.0
        %3628 = vmatprep.subr.mxu0 0.0
        %3629 = vmatpush1.msra.mxu0 0.0
        %3630 = vmatprep.subr.mxu0 0.0
        %3631 = vmatpush1.msra.mxu0 0.0
        %3632 = vmatprep.subr.mxu0 0.0
        %3633 = vmatpush1.msra.mxu0 0.0
        %3634 = vmatprep.subr.mxu0 0.0
        %3635 = vmatpush1.msra.mxu0 0.0
        %3636 = vmatprep.subr.mxu0 0.0
        %3637 = vmatpush1.msra.mxu0 0.0
        %3638 = vmatprep.subr.mxu0 0.0
        %3639 = vmatpush1.msra.mxu0 0.0
        %3640 = vmatprep.subr.mxu0 0.0
        %3641 = vmatpush1.msra.mxu0 0.0
        %3642 = vmatprep.subr.mxu0 0.0
        %3643 = vmatpush1.msra.mxu0 0.0
        %3644 = vmatprep.subr.mxu0 0.0
        %3645 = vmatpush1.msra.mxu0 0.0
        %3646 = vmatprep.subr.mxu0 0.0
        %3647 = vmatpush1.msra.mxu0 0.0
        %3648 = vmatprep.subr.mxu0 0.0
        %3649 = vmatpush1.msra.mxu0 0.0
        %3650 = vmatprep.subr.mxu0 0.0
        %3651 = vmatpush1.msra.mxu0 0.0
        %3652 = vmatprep.subr.mxu0 0.0
        %3653 = vmatpush1.msra.mxu0 0.0
        %3654 = vmatprep.subr.mxu0 0.0
        %3655 = vmatpush1.msra.mxu0 0.0
        %3656 = vmatprep.subr.mxu0 0.0
        %3657 = vmatpush1.msra.mxu0 0.0
        %3658 = vmatprep.subr.mxu0 0.0
        %3659 = vmatpush1.msra.mxu0 0.0
        %3660 = vmatprep.subr.mxu0 0.0
        %3661 = vmatpush1.msra.mxu0 0.0
        %3662 = vmatprep.subr.mxu0 0.0
        %3663 = vmatpush1.msra.mxu0 0.0
        %3664 = vmatprep.subr.mxu0 0.0
        %3665 = vmatpush1.msra.mxu0 0.0
        %3666 = vmatprep.subr.mxu0 0.0
        %3667 = vmatpush1.msra.mxu0 0.0
        %3668 = vmatprep.subr.mxu0 0.0
        %3669 = vmatpush1.msra.mxu0 0.0
        %3670 = vmatprep.subr.mxu0 0.0
        %3671 = vmatpush1.msra.mxu0 0.0
        %3672 = vmatprep.subr.mxu0 0.0
        %3673 = vmatpush1.msra.mxu0 0.0
        %3674 = vmatprep.subr.mxu0 0.0
        %3675 = vmatpush1.msra.mxu0 0.0
        %3676 = vmatprep.subr.mxu0 0.0
        %3677 = vmatpush1.msra.mxu0 0.0
        %3678 = vmatprep.mubr.f32.mxu0 0.0
        %3679 = vmatmul.mubr.f32.gmra.mrb[0].mxu0 %v3609
        %v3680 = vpop.f32.mrb[0].mxu0
        %v3681 = vadd.f32 %v3601, %v3680
        %v3682 = vpop.f32.mrb[0].mxu0
        %3683 = vmatprep.mubr.f32.mxu0 0.0
        %3684 = vmatmul.mubr.f32.gmra.mrb[0].mxu0 %v3612
        %v3685 = vpop.f32.mrb[0].mxu0
        %v3686 = vadd.f32 %v3606, %v3685
        %v3687 = vpop.f32.mrb[0].mxu0
        %3688 = vdwg.mxu0
        %3691 = vrot.lane.b32.xlu0 %v3681, 8
        %v3692 = vpop.permute.xlu0 %3691
        %3693 = vrot.lane.b32.xlu0 %v3686, 8
        %v3694 = vpop.permute.xlu0 %3693
        %vm3697 = vcmask 138304
        %3698 = vst.msk [vmem:[#allocation2] sm:$0xff] %vm3697, %v3692
        %3699 = vst.msk [vmem:[#allocation2 + $0x8] sm:$0xff] %vm3697, %v3694
        %v3700 = vld [vmem:[#allocation2] sm:$0xff]
        %v3701 = vld [vmem:[#allocation2 + $0x8] sm:$0xff]
        %v3702 = vld [vmem:[%s41] sm:$0xff]
        %v3703 = vld [vmem:[%s41 + $0x8] sm:$0xff]
        %s3704 = scalar_lea.vmem %s41, 16
        %v3705 = vld [vmem:[%s3704] sm:$0xff]
        %v3706 = vld [vmem:[%s3704 + $0x8] sm:$0xff]
        %3709 = vrot.lane.b32.xlu0 %v3700, 121
        %v3710 = vpop.permute.xlu0 %3709
        %3711 = vrot.lane.b32.xlu0 %v3701, 121
        %v3712 = vpop.permute.xlu0 %3711
        %v3716 = vsel %vm1238, %v3705, 0
        %v3719 = vsel %vm1238, %v3706, 0
        %3721 = vmatprep.subr.mxu0 0.0
        %3722 = vmatpush1.msra.mxu0 %v3710
        %3723 = vmatprep.subr.mxu0 0.0
        %3724 = vmatpush1.msra.mxu0 %v3712
        %3725 = vmatprep.subr.mxu0 0.0
        %3726 = vmatpush1.msra.mxu0 0.0
        %3727 = vmatprep.subr.mxu0 0.0
        %3728 = vmatpush1.msra.mxu0 0.0
        %3729 = vmatprep.subr.mxu0 0.0
        %3730 = vmatpush1.msra.mxu0 0.0
        %3731 = vmatprep.subr.mxu0 0.0
        %3732 = vmatpush1.msra.mxu0 0.0
        %3733 = vmatprep.subr.mxu0 0.0
        %3734 = vmatpush1.msra.mxu0 0.0
        %3735 = vmatprep.subr.mxu0 0.0
        %3736 = vmatpush1.msra.mxu0 0.0
        %3737 = vmatprep.subr.mxu0 0.0
        %3738 = vmatpush1.msra.mxu0 0.0
        %3739 = vmatprep.subr.mxu0 0.0
        %3740 = vmatpush1.msra.mxu0 0.0
        %3741 = vmatprep.subr.mxu0 0.0
        %3742 = vmatpush1.msra.mxu0 0.0
        %3743 = vmatprep.subr.mxu0 0.0
        %3744 = vmatpush1.msra.mxu0 0.0
        %3745 = vmatprep.subr.mxu0 0.0
        %3746 = vmatpush1.msra.mxu0 0.0
        %3747 = vmatprep.subr.mxu0 0.0
        %3748 = vmatpush1.msra.mxu0 0.0
        %3749 = vmatprep.subr.mxu0 0.0
        %3750 = vmatpush1.msra.mxu0 0.0
        %3751 = vmatprep.subr.mxu0 0.0
        %3752 = vmatpush1.msra.mxu0 0.0
        %3753 = vmatprep.subr.mxu0 0.0
        %3754 = vmatpush1.msra.mxu0 0.0
        %3755 = vmatprep.subr.mxu0 0.0
        %3756 = vmatpush1.msra.mxu0 0.0
        %3757 = vmatprep.subr.mxu0 0.0
        %3758 = vmatpush1.msra.mxu0 0.0
        %3759 = vmatprep.subr.mxu0 0.0
        %3760 = vmatpush1.msra.mxu0 0.0
        %3761 = vmatprep.subr.mxu0 0.0
        %3762 = vmatpush1.msra.mxu0 0.0
        %3763 = vmatprep.subr.mxu0 0.0
        %3764 = vmatpush1.msra.mxu0 0.0
        %3765 = vmatprep.subr.mxu0 0.0
        %3766 = vmatpush1.msra.mxu0 0.0
        %3767 = vmatprep.subr.mxu0 0.0
        %3768 = vmatpush1.msra.mxu0 0.0
        %3769 = vmatprep.subr.mxu0 0.0
        %3770 = vmatpush1.msra.mxu0 0.0
        %3771 = vmatprep.subr.mxu0 0.0
        %3772 = vmatpush1.msra.mxu0 0.0
        %3773 = vmatprep.subr.mxu0 0.0
        %3774 = vmatpush1.msra.mxu0 0.0
        %3775 = vmatprep.subr.mxu0 0.0
        %3776 = vmatpush1.msra.mxu0 0.0
        %3777 = vmatprep.subr.mxu0 0.0
        %3778 = vmatpush1.msra.mxu0 0.0
        %3779 = vmatprep.subr.mxu0 0.0
        %3780 = vmatpush1.msra.mxu0 0.0
        %3781 = vmatprep.subr.mxu0 0.0
        %3782 = vmatpush1.msra.mxu0 0.0
        %3783 = vmatprep.subr.mxu0 0.0
        %3784 = vmatpush1.msra.mxu0 0.0
        %3785 = vmatprep.mubr.f32.mxu0 0.0
        %3786 = vmatmul.mubr.f32.gmra.mrb[0].mxu0 %v3716
        %v3787 = vpop.f32.mrb[0].mxu0
        %v3788 = vadd.f32 0.0, %v3787
        %v3789 = vpop.f32.mrb[0].mxu0
        %3790 = vmatprep.mubr.f32.mxu0 0.0
        %3791 = vmatmul.mubr.f32.gmra.mrb[0].mxu0 %v3719
        %v3792 = vpop.f32.mrb[0].mxu0
        %v3793 = vadd.f32 0.0, %v3792
        %v3794 = vpop.f32.mrb[0].mxu0
        %3795 = vdwg.mxu0
        %3796 = vrot.lane.b32.xlu0 %v3700, 122
        %v3797 = vpop.permute.xlu0 %3796
        %3798 = vrot.lane.b32.xlu0 %v3701, 122
        %v3799 = vpop.permute.xlu0 %3798
        %v3803 = vsel %vm1238, %v3702, 0
        %v3806 = vsel %vm1238, %v3703, 0
        %3808 = vmatprep.subr.mxu0 0.0
        %3809 = vmatpush1.msra.mxu0 %v3797
        %3810 = vmatprep.subr.mxu0 0.0
        %3811 = vmatpush1.msra.mxu0 %v3799
        %3812 = vmatprep.subr.mxu0 0.0
        %3813 = vmatpush1.msra.mxu0 0.0
        %3814 = vmatprep.subr.mxu0 0.0
        %3815 = vmatpush1.msra.mxu0 0.0
        %3816 = vmatprep.subr.mxu0 0.0
        %3817 = vmatpush1.msra.mxu0 0.0
        %3818 = vmatprep.subr.mxu0 0.0
        %3819 = vmatpush1.msra.mxu0 0.0
        %3820 = vmatprep.subr.mxu0 0.0
        %3821 = vmatpush1.msra.mxu0 0.0
        %3822 = vmatprep.subr.mxu0 0.0
        %3823 = vmatpush1.msra.mxu0 0.0
        %3824 = vmatprep.subr.mxu0 0.0
        %3825 = vmatpush1.msra.mxu0 0.0
        %3826 = vmatprep.subr.mxu0 0.0
        %3827 = vmatpush1.msra.mxu0 0.0
        %3828 = vmatprep.subr.mxu0 0.0
        %3829 = vmatpush1.msra.mxu0 0.0
        %3830 = vmatprep.subr.mxu0 0.0
        %3831 = vmatpush1.msra.mxu0 0.0
        %3832 = vmatprep.subr.mxu0 0.0
        %3833 = vmatpush1.msra.mxu0 0.0
        %3834 = vmatprep.subr.mxu0 0.0
        %3835 = vmatpush1.msra.mxu0 0.0
        %3836 = vmatprep.subr.mxu0 0.0
        %3837 = vmatpush1.msra.mxu0 0.0
        %3838 = vmatprep.subr.mxu0 0.0
        %3839 = vmatpush1.msra.mxu0 0.0
        %3840 = vmatprep.subr.mxu0 0.0
        %3841 = vmatpush1.msra.mxu0 0.0
        %3842 = vmatprep.subr.mxu0 0.0
        %3843 = vmatpush1.msra.mxu0 0.0
        %3844 = vmatprep.subr.mxu0 0.0
        %3845 = vmatpush1.msra.mxu0 0.0
        %3846 = vmatprep.subr.mxu0 0.0
        %3847 = vmatpush1.msra.mxu0 0.0
        %3848 = vmatprep.subr.mxu0 0.0
        %3849 = vmatpush1.msra.mxu0 0.0
        %3850 = vmatprep.subr.mxu0 0.0
        %3851 = vmatpush1.msra.mxu0 0.0
        %3852 = vmatprep.subr.mxu0 0.0
        %3853 = vmatpush1.msra.mxu0 0.0
        %3854 = vmatprep.subr.mxu0 0.0
        %3855 = vmatpush1.msra.mxu0 0.0
        %3856 = vmatprep.subr.mxu0 0.0
        %3857 = vmatpush1.msra.mxu0 0.0
        %3858 = vmatprep.subr.mxu0 0.0
        %3859 = vmatpush1.msra.mxu0 0.0
        %3860 = vmatprep.subr.mxu0 0.0
        %3861 = vmatpush1.msra.mxu0 0.0
        %3862 = vmatprep.subr.mxu0 0.0
        %3863 = vmatpush1.msra.mxu0 0.0
        %3864 = vmatprep.subr.mxu0 0.0
        %3865 = vmatpush1.msra.mxu0 0.0
        %3866 = vmatprep.subr.mxu0 0.0
        %3867 = vmatpush1.msra.mxu0 0.0
        %3868 = vmatprep.subr.mxu0 0.0
        %3869 = vmatpush1.msra.mxu0 0.0
        %3870 = vmatprep.subr.mxu0 0.0
        %3871 = vmatpush1.msra.mxu0 0.0
        %3872 = vmatprep.mubr.f32.mxu0 0.0
        %3873 = vmatmul.mubr.f32.gmra.mrb[0].mxu0 %v3803
        %v3874 = vpop.f32.mrb[0].mxu0
        %v3875 = vadd.f32 %v3788, %v3874
        %v3876 = vpop.f32.mrb[0].mxu0
        %3877 = vmatprep.mubr.f32.mxu0 0.0
        %3878 = vmatmul.mubr.f32.gmra.mrb[0].mxu0 %v3806
        %v3879 = vpop.f32.mrb[0].mxu0
        %v3880 = vadd.f32 %v3793, %v3879
        %v3881 = vpop.f32.mrb[0].mxu0
        %3882 = vdwg.mxu0
        %s3883 = scalar_lea.vmem %s41, 32
        %v3884 = vld [vmem:[%s3883] sm:$0xff]
        %v3885 = vld [vmem:[%s3883 + $0x8] sm:$0xff]
        %3886 = vrot.lane.b32.xlu0 %v3700, 120
        %v3887 = vpop.permute.xlu0 %3886
        %3888 = vrot.lane.b32.xlu0 %v3701, 120
        %v3889 = vpop.permute.xlu0 %3888
        %v3893 = vsel %vm1238, %v3884, 0
        %v3896 = vsel %vm1238, %v3885, 0
        %3898 = vmatprep.subr.mxu0 0.0
        %3899 = vmatpush1.msra.mxu0 %v3887
        %3900 = vmatprep.subr.mxu0 0.0
        %3901 = vmatpush1.msra.mxu0 %v3889
        %3902 = vmatprep.subr.mxu0 0.0
        %3903 = vmatpush1.msra.mxu0 0.0
        %3904 = vmatprep.subr.mxu0 0.0
        %3905 = vmatpush1.msra.mxu0 0.0
        %3906 = vmatprep.subr.mxu0 0.0
        %3907 = vmatpush1.msra.mxu0 0.0
        %3908 = vmatprep.subr.mxu0 0.0
        %3909 = vmatpush1.msra.mxu0 0.0
        %3910 = vmatprep.subr.mxu0 0.0
        %3911 = vmatpush1.msra.mxu0 0.0
        %3912 = vmatprep.subr.mxu0 0.0
        %3913 = vmatpush1.msra.mxu0 0.0
        %3914 = vmatprep.subr.mxu0 0.0
        %3915 = vmatpush1.msra.mxu0 0.0
        %3916 = vmatprep.subr.mxu0 0.0
        %3917 = vmatpush1.msra.mxu0 0.0
        %3918 = vmatprep.subr.mxu0 0.0
        %3919 = vmatpush1.msra.mxu0 0.0
        %3920 = vmatprep.subr.mxu0 0.0
        %3921 = vmatpush1.msra.mxu0 0.0
        %3922 = vmatprep.subr.mxu0 0.0
        %3923 = vmatpush1.msra.mxu0 0.0
        %3924 = vmatprep.subr.mxu0 0.0
        %3925 = vmatpush1.msra.mxu0 0.0
        %3926 = vmatprep.subr.mxu0 0.0
        %3927 = vmatpush1.msra.mxu0 0.0
        %3928 = vmatprep.subr.mxu0 0.0
        %3929 = vmatpush1.msra.mxu0 0.0
        %3930 = vmatprep.subr.mxu0 0.0
        %3931 = vmatpush1.msra.mxu0 0.0
        %3932 = vmatprep.subr.mxu0 0.0
        %3933 = vmatpush1.msra.mxu0 0.0
        %3934 = vmatprep.subr.mxu0 0.0
        %3935 = vmatpush1.msra.mxu0 0.0
        %3936 = vmatprep.subr.mxu0 0.0
        %3937 = vmatpush1.msra.mxu0 0.0
        %3938 = vmatprep.subr.mxu0 0.0
        %3939 = vmatpush1.msra.mxu0 0.0
        %3940 = vmatprep.subr.mxu0 0.0
        %3941 = vmatpush1.msra.mxu0 0.0
        %3942 = vmatprep.subr.mxu0 0.0
        %3943 = vmatpush1.msra.mxu0 0.0
        %3944 = vmatprep.subr.mxu0 0.0
        %3945 = vmatpush1.msra.mxu0 0.0
        %3946 = vmatprep.subr.mxu0 0.0
        %3947 = vmatpush1.msra.mxu0 0.0
        %3948 = vmatprep.subr.mxu0 0.0
        %3949 = vmatpush1.msra.mxu0 0.0
        %3950 = vmatprep.subr.mxu0 0.0
        %3951 = vmatpush1.msra.mxu0 0.0
        %3952 = vmatprep.subr.mxu0 0.0
        %3953 = vmatpush1.msra.mxu0 0.0
        %3954 = vmatprep.subr.mxu0 0.0
        %3955 = vmatpush1.msra.mxu0 0.0
        %3956 = vmatprep.subr.mxu0 0.0
        %3957 = vmatpush1.msra.mxu0 0.0
        %3958 = vmatprep.subr.mxu0 0.0
        %3959 = vmatpush1.msra.mxu0 0.0
        %3960 = vmatprep.subr.mxu0 0.0
        %3961 = vmatpush1.msra.mxu0 0.0
        %3962 = vmatprep.mubr.f32.mxu0 0.0
        %3963 = vmatmul.mubr.f32.gmra.mrb[0].mxu0 %v3893
        %v3964 = vpop.f32.mrb[0].mxu0
        %v3965 = vadd.f32 0.0, %v3964
        %v3966 = vpop.f32.mrb[0].mxu0
        %3967 = vmatprep.mubr.f32.mxu0 0.0
        %3968 = vmatmul.mubr.f32.gmra.mrb[0].mxu0 %v3896
        %v3969 = vpop.f32.mrb[0].mxu0
        %v3970 = vadd.f32 0.0, %v3969
        %v3971 = vpop.f32.mrb[0].mxu0
        %3972 = vdwg.mxu0
        %v3973 = vadd.f32 %v3875, %v3965
        %v3974 = vadd.f32 %v3880, %v3970
        %v3975 = vld [vmem:[%s43] sm:$0xff]
        %v3976 = vld [vmem:[%s43 + $0x8] sm:$0xff]
        %3978 = vset.pattern.permute.xlu0 0
        %3979 = vperm.xlu0 %3978, %v3975
        %v3980 = vpop.permute.xlu0 %3979
        %3983 = vset.pattern.permute.xlu0 0
        %3984 = vperm.xlu0 %3983, %v3976
        %v3985 = vpop.permute.xlu0 %3984
        %v3987 = vadd.f32 %v3973, %v3980
        %v3988 = vadd.f32 %v3974, %v3985
        %v3989 = vmax.f32 %v3987, 0.0
        %v3990 = vmax.f32 %v3988, 0.0
        %v3991 = vld [vmem:[#allocation9] sm:$0xff]
        %v3992 = vld [vmem:[#allocation9 + $0x8] sm:$0xff]
        %v3993 = vld [vmem:[%s47] sm:$0xff]
        %v3994 = vld [vmem:[%s47 + $0x8] sm:$0xff]
        %3996 = vset.pattern.permute.xlu0 0
        %3997 = vperm.xlu0 %3996, %v3993
        %v3998 = vpop.permute.xlu0 %3997
        %4001 = vset.pattern.permute.xlu0 0
        %4002 = vperm.xlu0 %4001, %v3994
        %v4003 = vpop.permute.xlu0 %4002
        %v4006 = vsel %vm1238, %v3991, 0
        %v4009 = vsel %vm1238, %v3992, 0
        %4011 = vmatprep.subr.mxu0 0.0
        %4012 = vmatpush1.msra.mxu0 %v3989
        %4013 = vmatprep.subr.mxu0 0.0
        %4014 = vmatpush1.msra.mxu0 %v3990
        %4015 = vmatprep.subr.mxu0 0.0
        %4016 = vmatpush1.msra.mxu0 0.0
        %4017 = vmatprep.subr.mxu0 0.0
        %4018 = vmatpush1.msra.mxu0 0.0
        %4019 = vmatprep.subr.mxu0 0.0
        %4020 = vmatpush1.msra.mxu0 0.0
        %4021 = vmatprep.subr.mxu0 0.0
        %4022 = vmatpush1.msra.mxu0 0.0
        %4023 = vmatprep.subr.mxu0 0.0
        %4024 = vmatpush1.msra.mxu0 0.0
        %4025 = vmatprep.subr.mxu0 0.0
        %4026 = vmatpush1.msra.mxu0 0.0
        %4027 = vmatprep.subr.mxu0 0.0
        %4028 = vmatpush1.msra.mxu0 0.0
        %4029 = vmatprep.subr.mxu0 0.0
        %4030 = vmatpush1.msra.mxu0 0.0
        %4031 = vmatprep.subr.mxu0 0.0
        %4032 = vmatpush1.msra.mxu0 0.0
        %4033 = vmatprep.subr.mxu0 0.0
        %4034 = vmatpush1.msra.mxu0 0.0
        %4035 = vmatprep.subr.mxu0 0.0
        %4036 = vmatpush1.msra.mxu0 0.0
        %4037 = vmatprep.subr.mxu0 0.0
        %4038 = vmatpush1.msra.mxu0 0.0
        %4039 = vmatprep.subr.mxu0 0.0
        %4040 = vmatpush1.msra.mxu0 0.0
        %4041 = vmatprep.subr.mxu0 0.0
        %4042 = vmatpush1.msra.mxu0 0.0
        %4043 = vmatprep.subr.mxu0 0.0
        %4044 = vmatpush1.msra.mxu0 0.0
        %4045 = vmatprep.subr.mxu0 0.0
        %4046 = vmatpush1.msra.mxu0 0.0
        %4047 = vmatprep.subr.mxu0 0.0
        %4048 = vmatpush1.msra.mxu0 0.0
        %4049 = vmatprep.subr.mxu0 0.0
        %4050 = vmatpush1.msra.mxu0 0.0
        %4051 = vmatprep.subr.mxu0 0.0
        %4052 = vmatpush1.msra.mxu0 0.0
        %4053 = vmatprep.subr.mxu0 0.0
        %4054 = vmatpush1.msra.mxu0 0.0
        %4055 = vmatprep.subr.mxu0 0.0
        %4056 = vmatpush1.msra.mxu0 0.0
        %4057 = vmatprep.subr.mxu0 0.0
        %4058 = vmatpush1.msra.mxu0 0.0
        %4059 = vmatprep.subr.mxu0 0.0
        %4060 = vmatpush1.msra.mxu0 0.0
        %4061 = vmatprep.subr.mxu0 0.0
        %4062 = vmatpush1.msra.mxu0 0.0
        %4063 = vmatprep.subr.mxu0 0.0
        %4064 = vmatpush1.msra.mxu0 0.0
        %4065 = vmatprep.subr.mxu0 0.0
        %4066 = vmatpush1.msra.mxu0 0.0
        %4067 = vmatprep.subr.mxu0 0.0
        %4068 = vmatpush1.msra.mxu0 0.0
        %4069 = vmatprep.subr.mxu0 0.0
        %4070 = vmatpush1.msra.mxu0 0.0
        %4071 = vmatprep.subr.mxu0 0.0
        %4072 = vmatpush1.msra.mxu0 0.0
        %4073 = vmatprep.subr.mxu0 0.0
        %4074 = vmatpush1.msra.mxu0 0.0
        %4075 = vmatprep.mubr.f32.mxu0 0.0
        %4076 = vmatmul.mubr.f32.gmra.mrb[0].mxu0 %v4006
        %v4077 = vpop.f32.mrb[0].mxu0
        %v4078 = vadd.f32 %v3998, %v4077
        %v4079 = vpop.f32.mrb[0].mxu0
        %4080 = vmatprep.mubr.f32.mxu0 0.0
        %4081 = vmatmul.mubr.f32.gmra.mrb[0].mxu0 %v4009
        %v4082 = vpop.f32.mrb[0].mxu0
        %v4083 = vadd.f32 %v4003, %v4082
        %v4084 = vpop.f32.mrb[0].mxu0
        %4085 = vdwg.mxu0
        %4088 = vrot.lane.b32.xlu0 %v4078, 8
        %v4089 = vpop.permute.xlu0 %4088
        %4090 = vrot.lane.b32.xlu0 %v4083, 8
        %v4091 = vpop.permute.xlu0 %4090
        %v4094 = vadd.f32 %v3700, %v4089
        %v4095 = vadd.f32 %v3701, %v4091
        %4096 = vst.msk [vmem:[#allocation2] sm:$0xff] %vm3697, %v4094
        %4097 = vst.msk [vmem:[#allocation2 + $0x8] sm:$0xff] %vm3697, %v4095
        %v4098 = vld [vmem:[#allocation2] sm:$0xff]
        %v4099 = vld [vmem:[#allocation2 + $0x8] sm:$0xff]
        %s4100 = scalar_lea.vmem %s41, 48
        %v4101 = vld [vmem:[%s4100] sm:$0xff]
        %v4102 = vld [vmem:[%s4100 + $0x8] sm:$0xff]
        %s4103 = scalar_lea.vmem %s41, 64
        %v4104 = vld [vmem:[%s4103] sm:$0xff]
        %v4105 = vld [vmem:[%s4103 + $0x8] sm:$0xff]
        %4108 = vrot.lane.b32.xlu0 %v4098, 122
        %v4109 = vpop.permute.xlu0 %4108
        %4110 = vrot.lane.b32.xlu0 %v4099, 122
        %v4111 = vpop.permute.xlu0 %4110
        %v4115 = vsel %vm1238, %v4104, 0
        %v4118 = vsel %vm1238, %v4105, 0
        %4120 = vmatprep.subr.mxu0 0.0
        %4121 = vmatpush1.msra.mxu0 %v4109
        %4122 = vmatprep.subr.mxu0 0.0
        %4123 = vmatpush1.msra.mxu0 %v4111
        %4124 = vmatprep.subr.mxu0 0.0
        %4125 = vmatpush1.msra.mxu0 0.0
        %4126 = vmatprep.subr.mxu0 0.0
        %4127 = vmatpush1.msra.mxu0 0.0
        %4128 = vmatprep.subr.mxu0 0.0
        %4129 = vmatpush1.msra.mxu0 0.0
        %4130 = vmatprep.subr.mxu0 0.0
        %4131 = vmatpush1.msra.mxu0 0.0
        %4132 = vmatprep.subr.mxu0 0.0
        %4133 = vmatpush1.msra.mxu0 0.0
        %4134 = vmatprep.subr.mxu0 0.0
        %4135 = vmatpush1.msra.mxu0 0.0
        %4136 = vmatprep.subr.mxu0 0.0
        %4137 = vmatpush1.msra.mxu0 0.0
        %4138 = vmatprep.subr.mxu0 0.0
        %4139 = vmatpush1.msra.mxu0 0.0
        %4140 = vmatprep.subr.mxu0 0.0
        %4141 = vmatpush1.msra.mxu0 0.0
        %4142 = vmatprep.subr.mxu0 0.0
        %4143 = vmatpush1.msra.mxu0 0.0
        %4144 = vmatprep.subr.mxu0 0.0
        %4145 = vmatpush1.msra.mxu0 0.0
        %4146 = vmatprep.subr.mxu0 0.0
        %4147 = vmatpush1.msra.mxu0 0.0
        %4148 = vmatprep.subr.mxu0 0.0
        %4149 = vmatpush1.msra.mxu0 0.0
        %4150 = vmatprep.subr.mxu0 0.0
        %4151 = vmatpush1.msra.mxu0 0.0
        %4152 = vmatprep.subr.mxu0 0.0
        %4153 = vmatpush1.msra.mxu0 0.0
        %4154 = vmatprep.subr.mxu0 0.0
        %4155 = vmatpush1.msra.mxu0 0.0
        %4156 = vmatprep.subr.mxu0 0.0
        %4157 = vmatpush1.msra.mxu0 0.0
        %4158 = vmatprep.subr.mxu0 0.0
        %4159 = vmatpush1.msra.mxu0 0.0
        %4160 = vmatprep.subr.mxu0 0.0
        %4161 = vmatpush1.msra.mxu0 0.0
        %4162 = vmatprep.subr.mxu0 0.0
        %4163 = vmatpush1.msra.mxu0 0.0
        %4164 = vmatprep.subr.mxu0 0.0
        %4165 = vmatpush1.msra.mxu0 0.0
        %4166 = vmatprep.subr.mxu0 0.0
        %4167 = vmatpush1.msra.mxu0 0.0
        %4168 = vmatprep.subr.mxu0 0.0
        %4169 = vmatpush1.msra.mxu0 0.0
        %4170 = vmatprep.subr.mxu0 0.0
        %4171 = vmatpush1.msra.mxu0 0.0
        %4172 = vmatprep.subr.mxu0 0.0
        %4173 = vmatpush1.msra.mxu0 0.0
        %4174 = vmatprep.subr.mxu0 0.0
        %4175 = vmatpush1.msra.mxu0 0.0
        %4176 = vmatprep.subr.mxu0 0.0
        %4177 = vmatpush1.msra.mxu0 0.0
        %4178 = vmatprep.subr.mxu0 0.0
        %4179 = vmatpush1.msra.mxu0 0.0
        %4180 = vmatprep.subr.mxu0 0.0
        %4181 = vmatpush1.msra.mxu0 0.0
        %4182 = vmatprep.subr.mxu0 0.0
        %4183 = vmatpush1.msra.mxu0 0.0
        %4184 = vmatprep.mubr.f32.mxu0 0.0
        %4185 = vmatmul.mubr.f32.gmra.mrb[0].mxu0 %v4115
        %v4186 = vpop.f32.mrb[0].mxu0
        %v4187 = vadd.f32 0.0, %v4186
        %v4188 = vpop.f32.mrb[0].mxu0
        %4189 = vmatprep.mubr.f32.mxu0 0.0
        %4190 = vmatmul.mubr.f32.gmra.mrb[0].mxu0 %v4118
        %v4191 = vpop.f32.mrb[0].mxu0
        %v4192 = vadd.f32 0.0, %v4191
        %v4193 = vpop.f32.mrb[0].mxu0
        %4194 = vdwg.mxu0
        %4195 = vrot.lane.b32.xlu0 %v4098, 124
        %v4196 = vpop.permute.xlu0 %4195
        %4197 = vrot.lane.b32.xlu0 %v4099, 124
        %v4198 = vpop.permute.xlu0 %4197
        %v4202 = vsel %vm1238, %v4101, 0
        %v4205 = vsel %vm1238, %v4102, 0
        %4207 = vmatprep.subr.mxu0 0.0
        %4208 = vmatpush1.msra.mxu0 %v4196
        %4209 = vmatprep.subr.mxu0 0.0
        %4210 = vmatpush1.msra.mxu0 %v4198
        %4211 = vmatprep.subr.mxu0 0.0
        %4212 = vmatpush1.msra.mxu0 0.0
        %4213 = vmatprep.subr.mxu0 0.0
        %4214 = vmatpush1.msra.mxu0 0.0
        %4215 = vmatprep.subr.mxu0 0.0
        %4216 = vmatpush1.msra.mxu0 0.0
        %4217 = vmatprep.subr.mxu0 0.0
        %4218 = vmatpush1.msra.mxu0 0.0
        %4219 = vmatprep.subr.mxu0 0.0
        %4220 = vmatpush1.msra.mxu0 0.0
        %4221 = vmatprep.subr.mxu0 0.0
        %4222 = vmatpush1.msra.mxu0 0.0
        %4223 = vmatprep.subr.mxu0 0.0
        %4224 = vmatpush1.msra.mxu0 0.0
        %4225 = vmatprep.subr.mxu0 0.0
        %4226 = vmatpush1.msra.mxu0 0.0
        %4227 = vmatprep.subr.mxu0 0.0
        %4228 = vmatpush1.msra.mxu0 0.0
        %4229 = vmatprep.subr.mxu0 0.0
        %4230 = vmatpush1.msra.mxu0 0.0
        %4231 = vmatprep.subr.mxu0 0.0
        %4232 = vmatpush1.msra.mxu0 0.0
        %4233 = vmatprep.subr.mxu0 0.0
        %4234 = vmatpush1.msra.mxu0 0.0
        %4235 = vmatprep.subr.mxu0 0.0
        %4236 = vmatpush1.msra.mxu0 0.0
        %4237 = vmatprep.subr.mxu0 0.0
        %4238 = vmatpush1.msra.mxu0 0.0
        %4239 = vmatprep.subr.mxu0 0.0
        %4240 = vmatpush1.msra.mxu0 0.0
        %4241 = vmatprep.subr.mxu0 0.0
        %4242 = vmatpush1.msra.mxu0 0.0
        %4243 = vmatprep.subr.mxu0 0.0
        %4244 = vmatpush1.msra.mxu0 0.0
        %4245 = vmatprep.subr.mxu0 0.0
        %4246 = vmatpush1.msra.mxu0 0.0
        %4247 = vmatprep.subr.mxu0 0.0
        %4248 = vmatpush1.msra.mxu0 0.0
        %4249 = vmatprep.subr.mxu0 0.0
        %4250 = vmatpush1.msra.mxu0 0.0
        %4251 = vmatprep.subr.mxu0 0.0
        %4252 = vmatpush1.msra.mxu0 0.0
        %4253 = vmatprep.subr.mxu0 0.0
        %4254 = vmatpush1.msra.mxu0 0.0
        %4255 = vmatprep.subr.mxu0 0.0
        %4256 = vmatpush1.msra.mxu0 0.0
        %4257 = vmatprep.subr.mxu0 0.0
        %4258 = vmatpush1.msra.mxu0 0.0
        %4259 = vmatprep.subr.mxu0 0.0
        %4260 = vmatpush1.msra.mxu0 0.0
        %4261 = vmatprep.subr.mxu0 0.0
        %4262 = vmatpush1.msra.mxu0 0.0
        %4263 = vmatprep.subr.mxu0 0.0
        %4264 = vmatpush1.msra.mxu0 0.0
        %4265 = vmatprep.subr.mxu0 0.0
        %4266 = vmatpush1.msra.mxu0 0.0
        %4267 = vmatprep.subr.mxu0 0.0
        %4268 = vmatpush1.msra.mxu0 0.0
        %4269 = vmatprep.subr.mxu0 0.0
        %4270 = vmatpush1.msra.mxu0 0.0
        %4271 = vmatprep.mubr.f32.mxu0 0.0
        %4272 = vmatmul.mubr.f32.gmra.mrb[0].mxu0 %v4202
        %v4273 = vpop.f32.mrb[0].mxu0
        %v4274 = vadd.f32 %v4187, %v4273
        %v4275 = vpop.f32.mrb[0].mxu0
        %4276 = vmatprep.mubr.f32.mxu0 0.0
        %4277 = vmatmul.mubr.f32.gmra.mrb[0].mxu0 %v4205
        %v4278 = vpop.f32.mrb[0].mxu0
        %v4279 = vadd.f32 %v4192, %v4278
        %v4280 = vpop.f32.mrb[0].mxu0
        %4281 = vdwg.mxu0
        %s4282 = scalar_lea.vmem %s41, 80
        %v4283 = vld [vmem:[%s4282] sm:$0xff]
        %v4284 = vld [vmem:[%s4282 + $0x8] sm:$0xff]
        %4285 = vrot.lane.b32.xlu0 %v4098, 120
        %v4286 = vpop.permute.xlu0 %4285
        %4287 = vrot.lane.b32.xlu0 %v4099, 120
        %v4288 = vpop.permute.xlu0 %4287
        %v4292 = vsel %vm1238, %v4283, 0
        %v4295 = vsel %vm1238, %v4284, 0
        %4297 = vmatprep.subr.mxu0 0.0
        %4298 = vmatpush1.msra.mxu0 %v4286
        %4299 = vmatprep.subr.mxu0 0.0
        %4300 = vmatpush1.msra.mxu0 %v4288
        %4301 = vmatprep.subr.mxu0 0.0
        %4302 = vmatpush1.msra.mxu0 0.0
        %4303 = vmatprep.subr.mxu0 0.0
        %4304 = vmatpush1.msra.mxu0 0.0
        %4305 = vmatprep.subr.mxu0 0.0
        %4306 = vmatpush1.msra.mxu0 0.0
        %4307 = vmatprep.subr.mxu0 0.0
        %4308 = vmatpush1.msra.mxu0 0.0
        %4309 = vmatprep.subr.mxu0 0.0
        %4310 = vmatpush1.msra.mxu0 0.0
        %4311 = vmatprep.subr.mxu0 0.0
        %4312 = vmatpush1.msra.mxu0 0.0
        %4313 = vmatprep.subr.mxu0 0.0
        %4314 = vmatpush1.msra.mxu0 0.0
        %4315 = vmatprep.subr.mxu0 0.0
        %4316 = vmatpush1.msra.mxu0 0.0
        %4317 = vmatprep.subr.mxu0 0.0
        %4318 = vmatpush1.msra.mxu0 0.0
        %4319 = vmatprep.subr.mxu0 0.0
        %4320 = vmatpush1.msra.mxu0 0.0
        %4321 = vmatprep.subr.mxu0 0.0
        %4322 = vmatpush1.msra.mxu0 0.0
        %4323 = vmatprep.subr.mxu0 0.0
        %4324 = vmatpush1.msra.mxu0 0.0
        %4325 = vmatprep.subr.mxu0 0.0
        %4326 = vmatpush1.msra.mxu0 0.0
        %4327 = vmatprep.subr.mxu0 0.0
        %4328 = vmatpush1.msra.mxu0 0.0
        %4329 = vmatprep.subr.mxu0 0.0
        %4330 = vmatpush1.msra.mxu0 0.0
        %4331 = vmatprep.subr.mxu0 0.0
        %4332 = vmatpush1.msra.mxu0 0.0
        %4333 = vmatprep.subr.mxu0 0.0
        %4334 = vmatpush1.msra.mxu0 0.0
        %4335 = vmatprep.subr.mxu0 0.0
        %4336 = vmatpush1.msra.mxu0 0.0
        %4337 = vmatprep.subr.mxu0 0.0
        %4338 = vmatpush1.msra.mxu0 0.0
        %4339 = vmatprep.subr.mxu0 0.0
        %4340 = vmatpush1.msra.mxu0 0.0
        %4341 = vmatprep.subr.mxu0 0.0
        %4342 = vmatpush1.msra.mxu0 0.0
        %4343 = vmatprep.subr.mxu0 0.0
        %4344 = vmatpush1.msra.mxu0 0.0
        %4345 = vmatprep.subr.mxu0 0.0
        %4346 = vmatpush1.msra.mxu0 0.0
        %4347 = vmatprep.subr.mxu0 0.0
        %4348 = vmatpush1.msra.mxu0 0.0
        %4349 = vmatprep.subr.mxu0 0.0
        %4350 = vmatpush1.msra.mxu0 0.0
        %4351 = vmatprep.subr.mxu0 0.0
        %4352 = vmatpush1.msra.mxu0 0.0
        %4353 = vmatprep.subr.mxu0 0.0
        %4354 = vmatpush1.msra.mxu0 0.0
        %4355 = vmatprep.subr.mxu0 0.0
        %4356 = vmatpush1.msra.mxu0 0.0
        %4357 = vmatprep.subr.mxu0 0.0
        %4358 = vmatpush1.msra.mxu0 0.0
        %4359 = vmatprep.subr.mxu0 0.0
        %4360 = vmatpush1.msra.mxu0 0.0
        %4361 = vmatprep.mubr.f32.mxu0 0.0
        %4362 = vmatmul.mubr.f32.gmra.mrb[0].mxu0 %v4292
        %v4363 = vpop.f32.mrb[0].mxu0
        %v4364 = vadd.f32 0.0, %v4363
        %v4365 = vpop.f32.mrb[0].mxu0
        %4366 = vmatprep.mubr.f32.mxu0 0.0
        %4367 = vmatmul.mubr.f32.gmra.mrb[0].mxu0 %v4295
        %v4368 = vpop.f32.mrb[0].mxu0
        %v4369 = vadd.f32 0.0, %v4368
        %v4370 = vpop.f32.mrb[0].mxu0
        %4371 = vdwg.mxu0
        %v4372 = vadd.f32 %v4274, %v4364
        %v4373 = vadd.f32 %v4279, %v4369
        %s4374 = scalar_lea.vmem %s43, 16
        %v4375 = vld [vmem:[%s4374] sm:$0xff]
        %v4376 = vld [vmem:[%s4374 + $0x8] sm:$0xff]
        %4378 = vset.pattern.permute.xlu0 0
        %4379 = vperm.xlu0 %4378, %v4375
        %v4380 = vpop.permute.xlu0 %4379
        %4383 = vset.pattern.permute.xlu0 0
        %4384 = vperm.xlu0 %4383, %v4376
        %v4385 = vpop.permute.xlu0 %4384
        %v4387 = vadd.f32 %v4372, %v4380
        %v4388 = vadd.f32 %v4373, %v4385
        %v4389 = vmax.f32 %v4387, 0.0
        %v4390 = vmax.f32 %v4388, 0.0
        %s4391 = scalar_lea.vmem [#allocation9], 16
        %v4392 = vld [vmem:[%s4391] sm:$0xff]
        %v4393 = vld [vmem:[%s4391 + $0x8] sm:$0xff]
        %s4394 = scalar_lea.vmem %s47, 16
        %v4395 = vld [vmem:[%s4394] sm:$0xff]
        %v4396 = vld [vmem:[%s4394 + $0x8] sm:$0xff]
        %4398 = vset.pattern.permute.xlu0 0
        %4399 = vperm.xlu0 %4398, %v4395
        %v4400 = vpop.permute.xlu0 %4399
        %4403 = vset.pattern.permute.xlu0 0
        %4404 = vperm.xlu0 %4403, %v4396
        %v4405 = vpop.permute.xlu0 %4404
        %v4408 = vsel %vm1238, %v4392, 0
        %v4411 = vsel %vm1238, %v4393, 0
        %4413 = vmatprep.subr.mxu0 0.0
        %4414 = vmatpush1.msra.mxu0 %v4389
        %4415 = vmatprep.subr.mxu0 0.0
        %4416 = vmatpush1.msra.mxu0 %v4390
        %4417 = vmatprep.subr.mxu0 0.0
        %4418 = vmatpush1.msra.mxu0 0.0
        %4419 = vmatprep.subr.mxu0 0.0
        %4420 = vmatpush1.msra.mxu0 0.0
        %4421 = vmatprep.subr.mxu0 0.0
        %4422 = vmatpush1.msra.mxu0 0.0
        %4423 = vmatprep.subr.mxu0 0.0
        %4424 = vmatpush1.msra.mxu0 0.0
        %4425 = vmatprep.subr.mxu0 0.0
        %4426 = vmatpush1.msra.mxu0 0.0
        %4427 = vmatprep.subr.mxu0 0.0
        %4428 = vmatpush1.msra.mxu0 0.0
        %4429 = vmatprep.subr.mxu0 0.0
        %4430 = vmatpush1.msra.mxu0 0.0
        %4431 = vmatprep.subr.mxu0 0.0
        %4432 = vmatpush1.msra.mxu0 0.0
        %4433 = vmatprep.subr.mxu0 0.0
        %4434 = vmatpush1.msra.mxu0 0.0
        %4435 = vmatprep.subr.mxu0 0.0
        %4436 = vmatpush1.msra.mxu0 0.0
        %4437 = vmatprep.subr.mxu0 0.0
        %4438 = vmatpush1.msra.mxu0 0.0
        %4439 = vmatprep.subr.mxu0 0.0
        %4440 = vmatpush1.msra.mxu0 0.0
        %4441 = vmatprep.subr.mxu0 0.0
        %4442 = vmatpush1.msra.mxu0 0.0
        %4443 = vmatprep.subr.mxu0 0.0
        %4444 = vmatpush1.msra.mxu0 0.0
        %4445 = vmatprep.subr.mxu0 0.0
        %4446 = vmatpush1.msra.mxu0 0.0
        %4447 = vmatprep.subr.mxu0 0.0
        %4448 = vmatpush1.msra.mxu0 0.0
        %4449 = vmatprep.subr.mxu0 0.0
        %4450 = vmatpush1.msra.mxu0 0.0
        %4451 = vmatprep.subr.mxu0 0.0
        %4452 = vmatpush1.msra.mxu0 0.0
        %4453 = vmatprep.subr.mxu0 0.0
        %4454 = vmatpush1.msra.mxu0 0.0
        %4455 = vmatprep.subr.mxu0 0.0
        %4456 = vmatpush1.msra.mxu0 0.0
        %4457 = vmatprep.subr.mxu0 0.0
        %4458 = vmatpush1.msra.mxu0 0.0
        %4459 = vmatprep.subr.mxu0 0.0
        %4460 = vmatpush1.msra.mxu0 0.0
        %4461 = vmatprep.subr.mxu0 0.0
        %4462 = vmatpush1.msra.mxu0 0.0
        %4463 = vmatprep.subr.mxu0 0.0
        %4464 = vmatpush1.msra.mxu0 0.0
        %4465 = vmatprep.subr.mxu0 0.0
        %4466 = vmatpush1.msra.mxu0 0.0
        %4467 = vmatprep.subr.mxu0 0.0
        %4468 = vmatpush1.msra.mxu0 0.0
        %4469 = vmatprep.subr.mxu0 0.0
        %4470 = vmatpush1.msra.mxu0 0.0
        %4471 = vmatprep.subr.mxu0 0.0
        %4472 = vmatpush1.msra.mxu0 0.0
        %4473 = vmatprep.subr.mxu0 0.0
        %4474 = vmatpush1.msra.mxu0 0.0
        %4475 = vmatprep.subr.mxu0 0.0
        %4476 = vmatpush1.msra.mxu0 0.0
        %4477 = vmatprep.mubr.f32.mxu0 0.0
        %4478 = vmatmul.mubr.f32.gmra.mrb[0].mxu0 %v4408
        %v4479 = vpop.f32.mrb[0].mxu0
        %v4480 = vadd.f32 %v4400, %v4479
        %v4481 = vpop.f32.mrb[0].mxu0
        %4482 = vmatprep.mubr.f32.mxu0 0.0
        %4483 = vmatmul.mubr.f32.gmra.mrb[0].mxu0 %v4411
        %v4484 = vpop.f32.mrb[0].mxu0
        %v4485 = vadd.f32 %v4405, %v4484
        %v4486 = vpop.f32.mrb[0].mxu0
        %4487 = vdwg.mxu0
        %4490 = vrot.lane.b32.xlu0 %v4480, 8
        %v4491 = vpop.permute.xlu0 %4490
        %4492 = vrot.lane.b32.xlu0 %v4485, 8
        %v4493 = vpop.permute.xlu0 %4492
        %v4496 = vadd.f32 %v4098, %v4491
        %v4497 = vadd.f32 %v4099, %v4493
        %4498 = vst.msk [vmem:[#allocation2] sm:$0xff] %vm3697, %v4496
        %4499 = vst.msk [vmem:[#allocation2 + $0x8] sm:$0xff] %vm3697, %v4497
        %v4500 = vld [vmem:[#allocation2] sm:$0xff]
        %v4501 = vld [vmem:[#allocation2 + $0x8] sm:$0xff]
        %v4502 = vld [vmem:[%s53] sm:$0xff]
        %v4503 = vld [vmem:[%s53 + $0x8] sm:$0x1]
        %4506 = vrot.lane.b32.xlu0 %v4500, 120
        %v4507 = vpop.permute.xlu0 %4506
        %4508 = vrot.lane.b32.xlu0 %v4501, 120
        %v4509 = vpop.permute.xlu0 %4508
        %v4510 = vsel %vm3590, %v4507, 0
        %v4512 = vsel %vm3590, %v4509, 0
        %vm4514 = vcmask 1040384
        %v4516 = vsel %vm4514, %v4503, 0
        %4518 = vmatprep.subr.mxu0 0.0
        %4519 = vmatpush1.msra.mxu0 %v4502
        %4520 = vmatprep.subr.mxu0 0.0
        %4521 = vmatpush1.msra.mxu0 %v4516
        %4522 = vmatprep.subr.mxu0 0.0
        %4523 = vmatpush1.msra.mxu0 0.0
        %4524 = vmatprep.subr.mxu0 0.0
        %4525 = vmatpush1.msra.mxu0 0.0
        %4526 = vmatprep.subr.mxu0 0.0
        %4527 = vmatpush1.msra.mxu0 0.0
        %4528 = vmatprep.subr.mxu0 0.0
        %4529 = vmatpush1.msra.mxu0 0.0
        %4530 = vmatprep.subr.mxu0 0.0
        %4531 = vmatpush1.msra.mxu0 0.0
        %4532 = vmatprep.subr.mxu0 0.0
        %4533 = vmatpush1.msra.mxu0 0.0
        %4534 = vmatprep.subr.mxu0 0.0
        %4535 = vmatpush1.msra.mxu0 0.0
        %4536 = vmatprep.subr.mxu0 0.0
        %4537 = vmatpush1.msra.mxu0 0.0
        %4538 = vmatprep.subr.mxu0 0.0
        %4539 = vmatpush1.msra.mxu0 0.0
        %4540 = vmatprep.subr.mxu0 0.0
        %4541 = vmatpush1.msra.mxu0 0.0
        %4542 = vmatprep.subr.mxu0 0.0
        %4543 = vmatpush1.msra.mxu0 0.0
        %4544 = vmatprep.subr.mxu0 0.0
        %4545 = vmatpush1.msra.mxu0 0.0
        %4546 = vmatprep.subr.mxu0 0.0
        %4547 = vmatpush1.msra.mxu0 0.0
        %4548 = vmatprep.subr.mxu0 0.0
        %4549 = vmatpush1.msra.mxu0 0.0
        %4550 = vmatprep.subr.mxu0 0.0
        %4551 = vmatpush1.msra.mxu0 0.0
        %4552 = vmatprep.subr.mxu0 0.0
        %4553 = vmatpush1.msra.mxu0 0.0
        %4554 = vmatprep.subr.mxu0 0.0
        %4555 = vmatpush1.msra.mxu0 0.0
        %4556 = vmatprep.subr.mxu0 0.0
        %4557 = vmatpush1.msra.mxu0 0.0
        %4558 = vmatprep.subr.mxu0 0.0
        %4559 = vmatpush1.msra.mxu0 0.0
        %4560 = vmatprep.subr.mxu0 0.0
        %4561 = vmatpush1.msra.mxu0 0.0
        %4562 = vmatprep.subr.mxu0 0.0
        %4563 = vmatpush1.msra.mxu0 0.0
        %4564 = vmatprep.subr.mxu0 0.0
        %4565 = vmatpush1.msra.mxu0 0.0
        %4566 = vmatprep.subr.mxu0 0.0
        %4567 = vmatpush1.msra.mxu0 0.0
        %4568 = vmatprep.subr.mxu0 0.0
        %4569 = vmatpush1.msra.mxu0 0.0
        %4570 = vmatprep.subr.mxu0 0.0
        %4571 = vmatpush1.msra.mxu0 0.0
        %4572 = vmatprep.subr.mxu0 0.0
        %4573 = vmatpush1.msra.mxu0 0.0
        %4574 = vmatprep.subr.mxu0 0.0
        %4575 = vmatpush1.msra.mxu0 0.0
        %4576 = vmatprep.subr.mxu0 0.0
        %4577 = vmatpush1.msra.mxu0 0.0
        %4578 = vmatprep.subr.mxu0 0.0
        %4579 = vmatpush1.msra.mxu0 0.0
        %4580 = vmatprep.subr.mxu0 0.0
        %4581 = vmatpush1.msra.mxu0 0.0
        %4582 = vmatprep.mubr.f32.mxu0 0.0
        %4583 = vmatmul.mubr.f32.gmra.mrb[0].mxu0 %v4510
        %v4584 = vpop.f32.mrb[0].mxu0
        %v4585 = vadd.f32 0.0, %v4584
        %v4586 = vpop.f32.mrb[0].mxu0
        %4587 = vmatprep.mubr.f32.mxu0 0.0
        %4588 = vmatmul.mubr.f32.gmra.mrb[0].mxu0 %v4512
        %v4589 = vpop.f32.mrb[0].mxu0
        %v4590 = vadd.f32 0.0, %v4589
        %v4591 = vpop.f32.mrb[0].mxu0
        %4592 = vdwg.mxu0
        %v4593 = vld [vmem:[#allocation11] sm:$0xff]
        %v4594 = vld [vmem:[%s51] sm:$0xff]
        %v4596 = vsel %vm1238, %v4593, 0
        %4598 = vmatprep.subr.mxu0 0.0
        %4599 = vmatpush1.msra.mxu0 %v4585
        %4600 = vmatprep.subr.mxu0 0.0
        %4601 = vmatpush1.msra.mxu0 %v4590
        %4602 = vmatprep.subr.mxu0 0.0
        %4603 = vmatpush1.msra.mxu0 0.0
        %4604 = vmatprep.subr.mxu0 0.0
        %4605 = vmatpush1.msra.mxu0 0.0
        %4606 = vmatprep.subr.mxu0 0.0
        %4607 = vmatpush1.msra.mxu0 0.0
        %4608 = vmatprep.subr.mxu0 0.0
        %4609 = vmatpush1.msra.mxu0 0.0
        %4610 = vmatprep.subr.mxu0 0.0
        %4611 = vmatpush1.msra.mxu0 0.0
        %4612 = vmatprep.subr.mxu0 0.0
        %4613 = vmatpush1.msra.mxu0 0.0
        %4614 = vmatprep.subr.mxu0 0.0
        %4615 = vmatpush1.msra.mxu0 0.0
        %4616 = vmatprep.subr.mxu0 0.0
        %4617 = vmatpush1.msra.mxu0 0.0
        %4618 = vmatprep.subr.mxu0 0.0
        %4619 = vmatpush1.msra.mxu0 0.0
        %4620 = vmatprep.subr.mxu0 0.0
        %4621 = vmatpush1.msra.mxu0 0.0
        %4622 = vmatprep.subr.mxu0 0.0
        %4623 = vmatpush1.msra.mxu0 0.0
        %4624 = vmatprep.subr.mxu0 0.0
        %4625 = vmatpush1.msra.mxu0 0.0
        %4626 = vmatprep.subr.mxu0 0.0
        %4627 = vmatpush1.msra.mxu0 0.0
        %4628 = vmatprep.subr.mxu0 0.0
        %4629 = vmatpush1.msra.mxu0 0.0
        %4630 = vmatprep.subr.mxu0 0.0
        %4631 = vmatpush1.msra.mxu0 0.0
        %4632 = vmatprep.subr.mxu0 0.0
        %4633 = vmatpush1.msra.mxu0 0.0
        %4634 = vmatprep.subr.mxu0 0.0
        %4635 = vmatpush1.msra.mxu0 0.0
        %4636 = vmatprep.subr.mxu0 0.0
        %4637 = vmatpush1.msra.mxu0 0.0
        %4638 = vmatprep.subr.mxu0 0.0
        %4639 = vmatpush1.msra.mxu0 0.0
        %4640 = vmatprep.subr.mxu0 0.0
        %4641 = vmatpush1.msra.mxu0 0.0
        %4642 = vmatprep.subr.mxu0 0.0
        %4643 = vmatpush1.msra.mxu0 0.0
        %4644 = vmatprep.subr.mxu0 0.0
        %4645 = vmatpush1.msra.mxu0 0.0
        %4646 = vmatprep.subr.mxu0 0.0
        %4647 = vmatpush1.msra.mxu0 0.0
        %4648 = vmatprep.subr.mxu0 0.0
        %4649 = vmatpush1.msra.mxu0 0.0
        %4650 = vmatprep.subr.mxu0 0.0
        %4651 = vmatpush1.msra.mxu0 0.0
        %4652 = vmatprep.subr.mxu0 0.0
        %4653 = vmatpush1.msra.mxu0 0.0
        %4654 = vmatprep.subr.mxu0 0.0
        %4655 = vmatpush1.msra.mxu0 0.0
        %4656 = vmatprep.subr.mxu0 0.0
        %4657 = vmatpush1.msra.mxu0 0.0
        %4658 = vmatprep.subr.mxu0 0.0
        %4659 = vmatpush1.msra.mxu0 0.0
        %4660 = vmatprep.subr.mxu0 0.0
        %4661 = vmatpush1.msra.mxu0 0.0
        %4662 = vmatprep.mubr.f32.mxu0 0.0
        %4663 = vmatmul.mubr.f32.gmra.mrb[0].mxu0 %v4596
        %v4664 = vpop.f32.mrb[0].mxu0
        %v4665 = vadd.f32 %v4594, %v4664
        %v4666 = vpop.f32.mrb[0].mxu0
        %4667 = vdwg.mxu0
        %vm4668 = vcmask 7168
        %4669 = vst.msk [vmem:[%s1102] sm:$0xff] %vm4668, %v4585
        %4670 = vst.msk [vmem:[%s1102 + $0x8] sm:$0xff] %vm4668, %v4590
        %4671 = vst.msk [vmem:[%s1106] sm:$0xff] %vm4668, %v4665
        %s4672 = sand.u32 %s666, 1
        %s4673 = scalar_lea.sflag [#allocation5], %s4672
        %s4674 = sand.u32 %s666, 1
        %s4675 = smul.addr %s4674, 16
        %s4676 = scalar_lea.vmem [#allocation12], %s4675
        %s4677 = sand.u32 %s692, 1
        %s4678 = scalar_lea.sflag [#allocation14], %s4677
        %s4679 = sand.u32 %s692, 1
        %s4680 = smul.addr %s4679, 8
        %s4681 = scalar_lea.vmem [#allocation13], %s4680
        %p4682 = scmp.lt.s32.totalorder %s86, 1
        %s4683 = scalar_select %p4682, %s86, 1
        %s4684 = smul.addr %s4683, 2
        %s4685 = smul.addr %s4684, 8
        %s4686 = scalar_lea.vmem %s59, %s4685
        %p4687 = scmp.lt.s32.totalorder %s86, 1
        %s4688 = scalar_select %p4687, %s86, 1
        %s4689 = smul.addr %s4688, 8
        %s4690 = scalar_lea.vmem %s61, %s4689
        %p4691 = scmp.lt.s32.totalorder %s86, 1
        %s4692 = scalar_select %p4691, %s86, 1
        %s4693 = smul.addr %s4692, 2
        %s4694 = smul.addr %s4693, 8
        %s4695 = scalar_lea.vmem %s63, %s4694
        %p4696 = scmp.lt.s32.totalorder %s86, 1
        %s4697 = scalar_select %p4696, %s86, 1
        %s4698 = smul.addr %s4697, 8
        %s4699 = scalar_lea.vmem %s65, %s4698
        // Predicated region
        $region149: #{hierarch_tcn2_forward.1} parent=127 // pred_check
          %p4700 = pneg %p676
        $region150: #{hierarch_tcn2_forward.1} parent=127 // pred_check_branch
          %4702 = sbr.rel (%p4700) target = $region152
        $region151: #{hierarch_tcn2_forward.1} parent=127 // pred_region
          %s4704 = ssub.s32 256, 256
          %4705 = vsyncadd %s4673, %s4704
          %s4706 = smul.addr %s86, 2
          %s4707 = smul.addr %s4706, 128
          %s4708 = scalar_lea.hbm %s55, %s4707
          %s4709 = sshll.u32 %s4676, 4
          %s4710 = int_to_ptr.vmem [resolvable:$true] %s4709
          %4715 = dma.vmem_to_hbm [thread:$0]  %s4710, 256, %s4708, %s4673, 128, 128, 8
        $region152: #{hierarch_tcn2_forward.1} parent=127 // pred_fallthru
          _
        // Predicated region
        $region153: #{hierarch_tcn2_forward.1} parent=127 // pred_check
          %p4716 = pneg %p702
        $region154: #{hierarch_tcn2_forward.1} parent=127 // pred_check_branch
          %4718 = sbr.rel (%p4716) target = $region156
        $region155: #{hierarch_tcn2_forward.1} parent=127 // pred_region
          %s4720 = ssub.s32 128, 128
          %4721 = vsyncadd %s4678, %s4720
          %s4722 = smul.addr %s86, 128
          %s4723 = scalar_lea.hbm %s57, %s4722
          %s4725 = sshll.u32 %s4681, 4
          %s4726 = int_to_ptr.vmem [resolvable:$true] %s4725
          %4728 = dma.vmem_to_hbm [thread:$0]  %s4726, 128, %s4723, %s4678
        $region156: #{hierarch_tcn2_forward.1} parent=127 // pred_fallthru
          _
        // Predicated region
        $region157: #{hierarch_tcn2_forward.1} parent=127 // pred_check
          %p4729 = pneg %p728
        $region158: #{hierarch_tcn2_forward.1} parent=127 // pred_check_branch
          %4731 = sbr.rel (%p4729) target = $region160
        $region159: #{hierarch_tcn2_forward.1} parent=127 // pred_region
          _
        $region160: #{hierarch_tcn2_forward.1} parent=127 // pred_fallthru
          _
        // Predicated region
        $region161: #{hierarch_tcn2_forward.1} parent=127 // pred_check
          %p4732 = pneg %p754
        $region162: #{hierarch_tcn2_forward.1} parent=127 // pred_check_branch
          %4734 = sbr.rel (%p4732) target = $region164
        $region163: #{hierarch_tcn2_forward.1} parent=127 // pred_region
          _
        $region164: #{hierarch_tcn2_forward.1} parent=127 // pred_fallthru
          _
        // Predicated region
        $region165: #{hierarch_tcn2_forward.1} parent=127 // pred_check
          %p4735 = pneg %p780
        $region166: #{hierarch_tcn2_forward.1} parent=127 // pred_check_branch
          %4737 = sbr.rel (%p4735) target = $region168
        $region167: #{hierarch_tcn2_forward.1} parent=127 // pred_region
          _
        $region168: #{hierarch_tcn2_forward.1} parent=127 // pred_fallthru
          _
        // Predicated region
        $region169: #{hierarch_tcn2_forward.1} parent=127 // pred_check
          %p4738 = pneg %p806
        $region170: #{hierarch_tcn2_forward.1} parent=127 // pred_check_branch
          %4740 = sbr.rel (%p4738) target = $region172
        $region171: #{hierarch_tcn2_forward.1} parent=127 // pred_region
          _
        $region172: #{hierarch_tcn2_forward.1} parent=127 // pred_fallthru
          _
      $region128: #{hierarch_tcn2_forward.1} parent=5 // pred_fallthru
        _
      %p4741 = scmp.le.s32.totalorder 2, %s81
      // Predicated region
      $region173: #{hierarch_tcn2_forward.1} parent=5 // pred_check
        %p4742 = pneg %p4741
      $region174: #{hierarch_tcn2_forward.1} parent=5 // pred_check_branch
        %4744 = sbr.rel (%p4742) target = $region176
      $region175: #{hierarch_tcn2_forward.1} parent=5 // pred_region
        %s4745 = ssub.s32 %s81, 2
        // Predicated region
        $region177: #{hierarch_tcn2_forward.1} parent=175 // pred_check
          %p4746 = pneg %p682
        $region178: #{hierarch_tcn2_forward.1} parent=175 // pred_check_branch
          %4748 = sbr.rel (%p4746) target = $region180
        $region179: #{hierarch_tcn2_forward.1} parent=175 // pred_region
          %s4749 = sand.u32 %s667, 1
          %s4750 = scalar_lea.sflag [#allocation5], %s4749
          %s4751 = sand.u32 %s667, 1
          %s4752 = smul.addr %s4751, 16
          %s4753 = scalar_lea.vmem [#allocation12], %s4752
          %4754 = dma.done %s4750, 256
        $region180: #{hierarch_tcn2_forward.1} parent=175 // pred_fallthru
          _
        // Predicated region
        $region181: #{hierarch_tcn2_forward.1} parent=175 // pred_check
          %p4755 = pneg %p708
        $region182: #{hierarch_tcn2_forward.1} parent=175 // pred_check_branch
          %4757 = sbr.rel (%p4755) target = $region184
        $region183: #{hierarch_tcn2_forward.1} parent=175 // pred_region
          %s4758 = sand.u32 %s693, 1
          %s4759 = scalar_lea.sflag [#allocation14], %s4758
          %s4760 = sand.u32 %s693, 1
          %s4761 = smul.addr %s4760, 8
          %s4762 = scalar_lea.vmem [#allocation13], %s4761
          %4763 = dma.done %s4759, 128
        $region184: #{hierarch_tcn2_forward.1} parent=175 // pred_fallthru
          _
        // Predicated region
        $region185: #{hierarch_tcn2_forward.1} parent=175 // pred_check
          %p4764 = pneg %p734
        $region186: #{hierarch_tcn2_forward.1} parent=175 // pred_check_branch
          %4766 = sbr.rel (%p4764) target = $region188
        $region187: #{hierarch_tcn2_forward.1} parent=175 // pred_region
          %p4767 = scmp.lt.s32.totalorder %s87, 1
          %s4768 = scalar_select %p4767, %s87, 1
          %s4769 = smul.addr %s4768, 2
          %s4770 = smul.addr %s4769, 8
          %s4771 = scalar_lea.vmem %s59, %s4770
        $region188: #{hierarch_tcn2_forward.1} parent=175 // pred_fallthru
          _
        // Predicated region
        $region189: #{hierarch_tcn2_forward.1} parent=175 // pred_check
          %p4772 = pneg %p760
        $region190: #{hierarch_tcn2_forward.1} parent=175 // pred_check_branch
          %4774 = sbr.rel (%p4772) target = $region192
        $region191: #{hierarch_tcn2_forward.1} parent=175 // pred_region
          %p4775 = scmp.lt.s32.totalorder %s87, 1
          %s4776 = scalar_select %p4775, %s87, 1
          %s4777 = smul.addr %s4776, 8
          %s4778 = scalar_lea.vmem %s61, %s4777
        $region192: #{hierarch_tcn2_forward.1} parent=175 // pred_fallthru
          _
        // Predicated region
        $region193: #{hierarch_tcn2_forward.1} parent=175 // pred_check
          %p4779 = pneg %p786
        $region194: #{hierarch_tcn2_forward.1} parent=175 // pred_check_branch
          %4781 = sbr.rel (%p4779) target = $region196
        $region195: #{hierarch_tcn2_forward.1} parent=175 // pred_region
          %p4782 = scmp.lt.s32.totalorder %s87, 1
          %s4783 = scalar_select %p4782, %s87, 1
          %s4784 = smul.addr %s4783, 2
          %s4785 = smul.addr %s4784, 8
          %s4786 = scalar_lea.vmem %s63, %s4785
        $region196: #{hierarch_tcn2_forward.1} parent=175 // pred_fallthru
          _
        // Predicated region
        $region197: #{hierarch_tcn2_forward.1} parent=175 // pred_check
          %p4787 = pneg %p812
        $region198: #{hierarch_tcn2_forward.1} parent=175 // pred_check_branch
          %4789 = sbr.rel (%p4787) target = $region200
        $region199: #{hierarch_tcn2_forward.1} parent=175 // pred_region
          %p4790 = scmp.lt.s32.totalorder %s87, 1
          %s4791 = scalar_select %p4790, %s87, 1
          %s4792 = smul.addr %s4791, 8
          %s4793 = scalar_lea.vmem %s65, %s4792
        $region200: #{hierarch_tcn2_forward.1} parent=175 // pred_fallthru
          _
      $region176: #{hierarch_tcn2_forward.1} parent=5 // pred_fallthru
        _
    $region6: #{hierarch_tcn2_forward.1} parent=1 // loop_footer
      %s85 = sadd.s32 1, %s81
    $region7: #{hierarch_tcn2_forward.1} parent=1 // loop_footer_branch
      %80 = sbr.rel target = $region3
    $region8: #{hierarch_tcn2_forward.1} parent=1 // loop_exit
      _
    %4794 = vsyncpa [#allocation4], 1
    %s4795 = scalar_lea.sflag [#allocation4], 1
    %4796 = vsyncpa %s4795, 1
    %4797 = vsyncpa [#allocation7], 1
    %4798 = vsyncpa [#allocation10], 1
    %4799 = vsyncpa [#allocation5], 1
    %s4800 = scalar_lea.sflag [#allocation5], 1
    %4801 = vsyncpa %s4800, 1
    %4802 = vsyncpa [#allocation14], 1
    %s4803 = scalar_lea.sflag [#allocation14], 1
    %4804 = vsyncpa %s4803, 1

</llo_original>
